<compile_context>
chip_gen: v7x
topology: tpu7x:2x2x1
jax: 0.10.0
libtpu: 0.0.40
codegen_flags: <defaults>
</compile_context>

<pallas_src>
import functools
import math

import jax
import jax.numpy as jnp
from jax import lax
from jax.experimental import pallas as pl
from jax.experimental.pallas import tpu as pltpu

# ---------------- config (small, synthetic) ----------------
B = 2          # batch
S = 8          # sequence length
S_MEM = 8      # memory (cross-attention kv) length
VOCAB = 64
D = 64         # hidden size
H = 4          # attention heads
DH = D // H    # head dim (must be even for RoPE)
INTER = 128    # MLP intermediate size
N_LAYERS = 2
EPS = 1e-6
PARAM_DTYPE = jnp.bfloat16   # storage / MXU input dtype; compute is f32 in-kernel


# ---------------- fused attention block kernel ----------------
def _attn_block_kernel(x_ref, kv_ref, ln_ref, wqkv_ref, wo_ref,
                       cosq_ref, sinq_ref, cosk_ref, sink_ref, o_ref,
                       *, is_self, causal, eps, n_heads, head_dim):
    d_model = n_heads * head_dim

    # --- RMSNorm (f32 element-wise math; safe on v5e which lacks bf16 VPU) ---
    x = x_ref[0].astype(jnp.float32)                       # [Sq, D]
    w_ln = ln_ref[0].astype(jnp.float32)                   # [D]
    var = jnp.mean(x * x, axis=-1, keepdims=True)
    normed = x * lax.rsqrt(var + eps) * w_ln

    # --- fused QKV projection (bf16 MXU inputs, f32 accumulation) ---
    wqkv = wqkv_ref[...]                                   # [D, 3D]
    nb = normed.astype(wqkv.dtype)
    if is_self:
        qkv = jnp.dot(nb, wqkv, preferred_element_type=jnp.float32)   # [Sq, 3D]
        q_all = qkv[:, :d_model]
        k_all = qkv[:, d_model:2 * d_model]
        v_all = qkv[:, 2 * d_model:]
    else:
        q_all = jnp.dot(nb, wqkv[:, :d_model],
                        preferred_element_type=jnp.float32)           # [Sq, D]
        mem = kv_ref[0]                                    # [Sk, D] raw memory
        kv = jnp.dot(mem, wqkv[:, d_model:],
                     preferred_element_type=jnp.float32)              # [Sk, 2D]
        k_all = kv[:, :d_model]
        v_all = kv[:, d_model:]

    cos_q = cosq_ref[...].astype(jnp.float32)
    sin_q = sinq_ref[...].astype(jnp.float32)
    cos_k = cosk_ref[...].astype(jnp.float32)
    sin_k = sink_ref[...].astype(jnp.float32)

    def rope(xh, cos, sin):
        # rotate_half; concat kept (head dim 16 is sub-lane-width, robust lowering)
        half = xh.shape[-1] // 2
        x1 = xh[:, :half]
        x2 = xh[:, half:]
        rot = jnp.concatenate([-x2, x1], axis=-1)
        return xh * cos + rot * sin

    sq = q_all.shape[0]
    sk = k_all.shape[0]
    if causal:
        # hoisted: computed once, shared across all heads
        qi = lax.broadcasted_iota(jnp.int32, (sq, sk), 0)
        ki = lax.broadcasted_iota(jnp.int32, (sq, sk), 1)
        mask = ki <= qi

    wo = wo_ref[...]                                       # [D, D]
    scale = 1.0 / math.sqrt(head_dim)
    acc = x                                                # residual (f32)

    # Static unroll over heads (H=4); heads live in the lane dim as D-slices,
    # head-merge + o-projection are fused as per-head partial matmuls.
    for h in range(n_heads):
        lo = h * head_dim
        hi = lo + head_dim
        q_h = rope(q_all[:, lo:hi], cos_q, sin_q)          # [Sq, DH] f32
        k_h = rope(k_all[:, lo:hi], cos_k, sin_k)          # [Sk, DH] f32
        v_h = v_all[:, lo:hi]                              # [Sk, DH] f32
        s = jnp.dot(q_h, k_h.T, preferred_element_type=jnp.float32) * scale
        if causal:
            s = jnp.where(mask, s, -1e30)                  # f32 constant
        m = jnp.max(s, axis=-1, keepdims=True)
        p = jnp.exp(s - m)
        l = jnp.sum(p, axis=-1, keepdims=True)
        o_h = jnp.dot(p, v_h, preferred_element_type=jnp.float32)
        o_h = o_h * pl.reciprocal(l, approx=True)          # EUP, free slot
        acc = acc + jnp.dot(o_h.astype(wo.dtype), wo[lo:hi, :],
                            preferred_element_type=jnp.float32)

    o_ref[0] = acc.astype(o_ref.dtype)


def attn_block(x, kv, ln_w, wqkv, wo, cos_q, sin_q, cos_k, sin_k,
               *, is_self, causal):
    """x: [B,S,D], kv: [B,Skv,D] (memory for cross; ignored for self)."""
    b, s, d = x.shape
    skv = kv.shape[1]
    kernel = functools.partial(_attn_block_kernel, is_self=is_self,
                               causal=causal, eps=EPS,
                               n_heads=H, head_dim=DH)
    return pl.pallas_call(
        kernel,
        out_shape=jax.ShapeDtypeStruct((b, s, d), x.dtype),
        grid=(b,),
        in_specs=[
            pl.BlockSpec((1, s, d), lambda i: (i, 0, 0)),
            pl.BlockSpec((1, skv, d), lambda i: (i, 0, 0)),
            pl.BlockSpec((1, d), lambda i: (0, 0)),
            pl.BlockSpec((d, 3 * d), lambda i: (0, 0)),
            pl.BlockSpec((d, d), lambda i: (0, 0)),
            pl.BlockSpec((s, DH), lambda i: (0, 0)),
            pl.BlockSpec((s, DH), lambda i: (0, 0)),
            pl.BlockSpec((skv, DH), lambda i: (0, 0)),
            pl.BlockSpec((skv, DH), lambda i: (0, 0)),
        ],
        out_specs=pl.BlockSpec((1, s, d), lambda i: (i, 0, 0)),
        compiler_params=pltpu.CompilerParams(
            dimension_semantics=("parallel",)),
    )(x, kv, ln_w, wqkv, wo, cos_q, sin_q, cos_k, sin_k)


# ---------------- fused MLP block kernel ----------------
def _mlp_block_kernel(x_ref, ln_ref, wgu_ref, wdown_ref, o_ref, *, eps, inter):
    x = x_ref[0].astype(jnp.float32)                       # [S, D]
    w_ln = ln_ref[0].astype(jnp.float32)
    var = jnp.mean(x * x, axis=-1, keepdims=True)
    normed = x * lax.rsqrt(var + eps) * w_ln

    wgu = wgu_ref[...]                                     # [D, 2*INTER]
    gu = jnp.dot(normed.astype(wgu.dtype), wgu,
                 preferred_element_type=jnp.float32)       # [S, 2*INTER]
    g = gu[:, :inter]
    u = gu[:, inter:]
    act = g * jax.nn.sigmoid(g) * u                        # SwiGLU, f32

    wdown = wdown_ref[...]                                 # [INTER, D]
    y = x + jnp.dot(act.astype(wdown.dtype), wdown,
                    preferred_element_type=jnp.float32)    # fused residual
    o_ref[0] = y.astype(o_ref.dtype)


def mlp_block(x, ln_w, wgu, wdown):
    b, s, d = x.shape
    kernel = functools.partial(_mlp_block_kernel, eps=EPS, inter=INTER)
    return pl.pallas_call(
        kernel,
        out_shape=jax.ShapeDtypeStruct((b, s, d), x.dtype),
        grid=(b,),
        in_specs=[
            pl.BlockSpec((1, s, d), lambda i: (i, 0, 0)),
            pl.BlockSpec((1, d), lambda i: (0, 0)),
            pl.BlockSpec((d, 2 * INTER), lambda i: (0, 0)),
            pl.BlockSpec((INTER, d), lambda i: (0, 0)),
        ],
        out_specs=pl.BlockSpec((1, s, d), lambda i: (i, 0, 0)),
        compiler_params=pltpu.CompilerParams(
            dimension_semantics=("parallel",)),
    )(x, ln_w, wgu, wdown)


# ---------------- RoPE tables (setup glue) ----------------
def rope_tables(seq_len, dim, base=10000.0):
    inv_freq = 1.0 / (base ** (jnp.arange(0, dim, 2, dtype=jnp.float32) / dim))
    t = jnp.arange(seq_len, dtype=jnp.float32)
    freqs = jnp.outer(t, inv_freq)
    emb = jnp.concatenate([freqs, freqs], axis=-1)
    return jnp.cos(emb), jnp.sin(emb)                      # f32 tables


# ---------------- parameter init (deterministic, synthetic) ----------------
def init_params(key):
    def w(key, shape, scale=0.02):
        return (scale * jax.random.normal(key, shape, dtype=jnp.float32)
                ).astype(PARAM_DTYPE)

    keys = jax.random.split(key, 1 + N_LAYERS)
    embed = w(keys[0], (VOCAB, D))
    layers = []
    for li in range(N_LAYERS):
        ks = jax.random.split(keys[1 + li], 10)
        layers.append(dict(
            input_ln=jnp.ones((1, D), PARAM_DTYPE),
            post_ln=jnp.ones((1, D), PARAM_DTYPE),
            cros_ln=jnp.ones((1, D), PARAM_DTYPE),
            # fused QKV: [D, 3D]
            wqkv=jnp.concatenate([w(ks[0], (D, D)), w(ks[1], (D, D)),
                                  w(ks[2], (D, D))], axis=1),
            wo=w(ks[3], (D, D)),
            c_wqkv=jnp.concatenate([w(ks[4], (D, D)), w(ks[5], (D, D)),
                                    w(ks[6], (D, D))], axis=1),
            c_wo=jnp.zeros((D, D), PARAM_DTYPE),           # OProj(zero_init=True)
            # fused gate/up: [D, 2*INTER]
            wgu=jnp.concatenate([w(ks[7], (D, INTER)),
                                 w(ks[8], (D, INTER))], axis=1),
            wdown=w(ks[9], (INTER, D)),
        ))
    return dict(embed=embed, layers=layers)


# ---------------- model forward ----------------
def layer_forward(p, x, memory, cos, sin):
    s = x.shape[1]
    # x = x + SelfAttn(RMSNorm(x))   (causal, RoPE, residual fused in-kernel)
    x = attn_block(x, x, p["input_ln"], p["wqkv"], p["wo"],
                   cos[:s], sin[:s], cos[:s], sin[:s],
                   is_self=True, causal=True)
    # x = x + CrossAttn(RMSNorm(x), memory)   (full attn, RoPE, zero-init o-proj)
    if memory is not None:
        sm = memory.shape[1]
        x = attn_block(x, memory, p["cros_ln"], p["c_wqkv"], p["c_wo"],
                       cos[:s], sin[:s], cos[:sm], sin[:sm],
                       is_self=False, causal=False)
    # x = x + MLP(RMSNorm(x))   (SwiGLU, residual fused in-kernel)
    x = mlp_block(x, p["post_ln"], p["wgu"], p["wdown"])
    return x


def encoder_forward(params, input_ids, memory):
    # embed_tokens lookup is glue (plain JAX gather).
    x = jnp.take(params["embed"], input_ids, axis=0)       # [B, S, D]
    cos, sin = rope_tables(max(S, S_MEM), DH)
    for p in params["layers"]:
        x = layer_forward(p, x, memory, cos, sin)
    return x                                               # "memory" output


# ---------------- main ----------------
if __name__ == "__main__":
    key = jax.random.PRNGKey(0)
    k_param, k_ids, k_mem = jax.random.split(key, 3)

    params = init_params(k_param)
    input_ids = jax.random.randint(k_ids, (B, S), 0, VOCAB, dtype=jnp.int32)
    memory = jax.random.normal(k_mem, (B, S_MEM, D),
                               dtype=jnp.float32).astype(PARAM_DTYPE)

    out = jax.jit(encoder_forward)(params, input_ids, memory)
    jax.block_until_ready(out)
    assert out.shape == (B, S, D)
    print("KERNEL_OK")
</pallas_src>

<mosaic_0001>
module attributes {stable_mosaic.version = 11 : i64} {
  func.func @_attn_block_kernel(%arg0: i32, %arg1: memref<1x8x64xbf16, #tpu.memory_space<vmem>>, %arg2: memref<1x8x64xbf16, #tpu.memory_space<vmem>>, %arg3: memref<1x64xbf16, #tpu.memory_space<vmem>>, %arg4: memref<64x192xbf16, #tpu.memory_space<vmem>>, %arg5: memref<64x64xbf16, #tpu.memory_space<vmem>>, %arg6: memref<8x16xf32, #tpu.memory_space<vmem>>, %arg7: memref<8x16xf32, #tpu.memory_space<vmem>>, %arg8: memref<8x16xf32, #tpu.memory_space<vmem>>, %arg9: memref<8x16xf32, #tpu.memory_space<vmem>>, %arg10: memref<1x8x64xbf16, #tpu.memory_space<vmem>>) attributes {dimension_semantics = [#tpu.dimension_semantics<parallel>], iteration_bounds = array<i64: 2>, scalar_prefetch = 0 : i64, scratch_operands = 0 : i64, tpu.core_type = #tpu.core_type<tc>, window_params = [{transform_indices = @transform_0, window_bounds = array<i64: 1, 8, 64>}, {transform_indices = @transform_1, window_bounds = array<i64: 1, 8, 64>}, {pipeline_mode = #tpu.pipeline_mode<synchronous>, transform_indices = @transform_2, window_bounds = array<i64: 1, 64>}, {pipeline_mode = #tpu.pipeline_mode<synchronous>, transform_indices = @transform_3, window_bounds = array<i64: 64, 192>}, {pipeline_mode = #tpu.pipeline_mode<synchronous>, transform_indices = @transform_4, window_bounds = array<i64: 64, 64>}, {pipeline_mode = #tpu.pipeline_mode<synchronous>, transform_indices = @transform_5, window_bounds = array<i64: 8, 16>}, {pipeline_mode = #tpu.pipeline_mode<synchronous>, transform_indices = @transform_6, window_bounds = array<i64: 8, 16>}, {pipeline_mode = #tpu.pipeline_mode<synchronous>, transform_indices = @transform_7, window_bounds = array<i64: 8, 16>}, {pipeline_mode = #tpu.pipeline_mode<synchronous>, transform_indices = @transform_8, window_bounds = array<i64: 8, 16>}, {transform_indices = @transform_9, window_bounds = array<i64: 1, 8, 64>}]} {
    %c0 = arith.constant 0 : index
    %c0_0 = arith.constant 0 : index
    %c0_1 = arith.constant 0 : index
    %0 = vector.load %arg1[%c0, %c0_0, %c0_1] : memref<1x8x64xbf16, #tpu.memory_space<vmem>>, vector<1x8x64xbf16>
    %1 = vector.shape_cast %0 : vector<1x8x64xbf16> to vector<8x64xbf16>
    %2 = arith.extf %1 : vector<8x64xbf16> to vector<8x64xf32>
    %c0_2 = arith.constant 0 : index
    %c0_3 = arith.constant 0 : index
    %3 = vector.load %arg3[%c0_2, %c0_3] : memref<1x64xbf16, #tpu.memory_space<vmem>>, vector<1x64xbf16>
    %4 = vector.shape_cast %3 : vector<1x64xbf16> to vector<64xbf16>
    %5 = arith.extf %4 : vector<64xbf16> to vector<64xf32>
    %6 = arith.mulf %2, %2 : vector<8x64xf32>
    %cst = arith.constant dense<0.000000e+00> : vector<8xf32>
    %7 = vector.multi_reduction <add>, %6, %cst [1] : vector<8x64xf32> to vector<8xf32>
    %8 = vector.shape_cast %7 : vector<8xf32> to vector<8x1xf32>
    %cst_4 = arith.constant 6.400000e+01 : f32
    %9 = vector.broadcast %cst_4 : f32 to vector<8x1xf32>
    %10 = arith.divf %8, %9 : vector<8x1xf32>
    %cst_5 = arith.constant 9.99999997E-7 : f32
    %11 = vector.broadcast %cst_5 : f32 to vector<8x1xf32>
    %12 = arith.addf %10, %11 : vector<8x1xf32>
    %13 = math.rsqrt %12 : vector<8x1xf32>
    %14 = vector.broadcast %13 : vector<8x1xf32> to vector<8x64xf32>
    %15 = arith.mulf %2, %14 : vector<8x64xf32>
    %16 = vector.shape_cast %5 : vector<64xf32> to vector<1x64xf32>
    %17 = vector.broadcast %16 : vector<1x64xf32> to vector<8x64xf32>
    %18 = arith.mulf %15, %17 : vector<8x64xf32>
    %c0_6 = arith.constant 0 : index
    %c0_7 = arith.constant 0 : index
    %19 = vector.load %arg4[%c0_6, %c0_7] : memref<64x192xbf16, #tpu.memory_space<vmem>>, vector<64x192xbf16>
    %20 = arith.truncf %18 : vector<8x64xf32> to vector<8x64xbf16>
    %cst_8 = arith.constant dense<0.000000e+00> : vector<8x192xf32>
    %21 = tpu.matmul %20, %19, %cst_8 {dimension_numbers = #tpu.dot_dimension_numbers<[1], [0], [0], [1], [0, 0, 1, 1], [], []>} : vector<8x64xbf16>, vector<64x192xbf16>, vector<8x192xf32> -> vector<8x192xf32>
    %22 = vector.extract_strided_slice %21 {offsets = [0, 0], sizes = [8, 64], strides = [1, 1]} : vector<8x192xf32> to vector<8x64xf32>
    %23 = vector.extract_strided_slice %21 {offsets = [0, 64], sizes = [8, 64], strides = [1, 1]} : vector<8x192xf32> to vector<8x64xf32>
    %24 = vector.extract_strided_slice %21 {offsets = [0, 128], sizes = [8, 64], strides = [1, 1]} : vector<8x192xf32> to vector<8x64xf32>
    %c0_9 = arith.constant 0 : index
    %c0_10 = arith.constant 0 : index
    %25 = vector.load %arg6[%c0_9, %c0_10] : memref<8x16xf32, #tpu.memory_space<vmem>>, vector<8x16xf32>
    %c0_11 = arith.constant 0 : index
    %c0_12 = arith.constant 0 : index
    %26 = vector.load %arg7[%c0_11, %c0_12] : memref<8x16xf32, #tpu.memory_space<vmem>>, vector<8x16xf32>
    %c0_13 = arith.constant 0 : index
    %c0_14 = arith.constant 0 : index
    %27 = vector.load %arg8[%c0_13, %c0_14] : memref<8x16xf32, #tpu.memory_space<vmem>>, vector<8x16xf32>
    %c0_15 = arith.constant 0 : index
    %c0_16 = arith.constant 0 : index
    %28 = vector.load %arg9[%c0_15, %c0_16] : memref<8x16xf32, #tpu.memory_space<vmem>>, vector<8x16xf32>
    %29 = tpu.iota {dimensions = array<i32: 0>} : vector<8x8xi32>
    %30 = tpu.iota {dimensions = array<i32: 1>} : vector<8x8xi32>
    %31 = arith.cmpi sle, %30, %29 : vector<8x8xi32>
    %c0_17 = arith.constant 0 : index
    %c0_18 = arith.constant 0 : index
    %32 = vector.load %arg5[%c0_17, %c0_18] : memref<64x64xbf16, #tpu.memory_space<vmem>>, vector<64x64xbf16>
    %33 = vector.extract_strided_slice %22 {offsets = [0, 0], sizes = [8, 16], strides = [1, 1]} : vector<8x64xf32> to vector<8x16xf32>
    %34 = vector.extract_strided_slice %33 {offsets = [0, 0], sizes = [8, 8], strides = [1, 1]} : vector<8x16xf32> to vector<8x8xf32>
    %35 = vector.extract_strided_slice %33 {offsets = [0, 8], sizes = [8, 8], strides = [1, 1]} : vector<8x16xf32> to vector<8x8xf32>
    %cst_19 = arith.constant 0.000000e+00 : f32
    %36 = vector.broadcast %cst_19 : f32 to vector<8x8xf32>
    %37 = arith.subf %36, %35 : vector<8x8xf32>
    %38 = tpu.concatenate %37, %34 in 1 : vector<8x8xf32>, vector<8x8xf32> -> vector<8x16xf32>
    %39 = arith.mulf %33, %25 : vector<8x16xf32>
    %40 = arith.mulf %38, %26 : vector<8x16xf32>
    %41 = arith.addf %39, %40 : vector<8x16xf32>
    %42 = vector.extract_strided_slice %23 {offsets = [0, 0], sizes = [8, 16], strides = [1, 1]} : vector<8x64xf32> to vector<8x16xf32>
    %43 = vector.extract_strided_slice %42 {offsets = [0, 0], sizes = [8, 8], strides = [1, 1]} : vector<8x16xf32> to vector<8x8xf32>
    %44 = vector.extract_strided_slice %42 {offsets = [0, 8], sizes = [8, 8], strides = [1, 1]} : vector<8x16xf32> to vector<8x8xf32>
    %cst_20 = arith.constant 0.000000e+00 : f32
    %45 = vector.broadcast %cst_20 : f32 to vector<8x8xf32>
    %46 = arith.subf %45, %44 : vector<8x8xf32>
    %47 = tpu.concatenate %46, %43 in 1 : vector<8x8xf32>, vector<8x8xf32> -> vector<8x16xf32>
    %48 = arith.mulf %42, %27 : vector<8x16xf32>
    %49 = arith.mulf %47, %28 : vector<8x16xf32>
    %50 = arith.addf %48, %49 : vector<8x16xf32>
    %51 = vector.extract_strided_slice %24 {offsets = [0, 0], sizes = [8, 16], strides = [1, 1]} : vector<8x64xf32> to vector<8x16xf32>
    %52 = tpu.transpose %50, [1, 0] : vector<8x16xf32> -> vector<16x8xf32>
    %cst_21 = arith.constant dense<0.000000e+00> : vector<8x8xf32>
    %53 = tpu.matmul %41, %52, %cst_21 {dimension_numbers = #tpu.dot_dimension_numbers<[1], [0], [0], [1], [0, 0, 1, 1], [], []>} : vector<8x16xf32>, vector<16x8xf32>, vector<8x8xf32> -> vector<8x8xf32>
    %cst_22 = arith.constant 2.500000e-01 : f32
    %54 = vector.broadcast %cst_22 : f32 to vector<8x8xf32>
    %55 = arith.mulf %53, %54 : vector<8x8xf32>
    %cst_23 = arith.constant -1.000000e+30 : f32
    %56 = vector.broadcast %cst_23 : f32 to vector<8x8xf32>
    %57 = arith.select %31, %55, %56 : vector<8x8xi1>, vector<8x8xf32>
    %cst_24 = arith.constant dense<0xFF800000> : vector<8xf32>
    %58 = vector.multi_reduction <maximumf>, %57, %cst_24 [1] : vector<8x8xf32> to vector<8xf32>
    %59 = vector.shape_cast %58 : vector<8xf32> to vector<8x1xf32>
    %60 = vector.broadcast %59 : vector<8x1xf32> to vector<8x8xf32>
    %61 = arith.subf %57, %60 : vector<8x8xf32>
    %62 = math.exp %61 : vector<8x8xf32>
    %cst_25 = arith.constant dense<0.000000e+00> : vector<8xf32>
    %63 = vector.multi_reduction <add>, %62, %cst_25 [1] : vector<8x8xf32> to vector<8xf32>
    %64 = vector.shape_cast %63 : vector<8xf32> to vector<8x1xf32>
    %cst_26 = arith.constant dense<0.000000e+00> : vector<8x16xf32>
    %65 = tpu.matmul %62, %51, %cst_26 {dimension_numbers = #tpu.dot_dimension_numbers<[1], [0], [0], [1], [0, 0, 1, 1], [], []>} : vector<8x8xf32>, vector<8x16xf32>, vector<8x16xf32> -> vector<8x16xf32>
    %66 = tpu.reciprocal %64 {approx = true} : vector<8x1xf32> -> vector<8x1xf32>
    %67 = vector.broadcast %66 : vector<8x1xf32> to vector<8x16xf32>
    %68 = arith.mulf %65, %67 : vector<8x16xf32>
    %69 = arith.truncf %68 : vector<8x16xf32> to vector<8x16xbf16>
    %70 = vector.extract_strided_slice %32 {offsets = [0, 0], sizes = [16, 64], strides = [1, 1]} : vector<64x64xbf16> to vector<16x64xbf16>
    %cst_27 = arith.constant dense<0.000000e+00> : vector<8x64xf32>
    %71 = tpu.matmul %69, %70, %cst_27 {dimension_numbers = #tpu.dot_dimension_numbers<[1], [0], [0], [1], [0, 0, 1, 1], [], []>} : vector<8x16xbf16>, vector<16x64xbf16>, vector<8x64xf32> -> vector<8x64xf32>
    %72 = arith.addf %2, %71 : vector<8x64xf32>
    %73 = vector.extract_strided_slice %22 {offsets = [0, 16], sizes = [8, 16], strides = [1, 1]} : vector<8x64xf32> to vector<8x16xf32>
    %74 = vector.extract_strided_slice %73 {offsets = [0, 0], sizes = [8, 8], strides = [1, 1]} : vector<8x16xf32> to vector<8x8xf32>
    %75 = vector.extract_strided_slice %73 {offsets = [0, 8], sizes = [8, 8], strides = [1, 1]} : vector<8x16xf32> to vector<8x8xf32>
    %cst_28 = arith.constant 0.000000e+00 : f32
    %76 = vector.broadcast %cst_28 : f32 to vector<8x8xf32>
    %77 = arith.subf %76, %75 : vector<8x8xf32>
    %78 = tpu.concatenate %77, %74 in 1 : vector<8x8xf32>, vector<8x8xf32> -> vector<8x16xf32>
    %79 = arith.mulf %73, %25 : vector<8x16xf32>
    %80 = arith.mulf %78, %26 : vector<8x16xf32>
    %81 = arith.addf %79, %80 : vector<8x16xf32>
    %82 = vector.extract_strided_slice %23 {offsets = [0, 16], sizes = [8, 16], strides = [1, 1]} : vector<8x64xf32> to vector<8x16xf32>
    %83 = vector.extract_strided_slice %82 {offsets = [0, 0], sizes = [8, 8], strides = [1, 1]} : vector<8x16xf32> to vector<8x8xf32>
    %84 = vector.extract_strided_slice %82 {offsets = [0, 8], sizes = [8, 8], strides = [1, 1]} : vector<8x16xf32> to vector<8x8xf32>
    %cst_29 = arith.constant 0.000000e+00 : f32
    %85 = vector.broadcast %cst_29 : f32 to vector<8x8xf32>
    %86 = arith.subf %85, %84 : vector<8x8xf32>
    %87 = tpu.concatenate %86, %83 in 1 : vector<8x8xf32>, vector<8x8xf32> -> vector<8x16xf32>
    %88 = arith.mulf %82, %27 : vector<8x16xf32>
    %89 = arith.mulf %87, %28 : vector<8x16xf32>
    %90 = arith.addf %88, %89 : vector<8x16xf32>
    %91 = vector.extract_strided_slice %24 {offsets = [0, 16], sizes = [8, 16], strides = [1, 1]} : vector<8x64xf32> to vector<8x16xf32>
    %92 = tpu.transpose %90, [1, 0] : vector<8x16xf32> -> vector<16x8xf32>
    %cst_30 = arith.constant dense<0.000000e+00> : vector<8x8xf32>
    %93 = tpu.matmul %81, %92, %cst_30 {dimension_numbers = #tpu.dot_dimension_numbers<[1], [0], [0], [1], [0, 0, 1, 1], [], []>} : vector<8x16xf32>, vector<16x8xf32>, vector<8x8xf32> -> vector<8x8xf32>
    %cst_31 = arith.constant 2.500000e-01 : f32
    %94 = vector.broadcast %cst_31 : f32 to vector<8x8xf32>
    %95 = arith.mulf %93, %94 : vector<8x8xf32>
    %cst_32 = arith.constant -1.000000e+30 : f32
    %96 = vector.broadcast %cst_32 : f32 to vector<8x8xf32>
    %97 = arith.select %31, %95, %96 : vector<8x8xi1>, vector<8x8xf32>
    %cst_33 = arith.constant dense<0xFF800000> : vector<8xf32>
    %98 = vector.multi_reduction <maximumf>, %97, %cst_33 [1] : vector<8x8xf32> to vector<8xf32>
    %99 = vector.shape_cast %98 : vector<8xf32> to vector<8x1xf32>
    %100 = vector.broadcast %99 : vector<8x1xf32> to vector<8x8xf32>
    %101 = arith.subf %97, %100 : vector<8x8xf32>
    %102 = math.exp %101 : vector<8x8xf32>
    %cst_34 = arith.constant dense<0.000000e+00> : vector<8xf32>
    %103 = vector.multi_reduction <add>, %102, %cst_34 [1] : vector<8x8xf32> to vector<8xf32>
    %104 = vector.shape_cast %103 : vector<8xf32> to vector<8x1xf32>
    %cst_35 = arith.constant dense<0.000000e+00> : vector<8x16xf32>
    %105 = tpu.matmul %102, %91, %cst_35 {dimension_numbers = #tpu.dot_dimension_numbers<[1], [0], [0], [1], [0, 0, 1, 1], [], []>} : vector<8x8xf32>, vector<8x16xf32>, vector<8x16xf32> -> vector<8x16xf32>
    %106 = tpu.reciprocal %104 {approx = true} : vector<8x1xf32> -> vector<8x1xf32>
    %107 = vector.broadcast %106 : vector<8x1xf32> to vector<8x16xf32>
    %108 = arith.mulf %105, %107 : vector<8x16xf32>
    %109 = arith.truncf %108 : vector<8x16xf32> to vector<8x16xbf16>
    %110 = vector.extract_strided_slice %32 {offsets = [16, 0], sizes = [16, 64], strides = [1, 1]} : vector<64x64xbf16> to vector<16x64xbf16>
    %cst_36 = arith.constant dense<0.000000e+00> : vector<8x64xf32>
    %111 = tpu.matmul %109, %110, %cst_36 {dimension_numbers = #tpu.dot_dimension_numbers<[1], [0], [0], [1], [0, 0, 1, 1], [], []>} : vector<8x16xbf16>, vector<16x64xbf16>, vector<8x64xf32> -> vector<8x64xf32>
    %112 = arith.addf %72, %111 : vector<8x64xf32>
    %113 = vector.extract_strided_slice %22 {offsets = [0, 32], sizes = [8, 16], strides = [1, 1]} : vector<8x64xf32> to vector<8x16xf32>
    %114 = vector.extract_strided_slice %113 {offsets = [0, 0], sizes = [8, 8], strides = [1, 1]} : vector<8x16xf32> to vector<8x8xf32>
    %115 = vector.extract_strided_slice %113 {offsets = [0, 8], sizes = [8, 8], strides = [1, 1]} : vector<8x16xf32> to vector<8x8xf32>
    %cst_37 = arith.constant 0.000000e+00 : f32
    %116 = vector.broadcast %cst_37 : f32 to vector<8x8xf32>
    %117 = arith.subf %116, %115 : vector<8x8xf32>
    %118 = tpu.concatenate %117, %114 in 1 : vector<8x8xf32>, vector<8x8xf32> -> vector<8x16xf32>
    %119 = arith.mulf %113, %25 : vector<8x16xf32>
    %120 = arith.mulf %118, %26 : vector<8x16xf32>
    %121 = arith.addf %119, %120 : vector<8x16xf32>
    %122 = vector.extract_strided_slice %23 {offsets = [0, 32], sizes = [8, 16], strides = [1, 1]} : vector<8x64xf32> to vector<8x16xf32>
    %123 = vector.extract_strided_slice %122 {offsets = [0, 0], sizes = [8, 8], strides = [1, 1]} : vector<8x16xf32> to vector<8x8xf32>
    %124 = vector.extract_strided_slice %122 {offsets = [0, 8], sizes = [8, 8], strides = [1, 1]} : vector<8x16xf32> to vector<8x8xf32>
    %cst_38 = arith.constant 0.000000e+00 : f32
    %125 = vector.broadcast %cst_38 : f32 to vector<8x8xf32>
    %126 = arith.subf %125, %124 : vector<8x8xf32>
    %127 = tpu.concatenate %126, %123 in 1 : vector<8x8xf32>, vector<8x8xf32> -> vector<8x16xf32>
    %128 = arith.mulf %122, %27 : vector<8x16xf32>
    %129 = arith.mulf %127, %28 : vector<8x16xf32>
    %130 = arith.addf %128, %129 : vector<8x16xf32>
    %131 = vector.extract_strided_slice %24 {offsets = [0, 32], sizes = [8, 16], strides = [1, 1]} : vector<8x64xf32> to vector<8x16xf32>
    %132 = tpu.transpose %130, [1, 0] : vector<8x16xf32> -> vector<16x8xf32>
    %cst_39 = arith.constant dense<0.000000e+00> : vector<8x8xf32>
    %133 = tpu.matmul %121, %132, %cst_39 {dimension_numbers = #tpu.dot_dimension_numbers<[1], [0], [0], [1], [0, 0, 1, 1], [], []>} : vector<8x16xf32>, vector<16x8xf32>, vector<8x8xf32> -> vector<8x8xf32>
    %cst_40 = arith.constant 2.500000e-01 : f32
    %134 = vector.broadcast %cst_40 : f32 to vector<8x8xf32>
    %135 = arith.mulf %133, %134 : vector<8x8xf32>
    %cst_41 = arith.constant -1.000000e+30 : f32
    %136 = vector.broadcast %cst_41 : f32 to vector<8x8xf32>
    %137 = arith.select %31, %135, %136 : vector<8x8xi1>, vector<8x8xf32>
    %cst_42 = arith.constant dense<0xFF800000> : vector<8xf32>
    %138 = vector.multi_reduction <maximumf>, %137, %cst_42 [1] : vector<8x8xf32> to vector<8xf32>
    %139 = vector.shape_cast %138 : vector<8xf32> to vector<8x1xf32>
    %140 = vector.broadcast %139 : vector<8x1xf32> to vector<8x8xf32>
    %141 = arith.subf %137, %140 : vector<8x8xf32>
    %142 = math.exp %141 : vector<8x8xf32>
    %cst_43 = arith.constant dense<0.000000e+00> : vector<8xf32>
    %143 = vector.multi_reduction <add>, %142, %cst_43 [1] : vector<8x8xf32> to vector<8xf32>
    %144 = vector.shape_cast %143 : vector<8xf32> to vector<8x1xf32>
    %cst_44 = arith.constant dense<0.000000e+00> : vector<8x16xf32>
    %145 = tpu.matmul %142, %131, %cst_44 {dimension_numbers = #tpu.dot_dimension_numbers<[1], [0], [0], [1], [0, 0, 1, 1], [], []>} : vector<8x8xf32>, vector<8x16xf32>, vector<8x16xf32> -> vector<8x16xf32>
    %146 = tpu.reciprocal %144 {approx = true} : vector<8x1xf32> -> vector<8x1xf32>
    %147 = vector.broadcast %146 : vector<8x1xf32> to vector<8x16xf32>
    %148 = arith.mulf %145, %147 : vector<8x16xf32>
    %149 = arith.truncf %148 : vector<8x16xf32> to vector<8x16xbf16>
    %150 = vector.extract_strided_slice %32 {offsets = [32, 0], sizes = [16, 64], strides = [1, 1]} : vector<64x64xbf16> to vector<16x64xbf16>
    %cst_45 = arith.constant dense<0.000000e+00> : vector<8x64xf32>
    %151 = tpu.matmul %149, %150, %cst_45 {dimension_numbers = #tpu.dot_dimension_numbers<[1], [0], [0], [1], [0, 0, 1, 1], [], []>} : vector<8x16xbf16>, vector<16x64xbf16>, vector<8x64xf32> -> vector<8x64xf32>
    %152 = arith.addf %112, %151 : vector<8x64xf32>
    %153 = vector.extract_strided_slice %22 {offsets = [0, 48], sizes = [8, 16], strides = [1, 1]} : vector<8x64xf32> to vector<8x16xf32>
    %154 = vector.extract_strided_slice %153 {offsets = [0, 0], sizes = [8, 8], strides = [1, 1]} : vector<8x16xf32> to vector<8x8xf32>
    %155 = vector.extract_strided_slice %153 {offsets = [0, 8], sizes = [8, 8], strides = [1, 1]} : vector<8x16xf32> to vector<8x8xf32>
    %cst_46 = arith.constant 0.000000e+00 : f32
    %156 = vector.broadcast %cst_46 : f32 to vector<8x8xf32>
    %157 = arith.subf %156, %155 : vector<8x8xf32>
    %158 = tpu.concatenate %157, %154 in 1 : vector<8x8xf32>, vector<8x8xf32> -> vector<8x16xf32>
    %159 = arith.mulf %153, %25 : vector<8x16xf32>
    %160 = arith.mulf %158, %26 : vector<8x16xf32>
    %161 = arith.addf %159, %160 : vector<8x16xf32>
    %162 = vector.extract_strided_slice %23 {offsets = [0, 48], sizes = [8, 16], strides = [1, 1]} : vector<8x64xf32> to vector<8x16xf32>
    %163 = vector.extract_strided_slice %162 {offsets = [0, 0], sizes = [8, 8], strides = [1, 1]} : vector<8x16xf32> to vector<8x8xf32>
    %164 = vector.extract_strided_slice %162 {offsets = [0, 8], sizes = [8, 8], strides = [1, 1]} : vector<8x16xf32> to vector<8x8xf32>
    %cst_47 = arith.constant 0.000000e+00 : f32
    %165 = vector.broadcast %cst_47 : f32 to vector<8x8xf32>
    %166 = arith.subf %165, %164 : vector<8x8xf32>
    %167 = tpu.concatenate %166, %163 in 1 : vector<8x8xf32>, vector<8x8xf32> -> vector<8x16xf32>
    %168 = arith.mulf %162, %27 : vector<8x16xf32>
    %169 = arith.mulf %167, %28 : vector<8x16xf32>
    %170 = arith.addf %168, %169 : vector<8x16xf32>
    %171 = vector.extract_strided_slice %24 {offsets = [0, 48], sizes = [8, 16], strides = [1, 1]} : vector<8x64xf32> to vector<8x16xf32>
    %172 = tpu.transpose %170, [1, 0] : vector<8x16xf32> -> vector<16x8xf32>
    %cst_48 = arith.constant dense<0.000000e+00> : vector<8x8xf32>
    %173 = tpu.matmul %161, %172, %cst_48 {dimension_numbers = #tpu.dot_dimension_numbers<[1], [0], [0], [1], [0, 0, 1, 1], [], []>} : vector<8x16xf32>, vector<16x8xf32>, vector<8x8xf32> -> vector<8x8xf32>
    %cst_49 = arith.constant 2.500000e-01 : f32
    %174 = vector.broadcast %cst_49 : f32 to vector<8x8xf32>
    %175 = arith.mulf %173, %174 : vector<8x8xf32>
    %cst_50 = arith.constant -1.000000e+30 : f32
    %176 = vector.broadcast %cst_50 : f32 to vector<8x8xf32>
    %177 = arith.select %31, %175, %176 : vector<8x8xi1>, vector<8x8xf32>
    %cst_51 = arith.constant dense<0xFF800000> : vector<8xf32>
    %178 = vector.multi_reduction <maximumf>, %177, %cst_51 [1] : vector<8x8xf32> to vector<8xf32>
    %179 = vector.shape_cast %178 : vector<8xf32> to vector<8x1xf32>
    %180 = vector.broadcast %179 : vector<8x1xf32> to vector<8x8xf32>
    %181 = arith.subf %177, %180 : vector<8x8xf32>
    %182 = math.exp %181 : vector<8x8xf32>
    %cst_52 = arith.constant dense<0.000000e+00> : vector<8xf32>
    %183 = vector.multi_reduction <add>, %182, %cst_52 [1] : vector<8x8xf32> to vector<8xf32>
    %184 = vector.shape_cast %183 : vector<8xf32> to vector<8x1xf32>
    %cst_53 = arith.constant dense<0.000000e+00> : vector<8x16xf32>
    %185 = tpu.matmul %182, %171, %cst_53 {dimension_numbers = #tpu.dot_dimension_numbers<[1], [0], [0], [1], [0, 0, 1, 1], [], []>} : vector<8x8xf32>, vector<8x16xf32>, vector<8x16xf32> -> vector<8x16xf32>
    %186 = tpu.reciprocal %184 {approx = true} : vector<8x1xf32> -> vector<8x1xf32>
    %187 = vector.broadcast %186 : vector<8x1xf32> to vector<8x16xf32>
    %188 = arith.mulf %185, %187 : vector<8x16xf32>
    %189 = arith.truncf %188 : vector<8x16xf32> to vector<8x16xbf16>
    %190 = vector.extract_strided_slice %32 {offsets = [48, 0], sizes = [16, 64], strides = [1, 1]} : vector<64x64xbf16> to vector<16x64xbf16>
    %cst_54 = arith.constant dense<0.000000e+00> : vector<8x64xf32>
    %191 = tpu.matmul %189, %190, %cst_54 {dimension_numbers = #tpu.dot_dimension_numbers<[1], [0], [0], [1], [0, 0, 1, 1], [], []>} : vector<8x16xbf16>, vector<16x64xbf16>, vector<8x64xf32> -> vector<8x64xf32>
    %192 = arith.addf %152, %191 : vector<8x64xf32>
    %193 = arith.truncf %192 : vector<8x64xf32> to vector<8x64xbf16>
    %c0_55 = arith.constant 0 : index
    %c0_56 = arith.constant 0 : index
    %c0_57 = arith.constant 0 : index
    %194 = vector.load %arg10[%c0_55, %c0_56, %c0_57] : memref<1x8x64xbf16, #tpu.memory_space<vmem>>, vector<1x8x64xbf16>
    %195 = vector.shape_cast %194 : vector<1x8x64xbf16> to vector<8x64xbf16>
    %196 = vector.shape_cast %193 : vector<8x64xbf16> to vector<1x8x64xbf16>
    tpu.vector_store %arg10[%c0_55, %c0_56, %c0_57], %196 {strides = array<i32>} : memref<1x8x64xbf16, #tpu.memory_space<vmem>>, vector<1x8x64xbf16>,
    return
  }
  func.func @transform_0(%arg0: i32) -> (i32, i32, i32) {
    %c0_i32 = arith.constant 0 : i32
    %c0_i32_0 = arith.constant 0 : i32
    %c0_i32_1 = arith.constant 0 : i32
    return %arg0, %c0_i32, %c0_i32_0 : i32, i32, i32
  }
  func.func @transform_1(%arg0: i32) -> (i32, i32, i32) {
    %c0_i32 = arith.constant 0 : i32
    %c0_i32_0 = arith.constant 0 : i32
    %c0_i32_1 = arith.constant 0 : i32
    return %arg0, %c0_i32, %c0_i32_0 : i32, i32, i32
  }
  func.func @transform_2(%arg0: i32) -> (i32, i32) {
    %c0_i32 = arith.constant 0 : i32
    %c0_i32_0 = arith.constant 0 : i32
    %c0_i32_1 = arith.constant 0 : i32
    return %c0_i32, %c0_i32_0 : i32, i32
  }
  func.func @transform_3(%arg0: i32) -> (i32, i32) {
    %c0_i32 = arith.constant 0 : i32
    %c0_i32_0 = arith.constant 0 : i32
    %c0_i32_1 = arith.constant 0 : i32
    return %c0_i32, %c0_i32_0 : i32, i32
  }
  func.func @transform_4(%arg0: i32) -> (i32, i32) {
    %c0_i32 = arith.constant 0 : i32
    %c0_i32_0 = arith.constant 0 : i32
    %c0_i32_1 = arith.constant 0 : i32
    return %c0_i32, %c0_i32_0 : i32, i32
  }
  func.func @transform_5(%arg0: i32) -> (i32, i32) {
    %c0_i32 = arith.constant 0 : i32
    %c0_i32_0 = arith.constant 0 : i32
    %c0_i32_1 = arith.constant 0 : i32
    return %c0_i32, %c0_i32_0 : i32, i32
  }
  func.func @transform_6(%arg0: i32) -> (i32, i32) {
    %c0_i32 = arith.constant 0 : i32
    %c0_i32_0 = arith.constant 0 : i32
    %c0_i32_1 = arith.constant 0 : i32
    return %c0_i32, %c0_i32_0 : i32, i32
  }
  func.func @transform_7(%arg0: i32) -> (i32, i32) {
    %c0_i32 = arith.constant 0 : i32
    %c0_i32_0 = arith.constant 0 : i32
    %c0_i32_1 = arith.constant 0 : i32
    return %c0_i32, %c0_i32_0 : i32, i32
  }
  func.func @transform_8(%arg0: i32) -> (i32, i32) {
    %c0_i32 = arith.constant 0 : i32
    %c0_i32_0 = arith.constant 0 : i32
    %c0_i32_1 = arith.constant 0 : i32
    return %c0_i32, %c0_i32_0 : i32, i32
  }
  func.func @transform_9(%arg0: i32) -> (i32, i32, i32) {
    %c0_i32 = arith.constant 0 : i32
    %c0_i32_0 = arith.constant 0 : i32
    %c0_i32_1 = arith.constant 0 : i32
    return %arg0, %c0_i32, %c0_i32_0 : i32, i32, i32
  }
}

module attributes {stable_mosaic.version = 11 : i64} {
  func.func @_attn_block_kernel(%arg0: i32, %arg1: memref<1x8x64xbf16, #tpu.memory_space<vmem>>, %arg2: memref<1x8x64xbf16, #tpu.memory_space<vmem>>, %arg3: memref<1x64xbf16, #tpu.memory_space<vmem>>, %arg4: memref<64x192xbf16, #tpu.memory_space<vmem>>, %arg5: memref<64x64xbf16, #tpu.memory_space<vmem>>, %arg6: memref<8x16xf32, #tpu.memory_space<vmem>>, %arg7: memref<8x16xf32, #tpu.memory_space<vmem>>, %arg8: memref<8x16xf32, #tpu.memory_space<vmem>>, %arg9: memref<8x16xf32, #tpu.memory_space<vmem>>, %arg10: memref<1x8x64xbf16, #tpu.memory_space<vmem>>) attributes {dimension_semantics = [#tpu.dimension_semantics<parallel>], iteration_bounds = array<i64: 2>, scalar_prefetch = 0 : i64, scratch_operands = 0 : i64, tpu.core_type = #tpu.core_type<tc>, window_params = [{transform_indices = @transform_0, window_bounds = array<i64: 1, 8, 64>}, {transform_indices = @transform_1, window_bounds = array<i64: 1, 8, 64>}, {pipeline_mode = #tpu.pipeline_mode<synchronous>, transform_indices = @transform_2, window_bounds = array<i64: 1, 64>}, {pipeline_mode = #tpu.pipeline_mode<synchronous>, transform_indices = @transform_3, window_bounds = array<i64: 64, 192>}, {pipeline_mode = #tpu.pipeline_mode<synchronous>, transform_indices = @transform_4, window_bounds = array<i64: 64, 64>}, {pipeline_mode = #tpu.pipeline_mode<synchronous>, transform_indices = @transform_5, window_bounds = array<i64: 8, 16>}, {pipeline_mode = #tpu.pipeline_mode<synchronous>, transform_indices = @transform_6, window_bounds = array<i64: 8, 16>}, {pipeline_mode = #tpu.pipeline_mode<synchronous>, transform_indices = @transform_7, window_bounds = array<i64: 8, 16>}, {pipeline_mode = #tpu.pipeline_mode<synchronous>, transform_indices = @transform_8, window_bounds = array<i64: 8, 16>}, {transform_indices = @transform_9, window_bounds = array<i64: 1, 8, 64>}]} {
    %c0 = arith.constant 0 : index
    %c0_0 = arith.constant 0 : index
    %c0_1 = arith.constant 0 : index
    %0 = vector.load %arg1[%c0, %c0_0, %c0_1] : memref<1x8x64xbf16, #tpu.memory_space<vmem>>, vector<1x8x64xbf16>
    %1 = vector.shape_cast %0 : vector<1x8x64xbf16> to vector<8x64xbf16>
    %2 = arith.extf %1 : vector<8x64xbf16> to vector<8x64xf32>
    %c0_2 = arith.constant 0 : index
    %c0_3 = arith.constant 0 : index
    %3 = vector.load %arg3[%c0_2, %c0_3] : memref<1x64xbf16, #tpu.memory_space<vmem>>, vector<1x64xbf16>
    %4 = vector.shape_cast %3 : vector<1x64xbf16> to vector<64xbf16>
    %5 = arith.extf %4 : vector<64xbf16> to vector<64xf32>
    %6 = arith.mulf %2, %2 : vector<8x64xf32>
    %cst = arith.constant dense<0.000000e+00> : vector<8xf32>
    %7 = vector.multi_reduction <add>, %6, %cst [1] : vector<8x64xf32> to vector<8xf32>
    %8 = vector.shape_cast %7 : vector<8xf32> to vector<8x1xf32>
    %cst_4 = arith.constant 6.400000e+01 : f32
    %9 = vector.broadcast %cst_4 : f32 to vector<8x1xf32>
    %10 = arith.divf %8, %9 : vector<8x1xf32>
    %cst_5 = arith.constant 9.99999997E-7 : f32
    %11 = vector.broadcast %cst_5 : f32 to vector<8x1xf32>
    %12 = arith.addf %10, %11 : vector<8x1xf32>
    %13 = math.rsqrt %12 : vector<8x1xf32>
    %14 = vector.broadcast %13 : vector<8x1xf32> to vector<8x64xf32>
    %15 = arith.mulf %2, %14 : vector<8x64xf32>
    %16 = vector.shape_cast %5 : vector<64xf32> to vector<1x64xf32>
    %17 = vector.broadcast %16 : vector<1x64xf32> to vector<8x64xf32>
    %18 = arith.mulf %15, %17 : vector<8x64xf32>
    %c0_6 = arith.constant 0 : index
    %c0_7 = arith.constant 0 : index
    %19 = vector.load %arg4[%c0_6, %c0_7] : memref<64x192xbf16, #tpu.memory_space<vmem>>, vector<64x192xbf16>
    %20 = arith.truncf %18 : vector<8x64xf32> to vector<8x64xbf16>
    %21 = vector.extract_strided_slice %19 {offsets = [0, 0], sizes = [64, 64], strides = [1, 1]} : vector<64x192xbf16> to vector<64x64xbf16>
    %cst_8 = arith.constant dense<0.000000e+00> : vector<8x64xf32>
    %22 = tpu.matmul %20, %21, %cst_8 {dimension_numbers = #tpu.dot_dimension_numbers<[1], [0], [0], [1], [0, 0, 1, 1], [], []>} : vector<8x64xbf16>, vector<64x64xbf16>, vector<8x64xf32> -> vector<8x64xf32>
    %c0_9 = arith.constant 0 : index
    %c0_10 = arith.constant 0 : index
    %c0_11 = arith.constant 0 : index
    %23 = vector.load %arg2[%c0_9, %c0_10, %c0_11] : memref<1x8x64xbf16, #tpu.memory_space<vmem>>, vector<1x8x64xbf16>
    %24 = vector.shape_cast %23 : vector<1x8x64xbf16> to vector<8x64xbf16>
    %25 = vector.extract_strided_slice %19 {offsets = [0, 64], sizes = [64, 128], strides = [1, 1]} : vector<64x192xbf16> to vector<64x128xbf16>
    %cst_12 = arith.constant dense<0.000000e+00> : vector<8x128xf32>
    %26 = tpu.matmul %24, %25, %cst_12 {dimension_numbers = #tpu.dot_dimension_numbers<[1], [0], [0], [1], [0, 0, 1, 1], [], []>} : vector<8x64xbf16>, vector<64x128xbf16>, vector<8x128xf32> -> vector<8x128xf32>
    %27 = vector.extract_strided_slice %26 {offsets = [0, 0], sizes = [8, 64], strides = [1, 1]} : vector<8x128xf32> to vector<8x64xf32>
    %28 = vector.extract_strided_slice %26 {offsets = [0, 64], sizes = [8, 64], strides = [1, 1]} : vector<8x128xf32> to vector<8x64xf32>
    %c0_13 = arith.constant 0 : index
    %c0_14 = arith.constant 0 : index
    %29 = vector.load %arg6[%c0_13, %c0_14] : memref<8x16xf32, #tpu.memory_space<vmem>>, vector<8x16xf32>
    %c0_15 = arith.constant 0 : index
    %c0_16 = arith.constant 0 : index
    %30 = vector.load %arg7[%c0_15, %c0_16] : memref<8x16xf32, #tpu.memory_space<vmem>>, vector<8x16xf32>
    %c0_17 = arith.constant 0 : index
    %c0_18 = arith.constant 0 : index
    %31 = vector.load %arg8[%c0_17, %c0_18] : memref<8x16xf32, #tpu.memory_space<vmem>>, vector<8x16xf32>
    %c0_19 = arith.constant 0 : index
    %c0_20 = arith.constant 0 : index
    %32 = vector.load %arg9[%c0_19, %c0_20] : memref<8x16xf32, #tpu.memory_space<vmem>>, vector<8x16xf32>
    %c0_21 = arith.constant 0 : index
    %c0_22 = arith.constant 0 : index
    %33 = vector.load %arg5[%c0_21, %c0_22] : memref<64x64xbf16, #tpu.memory_space<vmem>>, vector<64x64xbf16>
    %34 = vector.extract_strided_slice %22 {offsets = [0, 0], sizes = [8, 16], strides = [1, 1]} : vector<8x64xf32> to vector<8x16xf32>
    %35 = vector.extract_strided_slice %34 {offsets = [0, 0], sizes = [8, 8], strides = [1, 1]} : vector<8x16xf32> to vector<8x8xf32>
    %36 = vector.extract_strided_slice %34 {offsets = [0, 8], sizes = [8, 8], strides = [1, 1]} : vector<8x16xf32> to vector<8x8xf32>
    %cst_23 = arith.constant 0.000000e+00 : f32
    %37 = vector.broadcast %cst_23 : f32 to vector<8x8xf32>
    %38 = arith.subf %37, %36 : vector<8x8xf32>
    %39 = tpu.concatenate %38, %35 in 1 : vector<8x8xf32>, vector<8x8xf32> -> vector<8x16xf32>
    %40 = arith.mulf %34, %29 : vector<8x16xf32>
    %41 = arith.mulf %39, %30 : vector<8x16xf32>
    %42 = arith.addf %40, %41 : vector<8x16xf32>
    %43 = vector.extract_strided_slice %27 {offsets = [0, 0], sizes = [8, 16], strides = [1, 1]} : vector<8x64xf32> to vector<8x16xf32>
    %44 = vector.extract_strided_slice %43 {offsets = [0, 0], sizes = [8, 8], strides = [1, 1]} : vector<8x16xf32> to vector<8x8xf32>
    %45 = vector.extract_strided_slice %43 {offsets = [0, 8], sizes = [8, 8], strides = [1, 1]} : vector<8x16xf32> to vector<8x8xf32>
    %cst_24 = arith.constant 0.000000e+00 : f32
    %46 = vector.broadcast %cst_24 : f32 to vector<8x8xf32>
    %47 = arith.subf %46, %45 : vector<8x8xf32>
    %48 = tpu.concatenate %47, %44 in 1 : vector<8x8xf32>, vector<8x8xf32> -> vector<8x16xf32>
    %49 = arith.mulf %43, %31 : vector<8x16xf32>
    %50 = arith.mulf %48, %32 : vector<8x16xf32>
    %51 = arith.addf %49, %50 : vector<8x16xf32>
    %52 = vector.extract_strided_slice %28 {offsets = [0, 0], sizes = [8, 16], strides = [1, 1]} : vector<8x64xf32> to vector<8x16xf32>
    %53 = tpu.transpose %51, [1, 0] : vector<8x16xf32> -> vector<16x8xf32>
    %cst_25 = arith.constant dense<0.000000e+00> : vector<8x8xf32>
    %54 = tpu.matmul %42, %53, %cst_25 {dimension_numbers = #tpu.dot_dimension_numbers<[1], [0], [0], [1], [0, 0, 1, 1], [], []>} : vector<8x16xf32>, vector<16x8xf32>, vector<8x8xf32> -> vector<8x8xf32>
    %cst_26 = arith.constant 2.500000e-01 : f32
    %55 = vector.broadcast %cst_26 : f32 to vector<8x8xf32>
    %56 = arith.mulf %54, %55 : vector<8x8xf32>
    %cst_27 = arith.constant dense<0xFF800000> : vector<8xf32>
    %57 = vector.multi_reduction <maximumf>, %56, %cst_27 [1] : vector<8x8xf32> to vector<8xf32>
    %58 = vector.shape_cast %57 : vector<8xf32> to vector<8x1xf32>
    %59 = vector.broadcast %58 : vector<8x1xf32> to vector<8x8xf32>
    %60 = arith.subf %56, %59 : vector<8x8xf32>
    %61 = math.exp %60 : vector<8x8xf32>
    %cst_28 = arith.constant dense<0.000000e+00> : vector<8xf32>
    %62 = vector.multi_reduction <add>, %61, %cst_28 [1] : vector<8x8xf32> to vector<8xf32>
    %63 = vector.shape_cast %62 : vector<8xf32> to vector<8x1xf32>
    %cst_29 = arith.constant dense<0.000000e+00> : vector<8x16xf32>
    %64 = tpu.matmul %61, %52, %cst_29 {dimension_numbers = #tpu.dot_dimension_numbers<[1], [0], [0], [1], [0, 0, 1, 1], [], []>} : vector<8x8xf32>, vector<8x16xf32>, vector<8x16xf32> -> vector<8x16xf32>
    %65 = tpu.reciprocal %63 {approx = true} : vector<8x1xf32> -> vector<8x1xf32>
    %66 = vector.broadcast %65 : vector<8x1xf32> to vector<8x16xf32>
    %67 = arith.mulf %64, %66 : vector<8x16xf32>
    %68 = arith.truncf %67 : vector<8x16xf32> to vector<8x16xbf16>
    %69 = vector.extract_strided_slice %33 {offsets = [0, 0], sizes = [16, 64], strides = [1, 1]} : vector<64x64xbf16> to vector<16x64xbf16>
    %cst_30 = arith.constant dense<0.000000e+00> : vector<8x64xf32>
    %70 = tpu.matmul %68, %69, %cst_30 {dimension_numbers = #tpu.dot_dimension_numbers<[1], [0], [0], [1], [0, 0, 1, 1], [], []>} : vector<8x16xbf16>, vector<16x64xbf16>, vector<8x64xf32> -> vector<8x64xf32>
    %71 = arith.addf %2, %70 : vector<8x64xf32>
    %72 = vector.extract_strided_slice %22 {offsets = [0, 16], sizes = [8, 16], strides = [1, 1]} : vector<8x64xf32> to vector<8x16xf32>
    %73 = vector.extract_strided_slice %72 {offsets = [0, 0], sizes = [8, 8], strides = [1, 1]} : vector<8x16xf32> to vector<8x8xf32>
    %74 = vector.extract_strided_slice %72 {offsets = [0, 8], sizes = [8, 8], strides = [1, 1]} : vector<8x16xf32> to vector<8x8xf32>
    %cst_31 = arith.constant 0.000000e+00 : f32
    %75 = vector.broadcast %cst_31 : f32 to vector<8x8xf32>
    %76 = arith.subf %75, %74 : vector<8x8xf32>
    %77 = tpu.concatenate %76, %73 in 1 : vector<8x8xf32>, vector<8x8xf32> -> vector<8x16xf32>
    %78 = arith.mulf %72, %29 : vector<8x16xf32>
    %79 = arith.mulf %77, %30 : vector<8x16xf32>
    %80 = arith.addf %78, %79 : vector<8x16xf32>
    %81 = vector.extract_strided_slice %27 {offsets = [0, 16], sizes = [8, 16], strides = [1, 1]} : vector<8x64xf32> to vector<8x16xf32>
    %82 = vector.extract_strided_slice %81 {offsets = [0, 0], sizes = [8, 8], strides = [1, 1]} : vector<8x16xf32> to vector<8x8xf32>
    %83 = vector.extract_strided_slice %81 {offsets = [0, 8], sizes = [8, 8], strides = [1, 1]} : vector<8x16xf32> to vector<8x8xf32>
    %cst_32 = arith.constant 0.000000e+00 : f32
    %84 = vector.broadcast %cst_32 : f32 to vector<8x8xf32>
    %85 = arith.subf %84, %83 : vector<8x8xf32>
    %86 = tpu.concatenate %85, %82 in 1 : vector<8x8xf32>, vector<8x8xf32> -> vector<8x16xf32>
    %87 = arith.mulf %81, %31 : vector<8x16xf32>
    %88 = arith.mulf %86, %32 : vector<8x16xf32>
    %89 = arith.addf %87, %88 : vector<8x16xf32>
    %90 = vector.extract_strided_slice %28 {offsets = [0, 16], sizes = [8, 16], strides = [1, 1]} : vector<8x64xf32> to vector<8x16xf32>
    %91 = tpu.transpose %89, [1, 0] : vector<8x16xf32> -> vector<16x8xf32>
    %cst_33 = arith.constant dense<0.000000e+00> : vector<8x8xf32>
    %92 = tpu.matmul %80, %91, %cst_33 {dimension_numbers = #tpu.dot_dimension_numbers<[1], [0], [0], [1], [0, 0, 1, 1], [], []>} : vector<8x16xf32>, vector<16x8xf32>, vector<8x8xf32> -> vector<8x8xf32>
    %cst_34 = arith.constant 2.500000e-01 : f32
    %93 = vector.broadcast %cst_34 : f32 to vector<8x8xf32>
    %94 = arith.mulf %92, %93 : vector<8x8xf32>
    %cst_35 = arith.constant dense<0xFF800000> : vector<8xf32>
    %95 = vector.multi_reduction <maximumf>, %94, %cst_35 [1] : vector<8x8xf32> to vector<8xf32>
    %96 = vector.shape_cast %95 : vector<8xf32> to vector<8x1xf32>
    %97 = vector.broadcast %96 : vector<8x1xf32> to vector<8x8xf32>
    %98 = arith.subf %94, %97 : vector<8x8xf32>
    %99 = math.exp %98 : vector<8x8xf32>
    %cst_36 = arith.constant dense<0.000000e+00> : vector<8xf32>
    %100 = vector.multi_reduction <add>, %99, %cst_36 [1] : vector<8x8xf32> to vector<8xf32>
    %101 = vector.shape_cast %100 : vector<8xf32> to vector<8x1xf32>
    %cst_37 = arith.constant dense<0.000000e+00> : vector<8x16xf32>
    %102 = tpu.matmul %99, %90, %cst_37 {dimension_numbers = #tpu.dot_dimension_numbers<[1], [0], [0], [1], [0, 0, 1, 1], [], []>} : vector<8x8xf32>, vector<8x16xf32>, vector<8x16xf32> -> vector<8x16xf32>
    %103 = tpu.reciprocal %101 {approx = true} : vector<8x1xf32> -> vector<8x1xf32>
    %104 = vector.broadcast %103 : vector<8x1xf32> to vector<8x16xf32>
    %105 = arith.mulf %102, %104 : vector<8x16xf32>
    %106 = arith.truncf %105 : vector<8x16xf32> to vector<8x16xbf16>
    %107 = vector.extract_strided_slice %33 {offsets = [16, 0], sizes = [16, 64], strides = [1, 1]} : vector<64x64xbf16> to vector<16x64xbf16>
    %cst_38 = arith.constant dense<0.000000e+00> : vector<8x64xf32>
    %108 = tpu.matmul %106, %107, %cst_38 {dimension_numbers = #tpu.dot_dimension_numbers<[1], [0], [0], [1], [0, 0, 1, 1], [], []>} : vector<8x16xbf16>, vector<16x64xbf16>, vector<8x64xf32> -> vector<8x64xf32>
    %109 = arith.addf %71, %108 : vector<8x64xf32>
    %110 = vector.extract_strided_slice %22 {offsets = [0, 32], sizes = [8, 16], strides = [1, 1]} : vector<8x64xf32> to vector<8x16xf32>
    %111 = vector.extract_strided_slice %110 {offsets = [0, 0], sizes = [8, 8], strides = [1, 1]} : vector<8x16xf32> to vector<8x8xf32>
    %112 = vector.extract_strided_slice %110 {offsets = [0, 8], sizes = [8, 8], strides = [1, 1]} : vector<8x16xf32> to vector<8x8xf32>
    %cst_39 = arith.constant 0.000000e+00 : f32
    %113 = vector.broadcast %cst_39 : f32 to vector<8x8xf32>
    %114 = arith.subf %113, %112 : vector<8x8xf32>
    %115 = tpu.concatenate %114, %111 in 1 : vector<8x8xf32>, vector<8x8xf32> -> vector<8x16xf32>
    %116 = arith.mulf %110, %29 : vector<8x16xf32>
    %117 = arith.mulf %115, %30 : vector<8x16xf32>
    %118 = arith.addf %116, %117 : vector<8x16xf32>
    %119 = vector.extract_strided_slice %27 {offsets = [0, 32], sizes = [8, 16], strides = [1, 1]} : vector<8x64xf32> to vector<8x16xf32>
    %120 = vector.extract_strided_slice %119 {offsets = [0, 0], sizes = [8, 8], strides = [1, 1]} : vector<8x16xf32> to vector<8x8xf32>
    %121 = vector.extract_strided_slice %119 {offsets = [0, 8], sizes = [8, 8], strides = [1, 1]} : vector<8x16xf32> to vector<8x8xf32>
    %cst_40 = arith.constant 0.000000e+00 : f32
    %122 = vector.broadcast %cst_40 : f32 to vector<8x8xf32>
    %123 = arith.subf %122, %121 : vector<8x8xf32>
    %124 = tpu.concatenate %123, %120 in 1 : vector<8x8xf32>, vector<8x8xf32> -> vector<8x16xf32>
    %125 = arith.mulf %119, %31 : vector<8x16xf32>
    %126 = arith.mulf %124, %32 : vector<8x16xf32>
    %127 = arith.addf %125, %126 : vector<8x16xf32>
    %128 = vector.extract_strided_slice %28 {offsets = [0, 32], sizes = [8, 16], strides = [1, 1]} : vector<8x64xf32> to vector<8x16xf32>
    %129 = tpu.transpose %127, [1, 0] : vector<8x16xf32> -> vector<16x8xf32>
    %cst_41 = arith.constant dense<0.000000e+00> : vector<8x8xf32>
    %130 = tpu.matmul %118, %129, %cst_41 {dimension_numbers = #tpu.dot_dimension_numbers<[1], [0], [0], [1], [0, 0, 1, 1], [], []>} : vector<8x16xf32>, vector<16x8xf32>, vector<8x8xf32> -> vector<8x8xf32>
    %cst_42 = arith.constant 2.500000e-01 : f32
    %131 = vector.broadcast %cst_42 : f32 to vector<8x8xf32>
    %132 = arith.mulf %130, %131 : vector<8x8xf32>
    %cst_43 = arith.constant dense<0xFF800000> : vector<8xf32>
    %133 = vector.multi_reduction <maximumf>, %132, %cst_43 [1] : vector<8x8xf32> to vector<8xf32>
    %134 = vector.shape_cast %133 : vector<8xf32> to vector<8x1xf32>
    %135 = vector.broadcast %134 : vector<8x1xf32> to vector<8x8xf32>
    %136 = arith.subf %132, %135 : vector<8x8xf32>
    %137 = math.exp %136 : vector<8x8xf32>
    %cst_44 = arith.constant dense<0.000000e+00> : vector<8xf32>
    %138 = vector.multi_reduction <add>, %137, %cst_44 [1] : vector<8x8xf32> to vector<8xf32>
    %139 = vector.shape_cast %138 : vector<8xf32> to vector<8x1xf32>
    %cst_45 = arith.constant dense<0.000000e+00> : vector<8x16xf32>
    %140 = tpu.matmul %137, %128, %cst_45 {dimension_numbers = #tpu.dot_dimension_numbers<[1], [0], [0], [1], [0, 0, 1, 1], [], []>} : vector<8x8xf32>, vector<8x16xf32>, vector<8x16xf32> -> vector<8x16xf32>
    %141 = tpu.reciprocal %139 {approx = true} : vector<8x1xf32> -> vector<8x1xf32>
    %142 = vector.broadcast %141 : vector<8x1xf32> to vector<8x16xf32>
    %143 = arith.mulf %140, %142 : vector<8x16xf32>
    %144 = arith.truncf %143 : vector<8x16xf32> to vector<8x16xbf16>
    %145 = vector.extract_strided_slice %33 {offsets = [32, 0], sizes = [16, 64], strides = [1, 1]} : vector<64x64xbf16> to vector<16x64xbf16>
    %cst_46 = arith.constant dense<0.000000e+00> : vector<8x64xf32>
    %146 = tpu.matmul %144, %145, %cst_46 {dimension_numbers = #tpu.dot_dimension_numbers<[1], [0], [0], [1], [0, 0, 1, 1], [], []>} : vector<8x16xbf16>, vector<16x64xbf16>, vector<8x64xf32> -> vector<8x64xf32>
    %147 = arith.addf %109, %146 : vector<8x64xf32>
    %148 = vector.extract_strided_slice %22 {offsets = [0, 48], sizes = [8, 16], strides = [1, 1]} : vector<8x64xf32> to vector<8x16xf32>
    %149 = vector.extract_strided_slice %148 {offsets = [0, 0], sizes = [8, 8], strides = [1, 1]} : vector<8x16xf32> to vector<8x8xf32>
    %150 = vector.extract_strided_slice %148 {offsets = [0, 8], sizes = [8, 8], strides = [1, 1]} : vector<8x16xf32> to vector<8x8xf32>
    %cst_47 = arith.constant 0.000000e+00 : f32
    %151 = vector.broadcast %cst_47 : f32 to vector<8x8xf32>
    %152 = arith.subf %151, %150 : vector<8x8xf32>
    %153 = tpu.concatenate %152, %149 in 1 : vector<8x8xf32>, vector<8x8xf32> -> vector<8x16xf32>
    %154 = arith.mulf %148, %29 : vector<8x16xf32>
    %155 = arith.mulf %153, %30 : vector<8x16xf32>
    %156 = arith.addf %154, %155 : vector<8x16xf32>
    %157 = vector.extract_strided_slice %27 {offsets = [0, 48], sizes = [8, 16], strides = [1, 1]} : vector<8x64xf32> to vector<8x16xf32>
    %158 = vector.extract_strided_slice %157 {offsets = [0, 0], sizes = [8, 8], strides = [1, 1]} : vector<8x16xf32> to vector<8x8xf32>
    %159 = vector.extract_strided_slice %157 {offsets = [0, 8], sizes = [8, 8], strides = [1, 1]} : vector<8x16xf32> to vector<8x8xf32>
    %cst_48 = arith.constant 0.000000e+00 : f32
    %160 = vector.broadcast %cst_48 : f32 to vector<8x8xf32>
    %161 = arith.subf %160, %159 : vector<8x8xf32>
    %162 = tpu.concatenate %161, %158 in 1 : vector<8x8xf32>, vector<8x8xf32> -> vector<8x16xf32>
    %163 = arith.mulf %157, %31 : vector<8x16xf32>
    %164 = arith.mulf %162, %32 : vector<8x16xf32>
    %165 = arith.addf %163, %164 : vector<8x16xf32>
    %166 = vector.extract_strided_slice %28 {offsets = [0, 48], sizes = [8, 16], strides = [1, 1]} : vector<8x64xf32> to vector<8x16xf32>
    %167 = tpu.transpose %165, [1, 0] : vector<8x16xf32> -> vector<16x8xf32>
    %cst_49 = arith.constant dense<0.000000e+00> : vector<8x8xf32>
    %168 = tpu.matmul %156, %167, %cst_49 {dimension_numbers = #tpu.dot_dimension_numbers<[1], [0], [0], [1], [0, 0, 1, 1], [], []>} : vector<8x16xf32>, vector<16x8xf32>, vector<8x8xf32> -> vector<8x8xf32>
    %cst_50 = arith.constant 2.500000e-01 : f32
    %169 = vector.broadcast %cst_50 : f32 to vector<8x8xf32>
    %170 = arith.mulf %168, %169 : vector<8x8xf32>
    %cst_51 = arith.constant dense<0xFF800000> : vector<8xf32>
    %171 = vector.multi_reduction <maximumf>, %170, %cst_51 [1] : vector<8x8xf32> to vector<8xf32>
    %172 = vector.shape_cast %171 : vector<8xf32> to vector<8x1xf32>
    %173 = vector.broadcast %172 : vector<8x1xf32> to vector<8x8xf32>
    %174 = arith.subf %170, %173 : vector<8x8xf32>
    %175 = math.exp %174 : vector<8x8xf32>
    %cst_52 = arith.constant dense<0.000000e+00> : vector<8xf32>
    %176 = vector.multi_reduction <add>, %175, %cst_52 [1] : vector<8x8xf32> to vector<8xf32>
    %177 = vector.shape_cast %176 : vector<8xf32> to vector<8x1xf32>
    %cst_53 = arith.constant dense<0.000000e+00> : vector<8x16xf32>
    %178 = tpu.matmul %175, %166, %cst_53 {dimension_numbers = #tpu.dot_dimension_numbers<[1], [0], [0], [1], [0, 0, 1, 1], [], []>} : vector<8x8xf32>, vector<8x16xf32>, vector<8x16xf32> -> vector<8x16xf32>
    %179 = tpu.reciprocal %177 {approx = true} : vector<8x1xf32> -> vector<8x1xf32>
    %180 = vector.broadcast %179 : vector<8x1xf32> to vector<8x16xf32>
    %181 = arith.mulf %178, %180 : vector<8x16xf32>
    %182 = arith.truncf %181 : vector<8x16xf32> to vector<8x16xbf16>
    %183 = vector.extract_strided_slice %33 {offsets = [48, 0], sizes = [16, 64], strides = [1, 1]} : vector<64x64xbf16> to vector<16x64xbf16>
    %cst_54 = arith.constant dense<0.000000e+00> : vector<8x64xf32>
    %184 = tpu.matmul %182, %183, %cst_54 {dimension_numbers = #tpu.dot_dimension_numbers<[1], [0], [0], [1], [0, 0, 1, 1], [], []>} : vector<8x16xbf16>, vector<16x64xbf16>, vector<8x64xf32> -> vector<8x64xf32>
    %185 = arith.addf %147, %184 : vector<8x64xf32>
    %186 = arith.truncf %185 : vector<8x64xf32> to vector<8x64xbf16>
    %c0_55 = arith.constant 0 : index
    %c0_56 = arith.constant 0 : index
    %c0_57 = arith.constant 0 : index
    %187 = vector.load %arg10[%c0_55, %c0_56, %c0_57] : memref<1x8x64xbf16, #tpu.memory_space<vmem>>, vector<1x8x64xbf16>
    %188 = vector.shape_cast %187 : vector<1x8x64xbf16> to vector<8x64xbf16>
    %189 = vector.shape_cast %186 : vector<8x64xbf16> to vector<1x8x64xbf16>
    tpu.vector_store %arg10[%c0_55, %c0_56, %c0_57], %189 {strides = array<i32>} : memref<1x8x64xbf16, #tpu.memory_space<vmem>>, vector<1x8x64xbf16>,
    return
  }
  func.func @transform_0(%arg0: i32) -> (i32, i32, i32) {
    %c0_i32 = arith.constant 0 : i32
    %c0_i32_0 = arith.constant 0 : i32
    %c0_i32_1 = arith.constant 0 : i32
    return %arg0, %c0_i32, %c0_i32_0 : i32, i32, i32
  }
  func.func @transform_1(%arg0: i32) -> (i32, i32, i32) {
    %c0_i32 = arith.constant 0 : i32
    %c0_i32_0 = arith.constant 0 : i32
    %c0_i32_1 = arith.constant 0 : i32
    return %arg0, %c0_i32, %c0_i32_0 : i32, i32, i32
  }
  func.func @transform_2(%arg0: i32) -> (i32, i32) {
    %c0_i32 = arith.constant 0 : i32
    %c0_i32_0 = arith.constant 0 : i32
    %c0_i32_1 = arith.constant 0 : i32
    return %c0_i32, %c0_i32_0 : i32, i32
  }
  func.func @transform_3(%arg0: i32) -> (i32, i32) {
    %c0_i32 = arith.constant 0 : i32
    %c0_i32_0 = arith.constant 0 : i32
    %c0_i32_1 = arith.constant 0 : i32
    return %c0_i32, %c0_i32_0 : i32, i32
  }
  func.func @transform_4(%arg0: i32) -> (i32, i32) {
    %c0_i32 = arith.constant 0 : i32
    %c0_i32_0 = arith.constant 0 : i32
    %c0_i32_1 = arith.constant 0 : i32
    return %c0_i32, %c0_i32_0 : i32, i32
  }
  func.func @transform_5(%arg0: i32) -> (i32, i32) {
    %c0_i32 = arith.constant 0 : i32
    %c0_i32_0 = arith.constant 0 : i32
    %c0_i32_1 = arith.constant 0 : i32
    return %c0_i32, %c0_i32_0 : i32, i32
  }
  func.func @transform_6(%arg0: i32) -> (i32, i32) {
    %c0_i32 = arith.constant 0 : i32
    %c0_i32_0 = arith.constant 0 : i32
    %c0_i32_1 = arith.constant 0 : i32
    return %c0_i32, %c0_i32_0 : i32, i32
  }
  func.func @transform_7(%arg0: i32) -> (i32, i32) {
    %c0_i32 = arith.constant 0 : i32
    %c0_i32_0 = arith.constant 0 : i32
    %c0_i32_1 = arith.constant 0 : i32
    return %c0_i32, %c0_i32_0 : i32, i32
  }
  func.func @transform_8(%arg0: i32) -> (i32, i32) {
    %c0_i32 = arith.constant 0 : i32
    %c0_i32_0 = arith.constant 0 : i32
    %c0_i32_1 = arith.constant 0 : i32
    return %c0_i32, %c0_i32_0 : i32, i32
  }
  func.func @transform_9(%arg0: i32) -> (i32, i32, i32) {
    %c0_i32 = arith.constant 0 : i32
    %c0_i32_0 = arith.constant 0 : i32
    %c0_i32_1 = arith.constant 0 : i32
    return %arg0, %c0_i32, %c0_i32_0 : i32, i32, i32
  }
}

module attributes {stable_mosaic.version = 11 : i64} {
  func.func @_mlp_block_kernel(%arg0: i32, %arg1: memref<1x8x64xbf16, #tpu.memory_space<vmem>>, %arg2: memref<1x64xbf16, #tpu.memory_space<vmem>>, %arg3: memref<64x256xbf16, #tpu.memory_space<vmem>>, %arg4: memref<128x64xbf16, #tpu.memory_space<vmem>>, %arg5: memref<1x8x64xbf16, #tpu.memory_space<vmem>>) attributes {dimension_semantics = [#tpu.dimension_semantics<parallel>], iteration_bounds = array<i64: 2>, scalar_prefetch = 0 : i64, scratch_operands = 0 : i64, tpu.core_type = #tpu.core_type<tc>, window_params = [{transform_indices = @transform_0, window_bounds = array<i64: 1, 8, 64>}, {pipeline_mode = #tpu.pipeline_mode<synchronous>, transform_indices = @transform_1, window_bounds = array<i64: 1, 64>}, {pipeline_mode = #tpu.pipeline_mode<synchronous>, transform_indices = @transform_2, window_bounds = array<i64: 64, 256>}, {pipeline_mode = #tpu.pipeline_mode<synchronous>, transform_indices = @transform_3, window_bounds = array<i64: 128, 64>}, {transform_indices = @transform_4, window_bounds = array<i64: 1, 8, 64>}]} {
    %c0 = arith.constant 0 : index
    %c0_0 = arith.constant 0 : index
    %c0_1 = arith.constant 0 : index
    %0 = vector.load %arg1[%c0, %c0_0, %c0_1] : memref<1x8x64xbf16, #tpu.memory_space<vmem>>, vector<1x8x64xbf16>
    %1 = vector.shape_cast %0 : vector<1x8x64xbf16> to vector<8x64xbf16>
    %2 = arith.extf %1 : vector<8x64xbf16> to vector<8x64xf32>
    %c0_2 = arith.constant 0 : index
    %c0_3 = arith.constant 0 : index
    %3 = vector.load %arg2[%c0_2, %c0_3] : memref<1x64xbf16, #tpu.memory_space<vmem>>, vector<1x64xbf16>
    %4 = vector.shape_cast %3 : vector<1x64xbf16> to vector<64xbf16>
    %5 = arith.extf %4 : vector<64xbf16> to vector<64xf32>
    %6 = arith.mulf %2, %2 : vector<8x64xf32>
    %cst = arith.constant dense<0.000000e+00> : vector<8xf32>
    %7 = vector.multi_reduction <add>, %6, %cst [1] : vector<8x64xf32> to vector<8xf32>
    %8 = vector.shape_cast %7 : vector<8xf32> to vector<8x1xf32>
    %cst_4 = arith.constant 6.400000e+01 : f32
    %9 = vector.broadcast %cst_4 : f32 to vector<8x1xf32>
    %10 = arith.divf %8, %9 : vector<8x1xf32>
    %cst_5 = arith.constant 9.99999997E-7 : f32
    %11 = vector.broadcast %cst_5 : f32 to vector<8x1xf32>
    %12 = arith.addf %10, %11 : vector<8x1xf32>
    %13 = math.rsqrt %12 : vector<8x1xf32>
    %14 = vector.broadcast %13 : vector<8x1xf32> to vector<8x64xf32>
    %15 = arith.mulf %2, %14 : vector<8x64xf32>
    %16 = vector.shape_cast %5 : vector<64xf32> to vector<1x64xf32>
    %17 = vector.broadcast %16 : vector<1x64xf32> to vector<8x64xf32>
    %18 = arith.mulf %15, %17 : vector<8x64xf32>
    %c0_6 = arith.constant 0 : index
    %c0_7 = arith.constant 0 : index
    %19 = vector.load %arg3[%c0_6, %c0_7] : memref<64x256xbf16, #tpu.memory_space<vmem>>, vector<64x256xbf16>
    %20 = arith.truncf %18 : vector<8x64xf32> to vector<8x64xbf16>
    %cst_8 = arith.constant dense<0.000000e+00> : vector<8x256xf32>
    %21 = tpu.matmul %20, %19, %cst_8 {dimension_numbers = #tpu.dot_dimension_numbers<[1], [0], [0], [1], [0, 0, 1, 1], [], []>} : vector<8x64xbf16>, vector<64x256xbf16>, vector<8x256xf32> -> vector<8x256xf32>
    %22 = vector.extract_strided_slice %21 {offsets = [0, 0], sizes = [8, 128], strides = [1, 1]} : vector<8x256xf32> to vector<8x128xf32>
    %23 = vector.extract_strided_slice %21 {offsets = [0, 128], sizes = [8, 128], strides = [1, 1]} : vector<8x256xf32> to vector<8x128xf32>
    %24 = arith.negf %22 : vector<8x128xf32>
    %25 = math.exp %24 : vector<8x128xf32>
    %cst_9 = arith.constant 1.000000e+00 : f32
    %26 = vector.broadcast %cst_9 : f32 to vector<8x128xf32>
    %27 = arith.addf %26, %25 : vector<8x128xf32>
    %28 = arith.divf %26, %27 : vector<8x128xf32>
    %29 = arith.mulf %22, %28 : vector<8x128xf32>
    %30 = arith.mulf %29, %23 : vector<8x128xf32>
    %c0_10 = arith.constant 0 : index
    %c0_11 = arith.constant 0 : index
    %31 = vector.load %arg4[%c0_10, %c0_11] : memref<128x64xbf16, #tpu.memory_space<vmem>>, vector<128x64xbf16>
    %32 = arith.truncf %30 : vector<8x128xf32> to vector<8x128xbf16>
    %cst_12 = arith.constant dense<0.000000e+00> : vector<8x64xf32>
    %33 = tpu.matmul %32, %31, %cst_12 {dimension_numbers = #tpu.dot_dimension_numbers<[1], [0], [0], [1], [0, 0, 1, 1], [], []>} : vector<8x128xbf16>, vector<128x64xbf16>, vector<8x64xf32> -> vector<8x64xf32>
    %34 = arith.addf %2, %33 : vector<8x64xf32>
    %35 = arith.truncf %34 : vector<8x64xf32> to vector<8x64xbf16>
    %c0_13 = arith.constant 0 : index
    %c0_14 = arith.constant 0 : index
    %c0_15 = arith.constant 0 : index
    %36 = vector.load %arg5[%c0_13, %c0_14, %c0_15] : memref<1x8x64xbf16, #tpu.memory_space<vmem>>, vector<1x8x64xbf16>
    %37 = vector.shape_cast %36 : vector<1x8x64xbf16> to vector<8x64xbf16>
    %38 = vector.shape_cast %35 : vector<8x64xbf16> to vector<1x8x64xbf16>
    tpu.vector_store %arg5[%c0_13, %c0_14, %c0_15], %38 {strides = array<i32>} : memref<1x8x64xbf16, #tpu.memory_space<vmem>>, vector<1x8x64xbf16>,
    return
  }
  func.func @transform_0(%arg0: i32) -> (i32, i32, i32) {
    %c0_i32 = arith.constant 0 : i32
    %c0_i32_0 = arith.constant 0 : i32
    %c0_i32_1 = arith.constant 0 : i32
    return %arg0, %c0_i32, %c0_i32_0 : i32, i32, i32
  }
  func.func @transform_1(%arg0: i32) -> (i32, i32) {
    %c0_i32 = arith.constant 0 : i32
    %c0_i32_0 = arith.constant 0 : i32
    %c0_i32_1 = arith.constant 0 : i32
    return %c0_i32, %c0_i32_0 : i32, i32
  }
  func.func @transform_2(%arg0: i32) -> (i32, i32) {
    %c0_i32 = arith.constant 0 : i32
    %c0_i32_0 = arith.constant 0 : i32
    %c0_i32_1 = arith.constant 0 : i32
    return %c0_i32, %c0_i32_0 : i32, i32
  }
  func.func @transform_3(%arg0: i32) -> (i32, i32) {
    %c0_i32 = arith.constant 0 : i32
    %c0_i32_0 = arith.constant 0 : i32
    %c0_i32_1 = arith.constant 0 : i32
    return %c0_i32, %c0_i32_0 : i32, i32
  }
  func.func @transform_4(%arg0: i32) -> (i32, i32, i32) {
    %c0_i32 = arith.constant 0 : i32
    %c0_i32_0 = arith.constant 0 : i32
    %c0_i32_1 = arith.constant 0 : i32
    return %arg0, %c0_i32, %c0_i32_0 : i32, i32, i32
  }
}

module attributes {stable_mosaic.version = 11 : i64} {
  func.func @_mlp_block_kernel(%arg0: i32, %arg1: memref<1x8x64xbf16, #tpu.memory_space<vmem>>, %arg2: memref<1x64xbf16, #tpu.memory_space<vmem>>, %arg3: memref<64x256xbf16, #tpu.memory_space<vmem>>, %arg4: memref<128x64xbf16, #tpu.memory_space<vmem>>, %arg5: memref<1x8x64xbf16, #tpu.memory_space<vmem>>) attributes {dimension_semantics = [#tpu.dimension_semantics<parallel>], iteration_bounds = array<i64: 2>, scalar_prefetch = 0 : i64, scratch_operands = 0 : i64, tpu.core_type = #tpu.core_type<tc>, window_params = [{transform_indices = @transform_0, window_bounds = array<i64: 1, 8, 64>}, {pipeline_mode = #tpu.pipeline_mode<synchronous>, transform_indices = @transform_1, window_bounds = array<i64: 1, 64>}, {pipeline_mode = #tpu.pipeline_mode<synchronous>, transform_indices = @transform_2, window_bounds = array<i64: 64, 256>}, {pipeline_mode = #tpu.pipeline_mode<synchronous>, transform_indices = @transform_3, window_bounds = array<i64: 128, 64>}, {transform_indices = @transform_4, window_bounds = array<i64: 1, 8, 64>}]} {
    %c0 = arith.constant 0 : index
    %c0_0 = arith.constant 0 : index
    %c0_1 = arith.constant 0 : index
    %0 = vector.load %arg1[%c0, %c0_0, %c0_1] : memref<1x8x64xbf16, #tpu.memory_space<vmem>>, vector<1x8x64xbf16>
    %1 = vector.shape_cast %0 : vector<1x8x64xbf16> to vector<8x64xbf16>
    %2 = arith.extf %1 : vector<8x64xbf16> to vector<8x64xf32>
    %c0_2 = arith.constant 0 : index
    %c0_3 = arith.constant 0 : index
    %3 = vector.load %arg2[%c0_2, %c0_3] : memref<1x64xbf16, #tpu.memory_space<vmem>>, vector<1x64xbf16>
    %4 = vector.shape_cast %3 : vector<1x64xbf16> to vector<64xbf16>
    %5 = arith.extf %4 : vector<64xbf16> to vector<64xf32>
    %6 = arith.mulf %2, %2 : vector<8x64xf32>
    %cst = arith.constant dense<0.000000e+00> : vector<8xf32>
    %7 = vector.multi_reduction <add>, %6, %cst [1] : vector<8x64xf32> to vector<8xf32>
    %8 = vector.shape_cast %7 : vector<8xf32> to vector<8x1xf32>
    %cst_4 = arith.constant 6.400000e+01 : f32
    %9 = vector.broadcast %cst_4 : f32 to vector<8x1xf32>
    %10 = arith.divf %8, %9 : vector<8x1xf32>
    %cst_5 = arith.constant 9.99999997E-7 : f32
    %11 = vector.broadcast %cst_5 : f32 to vector<8x1xf32>
    %12 = arith.addf %10, %11 : vector<8x1xf32>
    %13 = math.rsqrt %12 : vector<8x1xf32>
    %14 = vector.broadcast %13 : vector<8x1xf32> to vector<8x64xf32>
    %15 = arith.mulf %2, %14 : vector<8x64xf32>
    %16 = vector.shape_cast %5 : vector<64xf32> to vector<1x64xf32>
    %17 = vector.broadcast %16 : vector<1x64xf32> to vector<8x64xf32>
    %18 = arith.mulf %15, %17 : vector<8x64xf32>
    %c0_6 = arith.constant 0 : index
    %c0_7 = arith.constant 0 : index
    %19 = vector.load %arg3[%c0_6, %c0_7] : memref<64x256xbf16, #tpu.memory_space<vmem>>, vector<64x256xbf16>
    %20 = arith.truncf %18 : vector<8x64xf32> to vector<8x64xbf16>
    %cst_8 = arith.constant dense<0.000000e+00> : vector<8x256xf32>
    %21 = tpu.matmul %20, %19, %cst_8 {dimension_numbers = #tpu.dot_dimension_numbers<[1], [0], [0], [1], [0, 0, 1, 1], [], []>} : vector<8x64xbf16>, vector<64x256xbf16>, vector<8x256xf32> -> vector<8x256xf32>
    %22 = vector.extract_strided_slice %21 {offsets = [0, 0], sizes = [8, 128], strides = [1, 1]} : vector<8x256xf32> to vector<8x128xf32>
    %23 = vector.extract_strided_slice %21 {offsets = [0, 128], sizes = [8, 128], strides = [1, 1]} : vector<8x256xf32> to vector<8x128xf32>
    %24 = arith.negf %22 : vector<8x128xf32>
    %25 = math.exp %24 : vector<8x128xf32>
    %cst_9 = arith.constant 1.000000e+00 : f32
    %26 = vector.broadcast %cst_9 : f32 to vector<8x128xf32>
    %27 = arith.addf %26, %25 : vector<8x128xf32>
    %28 = arith.divf %26, %27 : vector<8x128xf32>
    %29 = arith.mulf %22, %28 : vector<8x128xf32>
    %30 = arith.mulf %29, %23 : vector<8x128xf32>
    %c0_10 = arith.constant 0 : index
    %c0_11 = arith.constant 0 : index
    %31 = vector.load %arg4[%c0_10, %c0_11] : memref<128x64xbf16, #tpu.memory_space<vmem>>, vector<128x64xbf16>
    %32 = arith.truncf %30 : vector<8x128xf32> to vector<8x128xbf16>
    %cst_12 = arith.constant dense<0.000000e+00> : vector<8x64xf32>
    %33 = tpu.matmul %32, %31, %cst_12 {dimension_numbers = #tpu.dot_dimension_numbers<[1], [0], [0], [1], [0, 0, 1, 1], [], []>} : vector<8x128xbf16>, vector<128x64xbf16>, vector<8x64xf32> -> vector<8x64xf32>
    %34 = arith.addf %2, %33 : vector<8x64xf32>
    %35 = arith.truncf %34 : vector<8x64xf32> to vector<8x64xbf16>
    %c0_13 = arith.constant 0 : index
    %c0_14 = arith.constant 0 : index
    %c0_15 = arith.constant 0 : index
    %36 = vector.load %arg5[%c0_13, %c0_14, %c0_15] : memref<1x8x64xbf16, #tpu.memory_space<vmem>>, vector<1x8x64xbf16>
    %37 = vector.shape_cast %36 : vector<1x8x64xbf16> to vector<8x64xbf16>
    %38 = vector.shape_cast %35 : vector<8x64xbf16> to vector<1x8x64xbf16>
    tpu.vector_store %arg5[%c0_13, %c0_14, %c0_15], %38 {strides = array<i32>} : memref<1x8x64xbf16, #tpu.memory_space<vmem>>, vector<1x8x64xbf16>,
    return
  }
  func.func @transform_0(%arg0: i32) -> (i32, i32, i32) {
    %c0_i32 = arith.constant 0 : i32
    %c0_i32_0 = arith.constant 0 : i32
    %c0_i32_1 = arith.constant 0 : i32
    return %arg0, %c0_i32, %c0_i32_0 : i32, i32, i32
  }
  func.func @transform_1(%arg0: i32) -> (i32, i32) {
    %c0_i32 = arith.constant 0 : i32
    %c0_i32_0 = arith.constant 0 : i32
    %c0_i32_1 = arith.constant 0 : i32
    return %c0_i32, %c0_i32_0 : i32, i32
  }
  func.func @transform_2(%arg0: i32) -> (i32, i32) {
    %c0_i32 = arith.constant 0 : i32
    %c0_i32_0 = arith.constant 0 : i32
    %c0_i32_1 = arith.constant 0 : i32
    return %c0_i32, %c0_i32_0 : i32, i32
  }
  func.func @transform_3(%arg0: i32) -> (i32, i32) {
    %c0_i32 = arith.constant 0 : i32
    %c0_i32_0 = arith.constant 0 : i32
    %c0_i32_1 = arith.constant 0 : i32
    return %c0_i32, %c0_i32_0 : i32, i32
  }
  func.func @transform_4(%arg0: i32) -> (i32, i32, i32) {
    %c0_i32 = arith.constant 0 : i32
    %c0_i32_0 = arith.constant 0 : i32
    %c0_i32_1 = arith.constant 0 : i32
    return %arg0, %c0_i32, %c0_i32_0 : i32, i32, i32
  }
}

</mosaic_0001>

<llo_original>
// kernel: encoder_forward.11
$region0: #{encoder_forward.11}
  #allocation0 [shape = 'u32[]', space=smem, size = 0x4, offset = 0x4, fixed_abs, tag = 'smem constant byte address 0x4 - core index']
  #allocation1 [shape = 'u32[144,128]{1,0:T(1,128)}', space=vmem, size = 0x12000, scoped, tag = 'internal scratch']
  %s0 = inlined_call_operand.vmem [shape: bf16[2,8,64], index: 0, kind: input, shape index: {}]
  %s1 = inlined_call_operand.vmem [shape: bf16[1,64], index: 1, kind: input, shape index: {}]
  %s2 = inlined_call_operand.vmem [shape: bf16[64,256], index: 2, kind: input, shape index: {}]
  %s3 = inlined_call_operand.vmem [shape: bf16[128,64], index: 3, kind: input, shape index: {}]
  %s4 = inlined_call_operand.hbm [shape: bf16[2,8,64], index: 4, kind: output, shape index: {}]
  %s5 = sld [smem:[#allocation0]]
  $region49: #{encoder_forward.11} parent=0
    _
  %s7 = ssub.s32 1, %s5
  %s8 = scalar_select 0, %s7, %s5
  $region1: #{encoder_forward.11} parent=0
    #allocation2 [shape = 'u8[4096]{0}', space=vmem, size = 0x1000, scoped, tag = 'output window, operand 0']
    #allocation3 [shape = 's32[2]{0}', space=sflag, size = 0x8, scoped, tag = 'scoped memory for encoder_forward.11']
    %9 = vsyncpa [#allocation3], 0
    %s10 = scalar_lea.sflag [#allocation3], 1
    %11 = vsyncpa %s10, 0
    loop: start=0, step=1, limit=4
    $region2: #{encoder_forward.11} parent=1 // loop_pre_header
      _
    $region3: #{encoder_forward.11} parent=1 // loop_header
      %s13 = sphi 0, %s17
      %p14 = scmp.ge.s32.totalorder %s13, 4
      %s23 = sphi 0, %s25
      %s26 = sphi 0, %s23
      %s27 = sphi 0, %s26
      %s43 = sphi 0, %s27
      %s47 = sphi 0, %s47
      %s49 = sphi 0, %s47
      %s50 = sphi 0, %s49
      %s64 = sphi 0, %s50
      %s68 = sphi 0, %s68
      %s70 = sphi 0, %s68
      %s71 = sphi 0, %s70
      %s85 = sphi 0, %s71
      %s89 = sphi 0, %s89
      %s91 = sphi 0, %s89
      %s92 = sphi 0, %s91
      %s106 = sphi 0, %s92
      %s112 = sphi 0, %s114
      %s115 = sphi 0, %s112
      %s116 = sphi 0, %s115
      %s132 = sphi 0, %s116
    $region4: #{encoder_forward.11} parent=1 // loop_header_branch
      %16 = sbr.rel (%p14) target = $region8
    $region5: #{encoder_forward.11} parent=1 // loop_body
      %s18 = ssub.s32 %s13, 1
      %s19 = ssub.s32 %s13, 2
      %s20 = sadd.s32 %s13, 1
      %s21 = ssub.s32 %s13, %s20
      %p22 = scmp.eq.s32.totalorder %s21, 0
      %s24 = sadd.s32 %s23, 1
      %s25 = scalar_select %p22, %s23, %s24
      %p28 = pneg %p22
      %p29 = scmp.eq.s32.totalorder %s13, 1
      %p30 = por %p28, %p29
      %p31 = scmp.ne.s32.totalorder %s23, %s26
      %p32 = scmp.eq.s32.totalorder %s13, 0
      %p33 = por %p31, %p32
      %p34 = scmp.ne.s32.totalorder %s23, %s26
      %p35 = scmp.eq.s32.totalorder %s18, 1
      %p36 = por %p34, %p35
      %p37 = scmp.ne.s32.totalorder %s26, %s27
      %p38 = scmp.eq.s32.totalorder %s18, 0
      %p39 = por %p37, %p38
      %p40 = scmp.ne.s32.totalorder %s26, %s27
      %p41 = scmp.eq.s32.totalorder %s19, 1
      %p42 = por %p40, %p41
      %p44 = scmp.ne.s32.totalorder %s27, %s43
      %p45 = scmp.eq.s32.totalorder %s19, 0
      %p46 = por %p44, %p45
      %s48 = sadd.s32 %s47, 1
      %p51 = scmp.eq.s32.totalorder %s13, 1
      %p52 = scmp.ne.s32.totalorder %s47, %s49
      %p53 = scmp.eq.s32.totalorder %s13, 0
      %p54 = por %p52, %p53
      %p55 = scmp.ne.s32.totalorder %s47, %s49
      %p56 = scmp.eq.s32.totalorder %s18, 1
      %p57 = por %p55, %p56
      %p58 = scmp.ne.s32.totalorder %s49, %s50
      %p59 = scmp.eq.s32.totalorder %s18, 0
      %p60 = por %p58, %p59
      %p61 = scmp.ne.s32.totalorder %s49, %s50
      %p62 = scmp.eq.s32.totalorder %s19, 1
      %p63 = por %p61, %p62
      %p65 = scmp.ne.s32.totalorder %s50, %s64
      %p66 = scmp.eq.s32.totalorder %s19, 0
      %p67 = por %p65, %p66
      %s69 = sadd.s32 %s68, 1
      %p72 = scmp.eq.s32.totalorder %s13, 1
      %p73 = scmp.ne.s32.totalorder %s68, %s70
      %p74 = scmp.eq.s32.totalorder %s13, 0
      %p75 = por %p73, %p74
      %p76 = scmp.ne.s32.totalorder %s68, %s70
      %p77 = scmp.eq.s32.totalorder %s18, 1
      %p78 = por %p76, %p77
      %p79 = scmp.ne.s32.totalorder %s70, %s71
      %p80 = scmp.eq.s32.totalorder %s18, 0
      %p81 = por %p79, %p80
      %p82 = scmp.ne.s32.totalorder %s70, %s71
      %p83 = scmp.eq.s32.totalorder %s19, 1
      %p84 = por %p82, %p83
      %p86 = scmp.ne.s32.totalorder %s71, %s85
      %p87 = scmp.eq.s32.totalorder %s19, 0
      %p88 = por %p86, %p87
      %s90 = sadd.s32 %s89, 1
      %p93 = scmp.eq.s32.totalorder %s13, 1
      %p94 = scmp.ne.s32.totalorder %s89, %s91
      %p95 = scmp.eq.s32.totalorder %s13, 0
      %p96 = por %p94, %p95
      %p97 = scmp.ne.s32.totalorder %s89, %s91
      %p98 = scmp.eq.s32.totalorder %s18, 1
      %p99 = por %p97, %p98
      %p100 = scmp.ne.s32.totalorder %s91, %s92
      %p101 = scmp.eq.s32.totalorder %s18, 0
      %p102 = por %p100, %p101
      %p103 = scmp.ne.s32.totalorder %s91, %s92
      %p104 = scmp.eq.s32.totalorder %s19, 1
      %p105 = por %p103, %p104
      %p107 = scmp.ne.s32.totalorder %s92, %s106
      %p108 = scmp.eq.s32.totalorder %s19, 0
      %p109 = por %p107, %p108
      %s110 = ssub.s32 %s13, %s20
      %p111 = scmp.eq.s32.totalorder %s110, 0
      %s113 = sadd.s32 %s112, 1
      %s114 = scalar_select %p111, %s112, %s113
      %p117 = pneg %p111
      %p118 = scmp.eq.s32.totalorder %s13, 1
      %p119 = por %p117, %p118
      %p120 = scmp.ne.s32.totalorder %s112, %s115
      %p121 = scmp.eq.s32.totalorder %s13, 0
      %p122 = por %p120, %p121
      %p123 = scmp.ne.s32.totalorder %s112, %s115
      %p124 = scmp.eq.s32.totalorder %s18, 1
      %p125 = por %p123, %p124
      %p126 = scmp.ne.s32.totalorder %s115, %s116
      %p127 = scmp.eq.s32.totalorder %s18, 0
      %p128 = por %p126, %p127
      %p129 = scmp.ne.s32.totalorder %s115, %s116
      %p130 = scmp.eq.s32.totalorder %s19, 1
      %p131 = por %p129, %p130
      %p133 = scmp.ne.s32.totalorder %s116, %s132
      %p134 = scmp.eq.s32.totalorder %s19, 0
      %p135 = por %p133, %p134
      %p136 = scmp.le.s32.totalorder 1, %s13
      %p137 = scmp.lt.s32.totalorder %s13, 3
      %p138 = pnand %p136, %p137
      %p139 = pneg %p138
      // Predicated region
      $region9: #{encoder_forward.11} parent=5 // pred_check
        _
      $region10: #{encoder_forward.11} parent=5 // pred_check_branch
        %141 = sbr.rel (%p138) target = $region12
      $region11: #{encoder_forward.11} parent=5 // pred_region
        %s142 = ssub.s32 %s13, 1
        // Predicated region
        $region13: #{encoder_forward.11} parent=11 // pred_check
          %p143 = pneg %p60
        $region14: #{encoder_forward.11} parent=11 // pred_check_branch
          %145 = sbr.rel (%p143) target = $region16
        $region15: #{encoder_forward.11} parent=11 // pred_region
          _
        $region16: #{encoder_forward.11} parent=11 // pred_fallthru
          _
        // Predicated region
        $region17: #{encoder_forward.11} parent=11 // pred_check
          %p146 = pneg %p81
        $region18: #{encoder_forward.11} parent=11 // pred_check_branch
          %148 = sbr.rel (%p146) target = $region20
        $region19: #{encoder_forward.11} parent=11 // pred_region
          _
        $region20: #{encoder_forward.11} parent=11 // pred_fallthru
          _
        // Predicated region
        $region21: #{encoder_forward.11} parent=11 // pred_check
          %p149 = pneg %p102
        $region22: #{encoder_forward.11} parent=11 // pred_check_branch
          %151 = sbr.rel (%p149) target = $region24
        $region23: #{encoder_forward.11} parent=11 // pred_region
          _
        $region24: #{encoder_forward.11} parent=11 // pred_fallthru
          _
      $region12: #{encoder_forward.11} parent=5 // pred_fallthru
        _
      %p152 = scmp.lt.s32.totalorder %s13, 2
      // Predicated region
      $region25: #{encoder_forward.11} parent=5 // pred_check
        %p153 = pneg %p152
      $region26: #{encoder_forward.11} parent=5 // pred_check_branch
        %155 = sbr.rel (%p153) target = $region28
      $region27: #{encoder_forward.11} parent=5 // pred_region
        // Predicated region
        $region29: #{encoder_forward.11} parent=27 // pred_check
          %p156 = pneg %p33
        $region30: #{encoder_forward.11} parent=27 // pred_check_branch
          %158 = sbr.rel (%p156) target = $region32
        $region31: #{encoder_forward.11} parent=27 // pred_region
          %p159 = scmp.lt.s32.totalorder %s13, 1
          %s160 = scalar_select %p159, %s13, 1
          %s161 = smul.addr %s160, 4
          %s162 = scalar_lea.vmem %s0, %s161
        $region32: #{encoder_forward.11} parent=27 // pred_fallthru
          _
      $region28: #{encoder_forward.11} parent=5 // pred_fallthru
        _
      %p163 = scmp.le.s32.totalorder 1, %s13
      %p164 = scmp.lt.s32.totalorder %s13, 3
      %p165 = pnand %p163, %p164
      %p166 = pneg %p165
      // Predicated region
      $region33: #{encoder_forward.11} parent=5 // pred_check
        _
      $region34: #{encoder_forward.11} parent=5 // pred_check_branch
        %168 = sbr.rel (%p165) target = $region36
      $region35: #{encoder_forward.11} parent=5 // pred_region
        %s169 = ssub.s32 %s13, 1
        %p170 = scmp.lt.s32.totalorder %s18, 1
        %s171 = scalar_select %p170, %s18, 1
        %s172 = smul.addr %s171, 4
        %s173 = scalar_lea.vmem %s0, %s172
        %p174 = pneg %p39
        %p175 = pneg %p36
        %p176 = pneg %p60
        %p177 = pneg %p57
        %p178 = pneg %p81
        %p179 = pneg %p78
        %p180 = pneg %p102
        %p181 = pneg %p99
        %p182 = pneg %p128
        %p183 = pneg %p125
        %s184 = sand.u32 %s115, 1
        %s185 = scalar_lea.sflag [#allocation3], %s184
        %s186 = sand.u32 %s115, 1
        %s187 = smul.addr %s186, 4
        %s188 = scalar_lea.vmem [#allocation2], %s187
        %p189 = scmp.lt.s32.totalorder %s18, 1
        %s190 = scalar_select %p189, %s18, 1
        %s191 = smul.addr %s190, 4
        %s192 = scalar_lea.vmem %s0, %s191
        %v194 = vld [vmem:[%s192] sm:$0xf]
        %v195 = vunpack.c.l.bf16 %v194
        %v196 = vld [vmem:[%s1] sm:$0x1]
        %v197 = vunpack.c.l.bf16 %v196
        %v198 = vmul.f32 %v195, %v195
        %vm199 = vcmask 523264
        %v200 = vsel %vm199, %v198, 0.0
        %201 = vadd.xlane.f32.xlu0 %v200
        %v202 = vpop.xlane.xlu0 %201
        %v203 = vrcp.pop 64.0
        %v204 = vmul.f32 %v202, %v203
        %v205 = vadd.f32 %v204, 1e-06
        %v206 = vrsqrt.pop %v205
        %v207 = vmul.f32 %v195, %v206
        %v208 = vlaneseq
        %v209 = vshrl.u32 %v208, 7
        %v210 = vsub.s32 0, %v209
        %v211 = vrot.slane %v197, %v210
        %v212 = vmul.f32 %v207, %v211
        %v213 = vld [vmem:[%s2] sm:$0xff]
        %v214 = vld [vmem:[%s2 + $0x8] sm:$0xff]
        %v215 = vld [vmem:[%s2 + $0x10] sm:$0xff]
        %v216 = vld [vmem:[%s2 + $0x18] sm:$0xff]
        %v217 = vld [vmem:[%s2 + $0x20] sm:$0xff]
        %v218 = vld [vmem:[%s2 + $0x28] sm:$0xff]
        %v219 = vld [vmem:[%s2 + $0x30] sm:$0xff]
        %v220 = vld [vmem:[%s2 + $0x38] sm:$0xff]
        %v221 = vpack.c.bf16 %v212, %v212
        %v230 = vunpack.c.l.b16 %v213
        %v231 = vunpack.c.h.b16 %v213
        %v232 = vunpack.c.l.b16 %v214
        %v233 = vunpack.c.h.b16 %v214
        %v234 = vunpack.c.l.b16 %v215
        %v235 = vunpack.c.h.b16 %v215
        %v236 = vunpack.c.l.b16 %v216
        %v237 = vunpack.c.h.b16 %v216
        %v238 = vunpack.c.l.b16 %v217
        %v239 = vunpack.c.h.b16 %v217
        %v240 = vunpack.c.l.b16 %v218
        %v241 = vunpack.c.h.b16 %v218
        %v242 = vunpack.c.l.b16 %v219
        %v243 = vunpack.c.h.b16 %v219
        %v244 = vunpack.c.l.b16 %v220
        %v245 = vunpack.c.h.b16 %v220
        %v246 = vpack.c.b16 %v232, %v230
        %v247 = vpack.c.b16 %v233, %v231
        %v248 = vpack.c.b16 %v236, %v234
        %v249 = vpack.c.b16 %v237, %v235
        %v250 = vpack.c.b16 %v240, %v238
        %v251 = vpack.c.b16 %v241, %v239
        %v252 = vpack.c.b16 %v244, %v242
        %v253 = vpack.c.b16 %v245, %v243
        %v263 = vsel %vm199, %v221, 0
        %265 = vmatprep.subr.bf16.mxu0 %v247
        %266 = vmatpush1.bf16.msra.mxu0 %v246
        %267 = vmatprep.subr.bf16.mxu0 %v249
        %268 = vmatpush1.bf16.msra.mxu0 %v248
        %269 = vmatprep.subr.bf16.mxu0 %v251
        %270 = vmatpush1.bf16.msra.mxu0 %v250
        %271 = vmatprep.subr.bf16.mxu0 %v253
        %272 = vmatpush1.bf16.msra.mxu0 %v252
        %273 = vmatprep.subr.bf16.mxu0 0
        %274 = vmatpush1.bf16.msra.mxu0 0
        %275 = vmatprep.subr.bf16.mxu0 0
        %276 = vmatpush1.bf16.msra.mxu0 0
        %277 = vmatprep.subr.bf16.mxu0 0
        %278 = vmatpush1.bf16.msra.mxu0 0
        %279 = vmatprep.subr.bf16.mxu0 0
        %280 = vmatpush1.bf16.msra.mxu0 0
        %281 = vmatprep.subr.bf16.mxu0 0
        %282 = vmatpush1.bf16.msra.mxu0 0
        %283 = vmatprep.subr.bf16.mxu0 0
        %284 = vmatpush1.bf16.msra.mxu0 0
        %285 = vmatprep.subr.bf16.mxu0 0
        %286 = vmatpush1.bf16.msra.mxu0 0
        %287 = vmatprep.subr.bf16.mxu0 0
        %288 = vmatpush1.bf16.msra.mxu0 0
        %289 = vmatprep.subr.bf16.mxu0 0
        %290 = vmatpush1.bf16.msra.mxu0 0
        %291 = vmatprep.subr.bf16.mxu0 0
        %292 = vmatpush1.bf16.msra.mxu0 0
        %293 = vmatprep.subr.bf16.mxu0 0
        %294 = vmatpush1.bf16.msra.mxu0 0
        %295 = vmatprep.subr.bf16.mxu0 0
        %296 = vmatpush1.bf16.msra.mxu0 0
        %297 = vmatprep.mubr.bf16.mxu0 0
        %298 = vmatmul.mubr.bf16.gmra.mrb[0].mxu0 %v263
        %v299 = vpop.f32.mrb[0].mxu0
        %v300 = vadd.f32 0.0, %v299
        %v301 = vpop.f32.mrb[0].mxu0
        %v302 = vadd.f32 0.0, %v301
        %v303 = vpop.f32.mrb[0].mxu0
        %v304 = vpop.f32.mrb[0].mxu0
        %305 = vdwg.mxu0
        %v306 = vxor.u32 %v300, 2147483648
        %v307 = vmul.f32 %v306, 1.442695
        %v308 = vpow.pop %v307
        %v309 = vadd.f32 %v308, 1.0
        %v310 = vrcp.pop %v309
        %v311 = vmul.f32 1.0, %v310
        %v312 = vmul.f32 %v300, %v311
        %v313 = vmul.f32 %v312, %v302
        %v314 = vld [vmem:[%s3] sm:$0xf]
        %v315 = vld [vmem:[%s3 + $0x4] sm:$0xf]
        %v316 = vld [vmem:[%s3 + $0x8] sm:$0xf]
        %v317 = vld [vmem:[%s3 + $0xc] sm:$0xf]
        %v318 = vld [vmem:[%s3 + $0x10] sm:$0xf]
        %v319 = vld [vmem:[%s3 + $0x14] sm:$0xf]
        %v320 = vld [vmem:[%s3 + $0x18] sm:$0xf]
        %v321 = vld [vmem:[%s3 + $0x1c] sm:$0xf]
        %v322 = vld [vmem:[%s3 + $0x20] sm:$0xf]
        %v323 = vld [vmem:[%s3 + $0x24] sm:$0xf]
        %v324 = vld [vmem:[%s3 + $0x28] sm:$0xf]
        %v325 = vld [vmem:[%s3 + $0x2c] sm:$0xf]
        %v326 = vld [vmem:[%s3 + $0x30] sm:$0xf]
        %v327 = vld [vmem:[%s3 + $0x34] sm:$0xf]
        %v328 = vld [vmem:[%s3 + $0x38] sm:$0xf]
        %v329 = vld [vmem:[%s3 + $0x3c] sm:$0xf]
        %v330 = vpack.c.bf16 %v313, %v313
        %v347 = vunpack.c.l.b16 %v314
        %v348 = vunpack.c.l.b16 %v315
        %v349 = vunpack.c.l.b16 %v316
        %v350 = vunpack.c.l.b16 %v317
        %v351 = vunpack.c.l.b16 %v318
        %v352 = vunpack.c.l.b16 %v319
        %v353 = vunpack.c.l.b16 %v320
        %v354 = vunpack.c.l.b16 %v321
        %v355 = vunpack.c.l.b16 %v322
        %v356 = vunpack.c.l.b16 %v323
        %v357 = vunpack.c.l.b16 %v324
        %v358 = vunpack.c.l.b16 %v325
        %v359 = vunpack.c.l.b16 %v326
        %v360 = vunpack.c.l.b16 %v327
        %v361 = vunpack.c.l.b16 %v328
        %v362 = vunpack.c.l.b16 %v329
        %v363 = vpack.c.b16 %v348, %v347
        %v364 = vpack.c.b16 %v350, %v349
        %v365 = vpack.c.b16 %v352, %v351
        %v366 = vpack.c.b16 %v354, %v353
        %v367 = vpack.c.b16 %v356, %v355
        %v368 = vpack.c.b16 %v358, %v357
        %v369 = vpack.c.b16 %v360, %v359
        %v370 = vpack.c.b16 %v362, %v361
        %379 = vmatprep.subr.bf16.mxu0 0
        %380 = vmatpush1.bf16.msra.mxu0 %v363
        %381 = vmatprep.subr.bf16.mxu0 0
        %382 = vmatpush1.bf16.msra.mxu0 %v364
        %383 = vmatprep.subr.bf16.mxu0 0
        %384 = vmatpush1.bf16.msra.mxu0 %v365
        %385 = vmatprep.subr.bf16.mxu0 0
        %386 = vmatpush1.bf16.msra.mxu0 %v366
        %387 = vmatprep.subr.bf16.mxu0 0
        %388 = vmatpush1.bf16.msra.mxu0 %v367
        %389 = vmatprep.subr.bf16.mxu0 0
        %390 = vmatpush1.bf16.msra.mxu0 %v368
        %391 = vmatprep.subr.bf16.mxu0 0
        %392 = vmatpush1.bf16.msra.mxu0 %v369
        %393 = vmatprep.subr.bf16.mxu0 0
        %394 = vmatpush1.bf16.msra.mxu0 %v370
        %395 = vmatprep.subr.bf16.mxu0 0
        %396 = vmatpush1.bf16.msra.mxu0 0
        %397 = vmatprep.subr.bf16.mxu0 0
        %398 = vmatpush1.bf16.msra.mxu0 0
        %399 = vmatprep.subr.bf16.mxu0 0
        %400 = vmatpush1.bf16.msra.mxu0 0
        %401 = vmatprep.subr.bf16.mxu0 0
        %402 = vmatpush1.bf16.msra.mxu0 0
        %403 = vmatprep.subr.bf16.mxu0 0
        %404 = vmatpush1.bf16.msra.mxu0 0
        %405 = vmatprep.subr.bf16.mxu0 0
        %406 = vmatpush1.bf16.msra.mxu0 0
        %407 = vmatprep.subr.bf16.mxu0 0
        %408 = vmatpush1.bf16.msra.mxu0 0
        %409 = vmatprep.subr.bf16.mxu0 0
        %410 = vmatpush1.bf16.msra.mxu0 0
        %411 = vmatprep.mubr.bf16.mxu0 0
        %412 = vmatmul.mubr.bf16.gmra.mrb[0].mxu0 %v330
        %v413 = vpop.f32.mrb[0].mxu0
        %v414 = vadd.f32 0.0, %v413
        %v415 = vpop.f32.mrb[0].mxu0
        %v416 = vpop.f32.mrb[0].mxu0
        %v417 = vpop.f32.mrb[0].mxu0
        %418 = vdwg.mxu0
        %v419 = vadd.f32 %v195, %v414
        %v420 = vpack.c.bf16 %v419, %v419
        %vm421 = vcmask 519168
        %422 = vst.msk [vmem:[%s188] sm:$0xf] %vm421, %v420
        %s423 = sand.u32 %s115, 1
        %s424 = scalar_lea.sflag [#allocation3], %s423
        %s425 = sand.u32 %s115, 1
        %s426 = smul.addr %s425, 4
        %s427 = scalar_lea.vmem [#allocation2], %s426
        // Predicated region
        $region37: #{encoder_forward.11} parent=35 // pred_check
          %p428 = pneg %p125
        $region38: #{encoder_forward.11} parent=35 // pred_check_branch
          %430 = sbr.rel (%p428) target = $region40
        $region39: #{encoder_forward.11} parent=35 // pred_region
          %s432 = ssub.s32 64, 64
          %433 = vsyncadd %s424, %s432
          %s434 = smul.addr %s18, 64
          %s435 = scalar_lea.hbm %s4, %s434
          %s437 = sshll.u32 %s427, 4
          %s438 = int_to_ptr.vmem [resolvable:$true] %s437
          %440 = dma.vmem_to_hbm [thread:$0]  %s438, 64, %s435, %s424
        $region40: #{encoder_forward.11} parent=35 // pred_fallthru
          _
      $region36: #{encoder_forward.11} parent=5 // pred_fallthru
        _
      %p441 = scmp.le.s32.totalorder 2, %s13
      // Predicated region
      $region41: #{encoder_forward.11} parent=5 // pred_check
        %p442 = pneg %p441
      $region42: #{encoder_forward.11} parent=5 // pred_check_branch
        %444 = sbr.rel (%p442) target = $region44
      $region43: #{encoder_forward.11} parent=5 // pred_region
        %s445 = ssub.s32 %s13, 2
        // Predicated region
        $region45: #{encoder_forward.11} parent=43 // pred_check
          %p446 = pneg %p131
        $region46: #{encoder_forward.11} parent=43 // pred_check_branch
          %448 = sbr.rel (%p446) target = $region48
        $region47: #{encoder_forward.11} parent=43 // pred_region
          %s449 = sand.u32 %s116, 1
          %s450 = scalar_lea.sflag [#allocation3], %s449
          %s451 = sand.u32 %s116, 1
          %s452 = smul.addr %s451, 4
          %s453 = scalar_lea.vmem [#allocation2], %s452
          %454 = dma.done %s450, 64
        $region48: #{encoder_forward.11} parent=43 // pred_fallthru
          _
      $region44: #{encoder_forward.11} parent=5 // pred_fallthru
        _
    $region6: #{encoder_forward.11} parent=1 // loop_footer
      %s17 = sadd.s32 1, %s13
    $region7: #{encoder_forward.11} parent=1 // loop_footer_branch
      %12 = sbr.rel target = $region3
    $region8: #{encoder_forward.11} parent=1 // loop_exit
      _
    %455 = vsyncpa [#allocation3], 1
    %s456 = scalar_lea.sflag [#allocation3], 1
    %457 = vsyncpa %s456, 1

// kernel: encoder_forward.8
$region0: #{encoder_forward.8}
  #allocation0 [shape = 'u32[]', space=smem, size = 0x4, offset = 0x4, fixed_abs, tag = 'smem constant byte address 0x4 - core index']
  #allocation1 [shape = 'u32[144,128]{1,0:T(1,128)}', space=vmem, size = 0x12000, scoped, tag = 'internal scratch']
  %s0 = inlined_call_operand.vmem [shape: bf16[2,8,64], index: 0, kind: input, shape index: {}]
  %s1 = inlined_call_operand.vmem [shape: bf16[1,64], index: 1, kind: input, shape index: {}]
  %s2 = inlined_call_operand.vmem [shape: bf16[64,256], index: 2, kind: input, shape index: {}]
  %s3 = inlined_call_operand.vmem [shape: bf16[128,64], index: 3, kind: input, shape index: {}]
  %s4 = inlined_call_operand.vmem [shape: bf16[2,8,64], index: 4, kind: output, shape index: {}]
  %s5 = sld [smem:[#allocation0]]
  $region49: #{encoder_forward.8} parent=0
    _
  %s7 = ssub.s32 1, %s5
  %s8 = scalar_select 0, %s7, %s5
  loop: start=0, step=1, limit=4
  $region2: #{encoder_forward.8} parent=0 // loop_pre_header
    _
  $region3: #{encoder_forward.8} parent=0 // loop_header
    %s10 = sphi 0, %s14
    %p11 = scmp.ge.s32.totalorder %s10, 4
    %s20 = sphi 0, %s22
    %s23 = sphi 0, %s20
    %s24 = sphi 0, %s23
    %s40 = sphi 0, %s24
    %s44 = sphi 0, %s44
    %s46 = sphi 0, %s44
    %s47 = sphi 0, %s46
    %s61 = sphi 0, %s47
    %s65 = sphi 0, %s65
    %s67 = sphi 0, %s65
    %s68 = sphi 0, %s67
    %s82 = sphi 0, %s68
    %s86 = sphi 0, %s86
    %s88 = sphi 0, %s86
    %s89 = sphi 0, %s88
    %s103 = sphi 0, %s89
    %s109 = sphi 0, %s111
    %s112 = sphi 0, %s109
    %s113 = sphi 0, %s112
    %s129 = sphi 0, %s113
  $region4: #{encoder_forward.8} parent=0 // loop_header_branch
    %13 = sbr.rel (%p11) target = $region8
  $region5: #{encoder_forward.8} parent=0 // loop_body
    %s15 = ssub.s32 %s10, 1
    %s16 = ssub.s32 %s10, 2
    %s17 = sadd.s32 %s10, 1
    %s18 = ssub.s32 %s10, %s17
    %p19 = scmp.eq.s32.totalorder %s18, 0
    %s21 = sadd.s32 %s20, 1
    %s22 = scalar_select %p19, %s20, %s21
    %p25 = pneg %p19
    %p26 = scmp.eq.s32.totalorder %s10, 1
    %p27 = por %p25, %p26
    %p28 = scmp.ne.s32.totalorder %s20, %s23
    %p29 = scmp.eq.s32.totalorder %s10, 0
    %p30 = por %p28, %p29
    %p31 = scmp.ne.s32.totalorder %s20, %s23
    %p32 = scmp.eq.s32.totalorder %s15, 1
    %p33 = por %p31, %p32
    %p34 = scmp.ne.s32.totalorder %s23, %s24
    %p35 = scmp.eq.s32.totalorder %s15, 0
    %p36 = por %p34, %p35
    %p37 = scmp.ne.s32.totalorder %s23, %s24
    %p38 = scmp.eq.s32.totalorder %s16, 1
    %p39 = por %p37, %p38
    %p41 = scmp.ne.s32.totalorder %s24, %s40
    %p42 = scmp.eq.s32.totalorder %s16, 0
    %p43 = por %p41, %p42
    %s45 = sadd.s32 %s44, 1
    %p48 = scmp.eq.s32.totalorder %s10, 1
    %p49 = scmp.ne.s32.totalorder %s44, %s46
    %p50 = scmp.eq.s32.totalorder %s10, 0
    %p51 = por %p49, %p50
    %p52 = scmp.ne.s32.totalorder %s44, %s46
    %p53 = scmp.eq.s32.totalorder %s15, 1
    %p54 = por %p52, %p53
    %p55 = scmp.ne.s32.totalorder %s46, %s47
    %p56 = scmp.eq.s32.totalorder %s15, 0
    %p57 = por %p55, %p56
    %p58 = scmp.ne.s32.totalorder %s46, %s47
    %p59 = scmp.eq.s32.totalorder %s16, 1
    %p60 = por %p58, %p59
    %p62 = scmp.ne.s32.totalorder %s47, %s61
    %p63 = scmp.eq.s32.totalorder %s16, 0
    %p64 = por %p62, %p63
    %s66 = sadd.s32 %s65, 1
    %p69 = scmp.eq.s32.totalorder %s10, 1
    %p70 = scmp.ne.s32.totalorder %s65, %s67
    %p71 = scmp.eq.s32.totalorder %s10, 0
    %p72 = por %p70, %p71
    %p73 = scmp.ne.s32.totalorder %s65, %s67
    %p74 = scmp.eq.s32.totalorder %s15, 1
    %p75 = por %p73, %p74
    %p76 = scmp.ne.s32.totalorder %s67, %s68
    %p77 = scmp.eq.s32.totalorder %s15, 0
    %p78 = por %p76, %p77
    %p79 = scmp.ne.s32.totalorder %s67, %s68
    %p80 = scmp.eq.s32.totalorder %s16, 1
    %p81 = por %p79, %p80
    %p83 = scmp.ne.s32.totalorder %s68, %s82
    %p84 = scmp.eq.s32.totalorder %s16, 0
    %p85 = por %p83, %p84
    %s87 = sadd.s32 %s86, 1
    %p90 = scmp.eq.s32.totalorder %s10, 1
    %p91 = scmp.ne.s32.totalorder %s86, %s88
    %p92 = scmp.eq.s32.totalorder %s10, 0
    %p93 = por %p91, %p92
    %p94 = scmp.ne.s32.totalorder %s86, %s88
    %p95 = scmp.eq.s32.totalorder %s15, 1
    %p96 = por %p94, %p95
    %p97 = scmp.ne.s32.totalorder %s88, %s89
    %p98 = scmp.eq.s32.totalorder %s15, 0
    %p99 = por %p97, %p98
    %p100 = scmp.ne.s32.totalorder %s88, %s89
    %p101 = scmp.eq.s32.totalorder %s16, 1
    %p102 = por %p100, %p101
    %p104 = scmp.ne.s32.totalorder %s89, %s103
    %p105 = scmp.eq.s32.totalorder %s16, 0
    %p106 = por %p104, %p105
    %s107 = ssub.s32 %s10, %s17
    %p108 = scmp.eq.s32.totalorder %s107, 0
    %s110 = sadd.s32 %s109, 1
    %s111 = scalar_select %p108, %s109, %s110
    %p114 = pneg %p108
    %p115 = scmp.eq.s32.totalorder %s10, 1
    %p116 = por %p114, %p115
    %p117 = scmp.ne.s32.totalorder %s109, %s112
    %p118 = scmp.eq.s32.totalorder %s10, 0
    %p119 = por %p117, %p118
    %p120 = scmp.ne.s32.totalorder %s109, %s112
    %p121 = scmp.eq.s32.totalorder %s15, 1
    %p122 = por %p120, %p121
    %p123 = scmp.ne.s32.totalorder %s112, %s113
    %p124 = scmp.eq.s32.totalorder %s15, 0
    %p125 = por %p123, %p124
    %p126 = scmp.ne.s32.totalorder %s112, %s113
    %p127 = scmp.eq.s32.totalorder %s16, 1
    %p128 = por %p126, %p127
    %p130 = scmp.ne.s32.totalorder %s113, %s129
    %p131 = scmp.eq.s32.totalorder %s16, 0
    %p132 = por %p130, %p131
    %p133 = scmp.le.s32.totalorder 1, %s10
    %p134 = scmp.lt.s32.totalorder %s10, 3
    %p135 = pnand %p133, %p134
    %p136 = pneg %p135
    // Predicated region
    $region9: #{encoder_forward.8} parent=5 // pred_check
      _
    $region10: #{encoder_forward.8} parent=5 // pred_check_branch
      %138 = sbr.rel (%p135) target = $region12
    $region11: #{encoder_forward.8} parent=5 // pred_region
      %s139 = ssub.s32 %s10, 1
      // Predicated region
      $region13: #{encoder_forward.8} parent=11 // pred_check
        %p140 = pneg %p57
      $region14: #{encoder_forward.8} parent=11 // pred_check_branch
        %142 = sbr.rel (%p140) target = $region16
      $region15: #{encoder_forward.8} parent=11 // pred_region
        _
      $region16: #{encoder_forward.8} parent=11 // pred_fallthru
        _
      // Predicated region
      $region17: #{encoder_forward.8} parent=11 // pred_check
        %p143 = pneg %p78
      $region18: #{encoder_forward.8} parent=11 // pred_check_branch
        %145 = sbr.rel (%p143) target = $region20
      $region19: #{encoder_forward.8} parent=11 // pred_region
        _
      $region20: #{encoder_forward.8} parent=11 // pred_fallthru
        _
      // Predicated region
      $region21: #{encoder_forward.8} parent=11 // pred_check
        %p146 = pneg %p99
      $region22: #{encoder_forward.8} parent=11 // pred_check_branch
        %148 = sbr.rel (%p146) target = $region24
      $region23: #{encoder_forward.8} parent=11 // pred_region
        _
      $region24: #{encoder_forward.8} parent=11 // pred_fallthru
        _
    $region12: #{encoder_forward.8} parent=5 // pred_fallthru
      _
    %p149 = scmp.lt.s32.totalorder %s10, 2
    // Predicated region
    $region25: #{encoder_forward.8} parent=5 // pred_check
      %p150 = pneg %p149
    $region26: #{encoder_forward.8} parent=5 // pred_check_branch
      %152 = sbr.rel (%p150) target = $region28
    $region27: #{encoder_forward.8} parent=5 // pred_region
      // Predicated region
      $region29: #{encoder_forward.8} parent=27 // pred_check
        %p153 = pneg %p30
      $region30: #{encoder_forward.8} parent=27 // pred_check_branch
        %155 = sbr.rel (%p153) target = $region32
      $region31: #{encoder_forward.8} parent=27 // pred_region
        %p156 = scmp.lt.s32.totalorder %s10, 1
        %s157 = scalar_select %p156, %s10, 1
        %s158 = smul.addr %s157, 4
        %s159 = scalar_lea.vmem %s0, %s158
      $region32: #{encoder_forward.8} parent=27 // pred_fallthru
        _
    $region28: #{encoder_forward.8} parent=5 // pred_fallthru
      _
    %p160 = scmp.le.s32.totalorder 1, %s10
    %p161 = scmp.lt.s32.totalorder %s10, 3
    %p162 = pnand %p160, %p161
    %p163 = pneg %p162
    // Predicated region
    $region33: #{encoder_forward.8} parent=5 // pred_check
      _
    $region34: #{encoder_forward.8} parent=5 // pred_check_branch
      %165 = sbr.rel (%p162) target = $region36
    $region35: #{encoder_forward.8} parent=5 // pred_region
      %s166 = ssub.s32 %s10, 1
      %p167 = scmp.lt.s32.totalorder %s15, 1
      %s168 = scalar_select %p167, %s15, 1
      %s169 = smul.addr %s168, 4
      %s170 = scalar_lea.vmem %s0, %s169
      %p171 = pneg %p36
      %p172 = pneg %p33
      %p173 = pneg %p57
      %p174 = pneg %p54
      %p175 = pneg %p78
      %p176 = pneg %p75
      %p177 = pneg %p99
      %p178 = pneg %p96
      %p179 = pneg %p125
      %p180 = pneg %p122
      %p181 = scmp.lt.s32.totalorder %s15, 1
      %s182 = scalar_select %p181, %s15, 1
      %s183 = smul.addr %s182, 4
      %s184 = scalar_lea.vmem %s4, %s183
      %p185 = scmp.lt.s32.totalorder %s15, 1
      %s186 = scalar_select %p185, %s15, 1
      %s187 = smul.addr %s186, 4
      %s188 = scalar_lea.vmem %s0, %s187
      %p189 = scmp.lt.s32.totalorder %s15, 1
      %s190 = scalar_select %p189, %s15, 1
      %s191 = smul.addr %s190, 4
      %s192 = scalar_lea.vmem %s4, %s191
      %v194 = vld [vmem:[%s188] sm:$0xf]
      %v195 = vunpack.c.l.bf16 %v194
      %v196 = vld [vmem:[%s1] sm:$0x1]
      %v197 = vunpack.c.l.bf16 %v196
      %v198 = vmul.f32 %v195, %v195
      %vm199 = vcmask 523264
      %v200 = vsel %vm199, %v198, 0.0
      %201 = vadd.xlane.f32.xlu0 %v200
      %v202 = vpop.xlane.xlu0 %201
      %v203 = vrcp.pop 64.0
      %v204 = vmul.f32 %v202, %v203
      %v205 = vadd.f32 %v204, 1e-06
      %v206 = vrsqrt.pop %v205
      %v207 = vmul.f32 %v195, %v206
      %v208 = vlaneseq
      %v209 = vshrl.u32 %v208, 7
      %v210 = vsub.s32 0, %v209
      %v211 = vrot.slane %v197, %v210
      %v212 = vmul.f32 %v207, %v211
      %v213 = vld [vmem:[%s2] sm:$0xff]
      %v214 = vld [vmem:[%s2 + $0x8] sm:$0xff]
      %v215 = vld [vmem:[%s2 + $0x10] sm:$0xff]
      %v216 = vld [vmem:[%s2 + $0x18] sm:$0xff]
      %v217 = vld [vmem:[%s2 + $0x20] sm:$0xff]
      %v218 = vld [vmem:[%s2 + $0x28] sm:$0xff]
      %v219 = vld [vmem:[%s2 + $0x30] sm:$0xff]
      %v220 = vld [vmem:[%s2 + $0x38] sm:$0xff]
      %v221 = vpack.c.bf16 %v212, %v212
      %v230 = vunpack.c.l.b16 %v213
      %v231 = vunpack.c.h.b16 %v213
      %v232 = vunpack.c.l.b16 %v214
      %v233 = vunpack.c.h.b16 %v214
      %v234 = vunpack.c.l.b16 %v215
      %v235 = vunpack.c.h.b16 %v215
      %v236 = vunpack.c.l.b16 %v216
      %v237 = vunpack.c.h.b16 %v216
      %v238 = vunpack.c.l.b16 %v217
      %v239 = vunpack.c.h.b16 %v217
      %v240 = vunpack.c.l.b16 %v218
      %v241 = vunpack.c.h.b16 %v218
      %v242 = vunpack.c.l.b16 %v219
      %v243 = vunpack.c.h.b16 %v219
      %v244 = vunpack.c.l.b16 %v220
      %v245 = vunpack.c.h.b16 %v220
      %v246 = vpack.c.b16 %v232, %v230
      %v247 = vpack.c.b16 %v233, %v231
      %v248 = vpack.c.b16 %v236, %v234
      %v249 = vpack.c.b16 %v237, %v235
      %v250 = vpack.c.b16 %v240, %v238
      %v251 = vpack.c.b16 %v241, %v239
      %v252 = vpack.c.b16 %v244, %v242
      %v253 = vpack.c.b16 %v245, %v243
      %v263 = vsel %vm199, %v221, 0
      %265 = vmatprep.subr.bf16.mxu0 %v247
      %266 = vmatpush1.bf16.msra.mxu0 %v246
      %267 = vmatprep.subr.bf16.mxu0 %v249
      %268 = vmatpush1.bf16.msra.mxu0 %v248
      %269 = vmatprep.subr.bf16.mxu0 %v251
      %270 = vmatpush1.bf16.msra.mxu0 %v250
      %271 = vmatprep.subr.bf16.mxu0 %v253
      %272 = vmatpush1.bf16.msra.mxu0 %v252
      %273 = vmatprep.subr.bf16.mxu0 0
      %274 = vmatpush1.bf16.msra.mxu0 0
      %275 = vmatprep.subr.bf16.mxu0 0
      %276 = vmatpush1.bf16.msra.mxu0 0
      %277 = vmatprep.subr.bf16.mxu0 0
      %278 = vmatpush1.bf16.msra.mxu0 0
      %279 = vmatprep.subr.bf16.mxu0 0
      %280 = vmatpush1.bf16.msra.mxu0 0
      %281 = vmatprep.subr.bf16.mxu0 0
      %282 = vmatpush1.bf16.msra.mxu0 0
      %283 = vmatprep.subr.bf16.mxu0 0
      %284 = vmatpush1.bf16.msra.mxu0 0
      %285 = vmatprep.subr.bf16.mxu0 0
      %286 = vmatpush1.bf16.msra.mxu0 0
      %287 = vmatprep.subr.bf16.mxu0 0
      %288 = vmatpush1.bf16.msra.mxu0 0
      %289 = vmatprep.subr.bf16.mxu0 0
      %290 = vmatpush1.bf16.msra.mxu0 0
      %291 = vmatprep.subr.bf16.mxu0 0
      %292 = vmatpush1.bf16.msra.mxu0 0
      %293 = vmatprep.subr.bf16.mxu0 0
      %294 = vmatpush1.bf16.msra.mxu0 0
      %295 = vmatprep.subr.bf16.mxu0 0
      %296 = vmatpush1.bf16.msra.mxu0 0
      %297 = vmatprep.mubr.bf16.mxu0 0
      %298 = vmatmul.mubr.bf16.gmra.mrb[0].mxu0 %v263
      %v299 = vpop.f32.mrb[0].mxu0
      %v300 = vadd.f32 0.0, %v299
      %v301 = vpop.f32.mrb[0].mxu0
      %v302 = vadd.f32 0.0, %v301
      %v303 = vpop.f32.mrb[0].mxu0
      %v304 = vpop.f32.mrb[0].mxu0
      %305 = vdwg.mxu0
      %v306 = vxor.u32 %v300, 2147483648
      %v307 = vmul.f32 %v306, 1.442695
      %v308 = vpow.pop %v307
      %v309 = vadd.f32 %v308, 1.0
      %v310 = vrcp.pop %v309
      %v311 = vmul.f32 1.0, %v310
      %v312 = vmul.f32 %v300, %v311
      %v313 = vmul.f32 %v312, %v302
      %v314 = vld [vmem:[%s3] sm:$0xf]
      %v315 = vld [vmem:[%s3 + $0x4] sm:$0xf]
      %v316 = vld [vmem:[%s3 + $0x8] sm:$0xf]
      %v317 = vld [vmem:[%s3 + $0xc] sm:$0xf]
      %v318 = vld [vmem:[%s3 + $0x10] sm:$0xf]
      %v319 = vld [vmem:[%s3 + $0x14] sm:$0xf]
      %v320 = vld [vmem:[%s3 + $0x18] sm:$0xf]
      %v321 = vld [vmem:[%s3 + $0x1c] sm:$0xf]
      %v322 = vld [vmem:[%s3 + $0x20] sm:$0xf]
      %v323 = vld [vmem:[%s3 + $0x24] sm:$0xf]
      %v324 = vld [vmem:[%s3 + $0x28] sm:$0xf]
      %v325 = vld [vmem:[%s3 + $0x2c] sm:$0xf]
      %v326 = vld [vmem:[%s3 + $0x30] sm:$0xf]
      %v327 = vld [vmem:[%s3 + $0x34] sm:$0xf]
      %v328 = vld [vmem:[%s3 + $0x38] sm:$0xf]
      %v329 = vld [vmem:[%s3 + $0x3c] sm:$0xf]
      %v330 = vpack.c.bf16 %v313, %v313
      %v347 = vunpack.c.l.b16 %v314
      %v348 = vunpack.c.l.b16 %v315
      %v349 = vunpack.c.l.b16 %v316
      %v350 = vunpack.c.l.b16 %v317
      %v351 = vunpack.c.l.b16 %v318
      %v352 = vunpack.c.l.b16 %v319
      %v353 = vunpack.c.l.b16 %v320
      %v354 = vunpack.c.l.b16 %v321
      %v355 = vunpack.c.l.b16 %v322
      %v356 = vunpack.c.l.b16 %v323
      %v357 = vunpack.c.l.b16 %v324
      %v358 = vunpack.c.l.b16 %v325
      %v359 = vunpack.c.l.b16 %v326
      %v360 = vunpack.c.l.b16 %v327
      %v361 = vunpack.c.l.b16 %v328
      %v362 = vunpack.c.l.b16 %v329
      %v363 = vpack.c.b16 %v348, %v347
      %v364 = vpack.c.b16 %v350, %v349
      %v365 = vpack.c.b16 %v352, %v351
      %v366 = vpack.c.b16 %v354, %v353
      %v367 = vpack.c.b16 %v356, %v355
      %v368 = vpack.c.b16 %v358, %v357
      %v369 = vpack.c.b16 %v360, %v359
      %v370 = vpack.c.b16 %v362, %v361
      %379 = vmatprep.subr.bf16.mxu0 0
      %380 = vmatpush1.bf16.msra.mxu0 %v363
      %381 = vmatprep.subr.bf16.mxu0 0
      %382 = vmatpush1.bf16.msra.mxu0 %v364
      %383 = vmatprep.subr.bf16.mxu0 0
      %384 = vmatpush1.bf16.msra.mxu0 %v365
      %385 = vmatprep.subr.bf16.mxu0 0
      %386 = vmatpush1.bf16.msra.mxu0 %v366
      %387 = vmatprep.subr.bf16.mxu0 0
      %388 = vmatpush1.bf16.msra.mxu0 %v367
      %389 = vmatprep.subr.bf16.mxu0 0
      %390 = vmatpush1.bf16.msra.mxu0 %v368
      %391 = vmatprep.subr.bf16.mxu0 0
      %392 = vmatpush1.bf16.msra.mxu0 %v369
      %393 = vmatprep.subr.bf16.mxu0 0
      %394 = vmatpush1.bf16.msra.mxu0 %v370
      %395 = vmatprep.subr.bf16.mxu0 0
      %396 = vmatpush1.bf16.msra.mxu0 0
      %397 = vmatprep.subr.bf16.mxu0 0
      %398 = vmatpush1.bf16.msra.mxu0 0
      %399 = vmatprep.subr.bf16.mxu0 0
      %400 = vmatpush1.bf16.msra.mxu0 0
      %401 = vmatprep.subr.bf16.mxu0 0
      %402 = vmatpush1.bf16.msra.mxu0 0
      %403 = vmatprep.subr.bf16.mxu0 0
      %404 = vmatpush1.bf16.msra.mxu0 0
      %405 = vmatprep.subr.bf16.mxu0 0
      %406 = vmatpush1.bf16.msra.mxu0 0
      %407 = vmatprep.subr.bf16.mxu0 0
      %408 = vmatpush1.bf16.msra.mxu0 0
      %409 = vmatprep.subr.bf16.mxu0 0
      %410 = vmatpush1.bf16.msra.mxu0 0
      %411 = vmatprep.mubr.bf16.mxu0 0
      %412 = vmatmul.mubr.bf16.gmra.mrb[0].mxu0 %v330
      %v413 = vpop.f32.mrb[0].mxu0
      %v414 = vadd.f32 0.0, %v413
      %v415 = vpop.f32.mrb[0].mxu0
      %v416 = vpop.f32.mrb[0].mxu0
      %v417 = vpop.f32.mrb[0].mxu0
      %418 = vdwg.mxu0
      %v419 = vadd.f32 %v195, %v414
      %v420 = vpack.c.bf16 %v419, %v419
      %vm421 = vcmask 519168
      %422 = vst.msk [vmem:[%s192] sm:$0xf] %vm421, %v420
      %p423 = scmp.lt.s32.totalorder %s15, 1
      %s424 = scalar_select %p423, %s15, 1
      %s425 = smul.addr %s424, 4
      %s426 = scalar_lea.vmem %s4, %s425
      // Predicated region
      $region37: #{encoder_forward.8} parent=35 // pred_check
        %p427 = pneg %p122
      $region38: #{encoder_forward.8} parent=35 // pred_check_branch
        %429 = sbr.rel (%p427) target = $region40
      $region39: #{encoder_forward.8} parent=35 // pred_region
        _
      $region40: #{encoder_forward.8} parent=35 // pred_fallthru
        _
    $region36: #{encoder_forward.8} parent=5 // pred_fallthru
      _
    %p430 = scmp.le.s32.totalorder 2, %s10
    // Predicated region
    $region41: #{encoder_forward.8} parent=5 // pred_check
      %p431 = pneg %p430
    $region42: #{encoder_forward.8} parent=5 // pred_check_branch
      %433 = sbr.rel (%p431) target = $region44
    $region43: #{encoder_forward.8} parent=5 // pred_region
      %s434 = ssub.s32 %s10, 2
      // Predicated region
      $region45: #{encoder_forward.8} parent=43 // pred_check
        %p435 = pneg %p128
      $region46: #{encoder_forward.8} parent=43 // pred_check_branch
        %437 = sbr.rel (%p435) target = $region48
      $region47: #{encoder_forward.8} parent=43 // pred_region
        %p438 = scmp.lt.s32.totalorder %s16, 1
        %s439 = scalar_select %p438, %s16, 1
        %s440 = smul.addr %s439, 4
        %s441 = scalar_lea.vmem %s4, %s440
      $region48: #{encoder_forward.8} parent=43 // pred_fallthru
        _
    $region44: #{encoder_forward.8} parent=5 // pred_fallthru
      _
  $region6: #{encoder_forward.8} parent=0 // loop_footer
    %s14 = sadd.s32 1, %s10
  $region7: #{encoder_forward.8} parent=0 // loop_footer_branch
    %9 = sbr.rel target = $region3
  $region8: #{encoder_forward.8} parent=0 // loop_exit
    _

// kernel: encoder_forward.6
$region0: #{encoder_forward.6}
  #allocation0 [shape = 'u32[]', space=smem, size = 0x4, offset = 0x4, fixed_abs, tag = 'smem constant byte address 0x4 - core index']
  #allocation1 [shape = 'u32[144,128]{1,0:T(1,128)}', space=vmem, size = 0x12000, scoped, tag = 'internal scratch']
  %s0 = inlined_call_operand.vmem [shape: bf16[2,8,64], index: 0, kind: input, shape index: {}, may-alias: {0,1}]
  %s1 = inlined_call_operand.vmem [shape: bf16[2,8,64], index: 1, kind: input, shape index: {}, may-alias: {0,1}]
  %s2 = inlined_call_operand.vmem [shape: bf16[1,64], index: 2, kind: input, shape index: {}]
  %s3 = inlined_call_operand.vmem [shape: bf16[64,192], index: 3, kind: input, shape index: {}]
  %s4 = inlined_call_operand.vmem [shape: bf16[64,64], index: 4, kind: input, shape index: {}]
  %s5 = inlined_call_operand.vmem [shape: f32[8,16], index: 5, kind: input, shape index: {}, may-alias: {5,7}]
  %s6 = inlined_call_operand.vmem [shape: f32[8,16], index: 6, kind: input, shape index: {}, may-alias: {6,8}]
  %s7 = inlined_call_operand.vmem [shape: f32[8,16], index: 7, kind: input, shape index: {}, may-alias: {5,7}]
  %s8 = inlined_call_operand.vmem [shape: f32[8,16], index: 8, kind: input, shape index: {}, may-alias: {6,8}]
  %s9 = inlined_call_operand.vmem [shape: bf16[2,8,64], index: 9, kind: output, shape index: {}]
  %s10 = sld [smem:[#allocation0]]
  $region69: #{encoder_forward.6} parent=0
    _
  %s12 = ssub.s32 1, %s10
  %s13 = scalar_select 0, %s12, %s10
  loop: start=0, step=1, limit=4
  $region2: #{encoder_forward.6} parent=0 // loop_pre_header
    _
  $region3: #{encoder_forward.6} parent=0 // loop_header
    %s15 = sphi 0, %s19
    %p16 = scmp.ge.s32.totalorder %s15, 4
    %s25 = sphi 0, %s27
    %s28 = sphi 0, %s25
    %s29 = sphi 0, %s28
    %s45 = sphi 0, %s29
    %s51 = sphi 0, %s53
    %s54 = sphi 0, %s51
    %s55 = sphi 0, %s54
    %s71 = sphi 0, %s55
    %s75 = sphi 0, %s75
    %s77 = sphi 0, %s75
    %s78 = sphi 0, %s77
    %s92 = sphi 0, %s78
    %s96 = sphi 0, %s96
    %s98 = sphi 0, %s96
    %s99 = sphi 0, %s98
    %s113 = sphi 0, %s99
    %s117 = sphi 0, %s117
    %s119 = sphi 0, %s117
    %s120 = sphi 0, %s119
    %s134 = sphi 0, %s120
    %s138 = sphi 0, %s138
    %s140 = sphi 0, %s138
    %s141 = sphi 0, %s140
    %s155 = sphi 0, %s141
    %s159 = sphi 0, %s159
    %s161 = sphi 0, %s159
    %s162 = sphi 0, %s161
    %s176 = sphi 0, %s162
    %s180 = sphi 0, %s180
    %s182 = sphi 0, %s180
    %s183 = sphi 0, %s182
    %s197 = sphi 0, %s183
    %s201 = sphi 0, %s201
    %s203 = sphi 0, %s201
    %s204 = sphi 0, %s203
    %s218 = sphi 0, %s204
    %s224 = sphi 0, %s226
    %s227 = sphi 0, %s224
    %s228 = sphi 0, %s227
    %s244 = sphi 0, %s228
  $region4: #{encoder_forward.6} parent=0 // loop_header_branch
    %18 = sbr.rel (%p16) target = $region8
  $region5: #{encoder_forward.6} parent=0 // loop_body
    %s20 = ssub.s32 %s15, 1
    %s21 = ssub.s32 %s15, 2
    %s22 = sadd.s32 %s15, 1
    %s23 = ssub.s32 %s15, %s22
    %p24 = scmp.eq.s32.totalorder %s23, 0
    %s26 = sadd.s32 %s25, 1
    %s27 = scalar_select %p24, %s25, %s26
    %p30 = pneg %p24
    %p31 = scmp.eq.s32.totalorder %s15, 1
    %p32 = por %p30, %p31
    %p33 = scmp.ne.s32.totalorder %s25, %s28
    %p34 = scmp.eq.s32.totalorder %s15, 0
    %p35 = por %p33, %p34
    %p36 = scmp.ne.s32.totalorder %s25, %s28
    %p37 = scmp.eq.s32.totalorder %s20, 1
    %p38 = por %p36, %p37
    %p39 = scmp.ne.s32.totalorder %s28, %s29
    %p40 = scmp.eq.s32.totalorder %s20, 0
    %p41 = por %p39, %p40
    %p42 = scmp.ne.s32.totalorder %s28, %s29
    %p43 = scmp.eq.s32.totalorder %s21, 1
    %p44 = por %p42, %p43
    %p46 = scmp.ne.s32.totalorder %s29, %s45
    %p47 = scmp.eq.s32.totalorder %s21, 0
    %p48 = por %p46, %p47
    %s49 = ssub.s32 %s15, %s22
    %p50 = scmp.eq.s32.totalorder %s49, 0
    %s52 = sadd.s32 %s51, 1
    %s53 = scalar_select %p50, %s51, %s52
    %p56 = pneg %p50
    %p57 = scmp.eq.s32.totalorder %s15, 1
    %p58 = por %p56, %p57
    %p59 = scmp.ne.s32.totalorder %s51, %s54
    %p60 = scmp.eq.s32.totalorder %s15, 0
    %p61 = por %p59, %p60
    %p62 = scmp.ne.s32.totalorder %s51, %s54
    %p63 = scmp.eq.s32.totalorder %s20, 1
    %p64 = por %p62, %p63
    %p65 = scmp.ne.s32.totalorder %s54, %s55
    %p66 = scmp.eq.s32.totalorder %s20, 0
    %p67 = por %p65, %p66
    %p68 = scmp.ne.s32.totalorder %s54, %s55
    %p69 = scmp.eq.s32.totalorder %s21, 1
    %p70 = por %p68, %p69
    %p72 = scmp.ne.s32.totalorder %s55, %s71
    %p73 = scmp.eq.s32.totalorder %s21, 0
    %p74 = por %p72, %p73
    %s76 = sadd.s32 %s75, 1
    %p79 = scmp.eq.s32.totalorder %s15, 1
    %p80 = scmp.ne.s32.totalorder %s75, %s77
    %p81 = scmp.eq.s32.totalorder %s15, 0
    %p82 = por %p80, %p81
    %p83 = scmp.ne.s32.totalorder %s75, %s77
    %p84 = scmp.eq.s32.totalorder %s20, 1
    %p85 = por %p83, %p84
    %p86 = scmp.ne.s32.totalorder %s77, %s78
    %p87 = scmp.eq.s32.totalorder %s20, 0
    %p88 = por %p86, %p87
    %p89 = scmp.ne.s32.totalorder %s77, %s78
    %p90 = scmp.eq.s32.totalorder %s21, 1
    %p91 = por %p89, %p90
    %p93 = scmp.ne.s32.totalorder %s78, %s92
    %p94 = scmp.eq.s32.totalorder %s21, 0
    %p95 = por %p93, %p94
    %s97 = sadd.s32 %s96, 1
    %p100 = scmp.eq.s32.totalorder %s15, 1
    %p101 = scmp.ne.s32.totalorder %s96, %s98
    %p102 = scmp.eq.s32.totalorder %s15, 0
    %p103 = por %p101, %p102
    %p104 = scmp.ne.s32.totalorder %s96, %s98
    %p105 = scmp.eq.s32.totalorder %s20, 1
    %p106 = por %p104, %p105
    %p107 = scmp.ne.s32.totalorder %s98, %s99
    %p108 = scmp.eq.s32.totalorder %s20, 0
    %p109 = por %p107, %p108
    %p110 = scmp.ne.s32.totalorder %s98, %s99
    %p111 = scmp.eq.s32.totalorder %s21, 1
    %p112 = por %p110, %p111
    %p114 = scmp.ne.s32.totalorder %s99, %s113
    %p115 = scmp.eq.s32.totalorder %s21, 0
    %p116 = por %p114, %p115
    %s118 = sadd.s32 %s117, 1
    %p121 = scmp.eq.s32.totalorder %s15, 1
    %p122 = scmp.ne.s32.totalorder %s117, %s119
    %p123 = scmp.eq.s32.totalorder %s15, 0
    %p124 = por %p122, %p123
    %p125 = scmp.ne.s32.totalorder %s117, %s119
    %p126 = scmp.eq.s32.totalorder %s20, 1
    %p127 = por %p125, %p126
    %p128 = scmp.ne.s32.totalorder %s119, %s120
    %p129 = scmp.eq.s32.totalorder %s20, 0
    %p130 = por %p128, %p129
    %p131 = scmp.ne.s32.totalorder %s119, %s120
    %p132 = scmp.eq.s32.totalorder %s21, 1
    %p133 = por %p131, %p132
    %p135 = scmp.ne.s32.totalorder %s120, %s134
    %p136 = scmp.eq.s32.totalorder %s21, 0
    %p137 = por %p135, %p136
    %s139 = sadd.s32 %s138, 1
    %p142 = scmp.eq.s32.totalorder %s15, 1
    %p143 = scmp.ne.s32.totalorder %s138, %s140
    %p144 = scmp.eq.s32.totalorder %s15, 0
    %p145 = por %p143, %p144
    %p146 = scmp.ne.s32.totalorder %s138, %s140
    %p147 = scmp.eq.s32.totalorder %s20, 1
    %p148 = por %p146, %p147
    %p149 = scmp.ne.s32.totalorder %s140, %s141
    %p150 = scmp.eq.s32.totalorder %s20, 0
    %p151 = por %p149, %p150
    %p152 = scmp.ne.s32.totalorder %s140, %s141
    %p153 = scmp.eq.s32.totalorder %s21, 1
    %p154 = por %p152, %p153
    %p156 = scmp.ne.s32.totalorder %s141, %s155
    %p157 = scmp.eq.s32.totalorder %s21, 0
    %p158 = por %p156, %p157
    %s160 = sadd.s32 %s159, 1
    %p163 = scmp.eq.s32.totalorder %s15, 1
    %p164 = scmp.ne.s32.totalorder %s159, %s161
    %p165 = scmp.eq.s32.totalorder %s15, 0
    %p166 = por %p164, %p165
    %p167 = scmp.ne.s32.totalorder %s159, %s161
    %p168 = scmp.eq.s32.totalorder %s20, 1
    %p169 = por %p167, %p168
    %p170 = scmp.ne.s32.totalorder %s161, %s162
    %p171 = scmp.eq.s32.totalorder %s20, 0
    %p172 = por %p170, %p171
    %p173 = scmp.ne.s32.totalorder %s161, %s162
    %p174 = scmp.eq.s32.totalorder %s21, 1
    %p175 = por %p173, %p174
    %p177 = scmp.ne.s32.totalorder %s162, %s176
    %p178 = scmp.eq.s32.totalorder %s21, 0
    %p179 = por %p177, %p178
    %s181 = sadd.s32 %s180, 1
    %p184 = scmp.eq.s32.totalorder %s15, 1
    %p185 = scmp.ne.s32.totalorder %s180, %s182
    %p186 = scmp.eq.s32.totalorder %s15, 0
    %p187 = por %p185, %p186
    %p188 = scmp.ne.s32.totalorder %s180, %s182
    %p189 = scmp.eq.s32.totalorder %s20, 1
    %p190 = por %p188, %p189
    %p191 = scmp.ne.s32.totalorder %s182, %s183
    %p192 = scmp.eq.s32.totalorder %s20, 0
    %p193 = por %p191, %p192
    %p194 = scmp.ne.s32.totalorder %s182, %s183
    %p195 = scmp.eq.s32.totalorder %s21, 1
    %p196 = por %p194, %p195
    %p198 = scmp.ne.s32.totalorder %s183, %s197
    %p199 = scmp.eq.s32.totalorder %s21, 0
    %p200 = por %p198, %p199
    %s202 = sadd.s32 %s201, 1
    %p205 = scmp.eq.s32.totalorder %s15, 1
    %p206 = scmp.ne.s32.totalorder %s201, %s203
    %p207 = scmp.eq.s32.totalorder %s15, 0
    %p208 = por %p206, %p207
    %p209 = scmp.ne.s32.totalorder %s201, %s203
    %p210 = scmp.eq.s32.totalorder %s20, 1
    %p211 = por %p209, %p210
    %p212 = scmp.ne.s32.totalorder %s203, %s204
    %p213 = scmp.eq.s32.totalorder %s20, 0
    %p214 = por %p212, %p213
    %p215 = scmp.ne.s32.totalorder %s203, %s204
    %p216 = scmp.eq.s32.totalorder %s21, 1
    %p217 = por %p215, %p216
    %p219 = scmp.ne.s32.totalorder %s204, %s218
    %p220 = scmp.eq.s32.totalorder %s21, 0
    %p221 = por %p219, %p220
    %s222 = ssub.s32 %s15, %s22
    %p223 = scmp.eq.s32.totalorder %s222, 0
    %s225 = sadd.s32 %s224, 1
    %s226 = scalar_select %p223, %s224, %s225
    %p229 = pneg %p223
    %p230 = scmp.eq.s32.totalorder %s15, 1
    %p231 = por %p229, %p230
    %p232 = scmp.ne.s32.totalorder %s224, %s227
    %p233 = scmp.eq.s32.totalorder %s15, 0
    %p234 = por %p232, %p233
    %p235 = scmp.ne.s32.totalorder %s224, %s227
    %p236 = scmp.eq.s32.totalorder %s20, 1
    %p237 = por %p235, %p236
    %p238 = scmp.ne.s32.totalorder %s227, %s228
    %p239 = scmp.eq.s32.totalorder %s20, 0
    %p240 = por %p238, %p239
    %p241 = scmp.ne.s32.totalorder %s227, %s228
    %p242 = scmp.eq.s32.totalorder %s21, 1
    %p243 = por %p241, %p242
    %p245 = scmp.ne.s32.totalorder %s228, %s244
    %p246 = scmp.eq.s32.totalorder %s21, 0
    %p247 = por %p245, %p246
    %p248 = scmp.le.s32.totalorder 1, %s15
    %p249 = scmp.lt.s32.totalorder %s15, 3
    %p250 = pnand %p248, %p249
    %p251 = pneg %p250
    // Predicated region
    $region9: #{encoder_forward.6} parent=5 // pred_check
      _
    $region10: #{encoder_forward.6} parent=5 // pred_check_branch
      %253 = sbr.rel (%p250) target = $region12
    $region11: #{encoder_forward.6} parent=5 // pred_region
      %s254 = ssub.s32 %s15, 1
      // Predicated region
      $region13: #{encoder_forward.6} parent=11 // pred_check
        %p255 = pneg %p88
      $region14: #{encoder_forward.6} parent=11 // pred_check_branch
        %257 = sbr.rel (%p255) target = $region16
      $region15: #{encoder_forward.6} parent=11 // pred_region
        _
      $region16: #{encoder_forward.6} parent=11 // pred_fallthru
        _
      // Predicated region
      $region17: #{encoder_forward.6} parent=11 // pred_check
        %p258 = pneg %p109
      $region18: #{encoder_forward.6} parent=11 // pred_check_branch
        %260 = sbr.rel (%p258) target = $region20
      $region19: #{encoder_forward.6} parent=11 // pred_region
        _
      $region20: #{encoder_forward.6} parent=11 // pred_fallthru
        _
      // Predicated region
      $region21: #{encoder_forward.6} parent=11 // pred_check
        %p261 = pneg %p130
      $region22: #{encoder_forward.6} parent=11 // pred_check_branch
        %263 = sbr.rel (%p261) target = $region24
      $region23: #{encoder_forward.6} parent=11 // pred_region
        _
      $region24: #{encoder_forward.6} parent=11 // pred_fallthru
        _
      // Predicated region
      $region25: #{encoder_forward.6} parent=11 // pred_check
        %p264 = pneg %p151
      $region26: #{encoder_forward.6} parent=11 // pred_check_branch
        %266 = sbr.rel (%p264) target = $region28
      $region27: #{encoder_forward.6} parent=11 // pred_region
        _
      $region28: #{encoder_forward.6} parent=11 // pred_fallthru
        _
      // Predicated region
      $region29: #{encoder_forward.6} parent=11 // pred_check
        %p267 = pneg %p172
      $region30: #{encoder_forward.6} parent=11 // pred_check_branch
        %269 = sbr.rel (%p267) target = $region32
      $region31: #{encoder_forward.6} parent=11 // pred_region
        _
      $region32: #{encoder_forward.6} parent=11 // pred_fallthru
        _
      // Predicated region
      $region33: #{encoder_forward.6} parent=11 // pred_check
        %p270 = pneg %p193
      $region34: #{encoder_forward.6} parent=11 // pred_check_branch
        %272 = sbr.rel (%p270) target = $region36
      $region35: #{encoder_forward.6} parent=11 // pred_region
        _
      $region36: #{encoder_forward.6} parent=11 // pred_fallthru
        _
      // Predicated region
      $region37: #{encoder_forward.6} parent=11 // pred_check
        %p273 = pneg %p214
      $region38: #{encoder_forward.6} parent=11 // pred_check_branch
        %275 = sbr.rel (%p273) target = $region40
      $region39: #{encoder_forward.6} parent=11 // pred_region
        _
      $region40: #{encoder_forward.6} parent=11 // pred_fallthru
        _
    $region12: #{encoder_forward.6} parent=5 // pred_fallthru
      _
    %p276 = scmp.lt.s32.totalorder %s15, 2
    // Predicated region
    $region41: #{encoder_forward.6} parent=5 // pred_check
      %p277 = pneg %p276
    $region42: #{encoder_forward.6} parent=5 // pred_check_branch
      %279 = sbr.rel (%p277) target = $region44
    $region43: #{encoder_forward.6} parent=5 // pred_region
      // Predicated region
      $region45: #{encoder_forward.6} parent=43 // pred_check
        %p280 = pneg %p35
      $region46: #{encoder_forward.6} parent=43 // pred_check_branch
        %282 = sbr.rel (%p280) target = $region48
      $region47: #{encoder_forward.6} parent=43 // pred_region
        %p283 = scmp.lt.s32.totalorder %s15, 1
        %s284 = scalar_select %p283, %s15, 1
        %s285 = smul.addr %s284, 4
        %s286 = scalar_lea.vmem %s0, %s285
      $region48: #{encoder_forward.6} parent=43 // pred_fallthru
        _
      // Predicated region
      $region49: #{encoder_forward.6} parent=43 // pred_check
        %p287 = pneg %p61
      $region50: #{encoder_forward.6} parent=43 // pred_check_branch
        %289 = sbr.rel (%p287) target = $region52
      $region51: #{encoder_forward.6} parent=43 // pred_region
        %p290 = scmp.lt.s32.totalorder %s15, 1
        %s291 = scalar_select %p290, %s15, 1
        %s292 = smul.addr %s291, 4
        %s293 = scalar_lea.vmem %s1, %s292
      $region52: #{encoder_forward.6} parent=43 // pred_fallthru
        _
    $region44: #{encoder_forward.6} parent=5 // pred_fallthru
      _
    %p294 = scmp.le.s32.totalorder 1, %s15
    %p295 = scmp.lt.s32.totalorder %s15, 3
    %p296 = pnand %p294, %p295
    %p297 = pneg %p296
    // Predicated region
    $region53: #{encoder_forward.6} parent=5 // pred_check
      _
    $region54: #{encoder_forward.6} parent=5 // pred_check_branch
      %299 = sbr.rel (%p296) target = $region56
    $region55: #{encoder_forward.6} parent=5 // pred_region
      %s300 = ssub.s32 %s15, 1
      %p301 = scmp.lt.s32.totalorder %s20, 1
      %s302 = scalar_select %p301, %s20, 1
      %s303 = smul.addr %s302, 4
      %s304 = scalar_lea.vmem %s0, %s303
      %p305 = pneg %p41
      %p306 = pneg %p38
      %p307 = scmp.lt.s32.totalorder %s20, 1
      %s308 = scalar_select %p307, %s20, 1
      %s309 = smul.addr %s308, 4
      %s310 = scalar_lea.vmem %s1, %s309
      %p311 = pneg %p67
      %p312 = pneg %p64
      %p313 = pneg %p88
      %p314 = pneg %p85
      %p315 = pneg %p109
      %p316 = pneg %p106
      %p317 = pneg %p130
      %p318 = pneg %p127
      %p319 = pneg %p151
      %p320 = pneg %p148
      %p321 = pneg %p172
      %p322 = pneg %p169
      %p323 = pneg %p193
      %p324 = pneg %p190
      %p325 = pneg %p214
      %p326 = pneg %p211
      %p327 = pneg %p240
      %p328 = pneg %p237
      %p329 = scmp.lt.s32.totalorder %s20, 1
      %s330 = scalar_select %p329, %s20, 1
      %s331 = smul.addr %s330, 4
      %s332 = scalar_lea.vmem %s9, %s331
      %p333 = scmp.lt.s32.totalorder %s20, 1
      %s334 = scalar_select %p333, %s20, 1
      %s335 = smul.addr %s334, 4
      %s336 = scalar_lea.vmem %s0, %s335
      %p337 = scmp.lt.s32.totalorder %s20, 1
      %s338 = scalar_select %p337, %s20, 1
      %s339 = smul.addr %s338, 4
      %s340 = scalar_lea.vmem %s1, %s339
      %p341 = scmp.lt.s32.totalorder %s20, 1
      %s342 = scalar_select %p341, %s20, 1
      %s343 = smul.addr %s342, 4
      %s344 = scalar_lea.vmem %s9, %s343
      %v346 = vld [vmem:[%s336] sm:$0xf]
      %v347 = vunpack.c.l.bf16 %v346
      %v348 = vld [vmem:[%s2] sm:$0x1]
      %v349 = vunpack.c.l.bf16 %v348
      %v350 = vmul.f32 %v347, %v347
      %vm351 = vcmask 523264
      %v352 = vsel %vm351, %v350, 0.0
      %353 = vadd.xlane.f32.xlu0 %v352
      %v354 = vpop.xlane.xlu0 %353
      %v355 = vrcp.pop 64.0
      %v356 = vmul.f32 %v354, %v355
      %v357 = vadd.f32 %v356, 1e-06
      %v358 = vrsqrt.pop %v357
      %v359 = vmul.f32 %v347, %v358
      %v360 = vlaneseq
      %v361 = vshrl.u32 %v360, 7
      %v362 = vsub.s32 0, %v361
      %v363 = vrot.slane %v349, %v362
      %v364 = vmul.f32 %v359, %v363
      %v365 = vld [vmem:[%s3] sm:$0xff]
      %v366 = vld [vmem:[%s3 + $0x8] sm:$0xff]
      %v367 = vld [vmem:[%s3 + $0x10] sm:$0xff]
      %v368 = vld [vmem:[%s3 + $0x18] sm:$0xff]
      %v369 = vld [vmem:[%s3 + $0x20] sm:$0xff]
      %v370 = vld [vmem:[%s3 + $0x28] sm:$0xff]
      %v371 = vld [vmem:[%s3 + $0x30] sm:$0xff]
      %v372 = vld [vmem:[%s3 + $0x38] sm:$0xff]
      %v373 = vpack.c.bf16 %v364, %v364
      %v382 = vunpack.c.l.b16 %v365
      %v383 = vunpack.c.h.b16 %v365
      %v384 = vunpack.c.l.b16 %v366
      %v385 = vunpack.c.h.b16 %v366
      %v386 = vunpack.c.l.b16 %v367
      %v387 = vunpack.c.h.b16 %v367
      %v388 = vunpack.c.l.b16 %v368
      %v389 = vunpack.c.h.b16 %v368
      %v390 = vunpack.c.l.b16 %v369
      %v391 = vunpack.c.h.b16 %v369
      %v392 = vunpack.c.l.b16 %v370
      %v393 = vunpack.c.h.b16 %v370
      %v394 = vunpack.c.l.b16 %v371
      %v395 = vunpack.c.h.b16 %v371
      %v396 = vunpack.c.l.b16 %v372
      %v397 = vunpack.c.h.b16 %v372
      %v398 = vpack.c.b16 %v384, %v382
      %v399 = vpack.c.b16 %v385, %v383
      %v400 = vpack.c.b16 %v388, %v386
      %v401 = vpack.c.b16 %v389, %v387
      %v402 = vpack.c.b16 %v392, %v390
      %v403 = vpack.c.b16 %v393, %v391
      %v404 = vpack.c.b16 %v396, %v394
      %v405 = vpack.c.b16 %v397, %v395
      %v415 = vsel %vm351, %v373, 0
      %417 = vmatprep.subr.bf16.mxu0 %v399
      %418 = vmatpush1.bf16.msra.mxu0 %v398
      %419 = vmatprep.subr.bf16.mxu0 %v401
      %420 = vmatpush1.bf16.msra.mxu0 %v400
      %421 = vmatprep.subr.bf16.mxu0 %v403
      %422 = vmatpush1.bf16.msra.mxu0 %v402
      %423 = vmatprep.subr.bf16.mxu0 %v405
      %424 = vmatpush1.bf16.msra.mxu0 %v404
      %425 = vmatprep.subr.bf16.mxu0 0
      %426 = vmatpush1.bf16.msra.mxu0 0
      %427 = vmatprep.subr.bf16.mxu0 0
      %428 = vmatpush1.bf16.msra.mxu0 0
      %429 = vmatprep.subr.bf16.mxu0 0
      %430 = vmatpush1.bf16.msra.mxu0 0
      %431 = vmatprep.subr.bf16.mxu0 0
      %432 = vmatpush1.bf16.msra.mxu0 0
      %433 = vmatprep.subr.bf16.mxu0 0
      %434 = vmatpush1.bf16.msra.mxu0 0
      %435 = vmatprep.subr.bf16.mxu0 0
      %436 = vmatpush1.bf16.msra.mxu0 0
      %437 = vmatprep.subr.bf16.mxu0 0
      %438 = vmatpush1.bf16.msra.mxu0 0
      %439 = vmatprep.subr.bf16.mxu0 0
      %440 = vmatpush1.bf16.msra.mxu0 0
      %441 = vmatprep.subr.bf16.mxu0 0
      %442 = vmatpush1.bf16.msra.mxu0 0
      %443 = vmatprep.subr.bf16.mxu0 0
      %444 = vmatpush1.bf16.msra.mxu0 0
      %445 = vmatprep.subr.bf16.mxu0 0
      %446 = vmatpush1.bf16.msra.mxu0 0
      %447 = vmatprep.subr.bf16.mxu0 0
      %448 = vmatpush1.bf16.msra.mxu0 0
      %449 = vmatprep.mubr.bf16.mxu0 0
      %450 = vmatmul.mubr.bf16.gmra.mrb[0].mxu0 %v415
      %v451 = vpop.f32.mrb[0].mxu0
      %v452 = vadd.f32 0.0, %v451
      %v453 = vpop.f32.mrb[0].mxu0
      %v454 = vadd.f32 0.0, %v453
      %v455 = vpop.f32.mrb[0].mxu0
      %v456 = vpop.f32.mrb[0].mxu0
      %457 = vdwg.mxu0
      %v458 = vld [vmem:[%s5] sm:$0xff]
      %v459 = vld [vmem:[%s6] sm:$0xff]
      %v460 = vld [vmem:[%s7] sm:$0xff]
      %v461 = vld [vmem:[%s8] sm:$0xff]
      %v462 = vlaneseq
      %v463 = vshrl.u32 %v462, 7
      %v464 = vlaneseq
      %v465 = vand.u32 %v464, 127
      %vm466 = vcmp.le.s32.totalorder %v465, %v463
      %v467 = vld [vmem:[%s4] sm:$0xf]
      %v468 = vld [vmem:[%s4 + $0x4] sm:$0xf]
      %v469 = vld [vmem:[%s4 + $0x8] sm:$0xf]
      %v470 = vld [vmem:[%s4 + $0xc] sm:$0xf]
      %v471 = vld [vmem:[%s4 + $0x10] sm:$0xf]
      %v472 = vld [vmem:[%s4 + $0x14] sm:$0xf]
      %v473 = vld [vmem:[%s4 + $0x18] sm:$0xf]
      %v474 = vld [vmem:[%s4 + $0x1c] sm:$0xf]
      %v475 = vsub.f32 0.0, %v452
      %477 = vrot.lane.b32.xlu0 %v475, 120
      %v478 = vpop.permute.xlu0 %477
      %481 = vrot.lane.b32.xlu0 %v452, 8
      %v482 = vpop.permute.xlu0 %481
      %vm484 = vcmask 64512
      %v485 = vsel %vm484, %v478, %v482
      %v486 = vmul.f32 %v452, %v458
      %v487 = vmul.f32 %v485, %v459
      %v488 = vadd.f32 %v486, %v487
      %489 = vrot.lane.b32.xlu0 %v475, 56
      %v490 = vpop.permute.xlu0 %489
      %492 = vrot.lane.b32.xlu0 %v452, 72
      %v493 = vpop.permute.xlu0 %492
      %v495 = vsel %vm484, %v490, %v493
      %497 = vrot.lane.b32.xlu0 %v460, 64
      %v498 = vpop.permute.xlu0 %497
      %v500 = vmul.f32 %v452, %v498
      %v501 = vmul.f32 %v495, %v461
      %503 = vrot.lane.b32.xlu0 %v501, 64
      %v504 = vpop.permute.xlu0 %503
      %v506 = vadd.f32 %v500, %v504
      %508 = vrot.lane.b32.xlu0 %v506, 64
      %v509 = vpop.permute.xlu0 %508
      %vm510 = vcmask 130048
      %v512 = vsel %vm510, %v488, 0
      %v514 = vsel %vm510, %v509, 0
      %516 = vmatprep.subr.mxu0 0.0
      %517 = vmatpush1.xpose.msra.mxu0 %v514
      %518 = vmatprep.subr.mxu0 0.0
      %519 = vmatpush1.xpose.msra.mxu0 0.0
      %520 = vmatprep.subr.mxu0 0.0
      %521 = vmatpush1.xpose.msra.mxu0 0.0
      %522 = vmatprep.subr.mxu0 0.0
      %523 = vmatpush1.xpose.msra.mxu0 0.0
      %524 = vmatprep.subr.mxu0 0.0
      %525 = vmatpush1.xpose.msra.mxu0 0.0
      %526 = vmatprep.subr.mxu0 0.0
      %527 = vmatpush1.xpose.msra.mxu0 0.0
      %528 = vmatprep.subr.mxu0 0.0
      %529 = vmatpush1.xpose.msra.mxu0 0.0
      %530 = vmatprep.subr.mxu0 0.0
      %531 = vmatpush1.xpose.msra.mxu0 0.0
      %532 = vmatprep.subr.mxu0 0.0
      %533 = vmatpush1.xpose.msra.mxu0 0.0
      %534 = vmatprep.subr.mxu0 0.0
      %535 = vmatpush1.xpose.msra.mxu0 0.0
      %536 = vmatprep.subr.mxu0 0.0
      %537 = vmatpush1.xpose.msra.mxu0 0.0
      %538 = vmatprep.subr.mxu0 0.0
      %539 = vmatpush1.xpose.msra.mxu0 0.0
      %540 = vmatprep.subr.mxu0 0.0
      %541 = vmatpush1.xpose.msra.mxu0 0.0
      %542 = vmatprep.subr.mxu0 0.0
      %543 = vmatpush1.xpose.msra.mxu0 0.0
      %544 = vmatprep.subr.mxu0 0.0
      %545 = vmatpush1.xpose.msra.mxu0 0.0
      %546 = vmatprep.subr.mxu0 0.0
      %547 = vmatpush1.xpose.msra.mxu0 0.0
      %548 = vmatprep.subr.mxu0 0.0
      %549 = vmatpush1.xpose.msra.mxu0 0.0
      %550 = vmatprep.subr.mxu0 0.0
      %551 = vmatpush1.xpose.msra.mxu0 0.0
      %552 = vmatprep.subr.mxu0 0.0
      %553 = vmatpush1.xpose.msra.mxu0 0.0
      %554 = vmatprep.subr.mxu0 0.0
      %555 = vmatpush1.xpose.msra.mxu0 0.0
      %556 = vmatprep.subr.mxu0 0.0
      %557 = vmatpush1.xpose.msra.mxu0 0.0
      %558 = vmatprep.subr.mxu0 0.0
      %559 = vmatpush1.xpose.msra.mxu0 0.0
      %560 = vmatprep.subr.mxu0 0.0
      %561 = vmatpush1.xpose.msra.mxu0 0.0
      %562 = vmatprep.subr.mxu0 0.0
      %563 = vmatpush1.xpose.msra.mxu0 0.0
      %564 = vmatprep.subr.mxu0 0.0
      %565 = vmatpush1.xpose.msra.mxu0 0.0
      %566 = vmatprep.subr.mxu0 0.0
      %567 = vmatpush1.xpose.msra.mxu0 0.0
      %568 = vmatprep.subr.mxu0 0.0
      %569 = vmatpush1.xpose.msra.mxu0 0.0
      %570 = vmatprep.subr.mxu0 0.0
      %571 = vmatpush1.xpose.msra.mxu0 0.0
      %572 = vmatprep.subr.mxu0 0.0
      %573 = vmatpush1.xpose.msra.mxu0 0.0
      %574 = vmatprep.subr.mxu0 0.0
      %575 = vmatpush1.xpose.msra.mxu0 0.0
      %576 = vmatprep.subr.mxu0 0.0
      %577 = vmatpush1.xpose.msra.mxu0 0.0
      %578 = vmatprep.subr.mxu0 0.0
      %579 = vmatpush1.xpose.msra.mxu0 0.0
      %580 = vmatprep.mubr.f32.mxu0 0.0
      %581 = vmatmul.mubr.f32.gmra.mrb[0].mxu0 %v512
      %v582 = vpop.f32.mrb[0].mxu0
      %v583 = vadd.f32 0.0, %v582
      %v584 = vpop.f32.mrb[0].mxu0
      %585 = vdwg.mxu0
      %v586 = vmul.f32 %v583, 0.25
      %v587 = vsel %vm466, %v586, -1e+30
      %v588 = vsel %vm484, %v587, -inf
      %589 = vmax.xlane.f32.xlu0 %v588
      %v590 = vpop.xlane.xlu0 %589
      %v591 = vsub.f32 %v587, %v590
      %v592 = vmul.f32 %v591, 1.442695
      %v593 = vpow.pop %v592
      %v594 = vsel %vm484, %v593, 0.0
      %595 = vadd.xlane.f32.xlu0 %v594
      %v596 = vpop.xlane.xlu0 %595
      %v598 = vsel %vm484, %v593, 0
      %600 = vmatprep.subr.mxu0 0.0
      %601 = vmatpush1.msra.mxu0 %v454
      %602 = vmatprep.subr.mxu0 0.0
      %603 = vmatpush1.msra.mxu0 0.0
      %604 = vmatprep.subr.mxu0 0.0
      %605 = vmatpush1.msra.mxu0 0.0
      %606 = vmatprep.subr.mxu0 0.0
      %607 = vmatpush1.msra.mxu0 0.0
      %608 = vmatprep.subr.mxu0 0.0
      %609 = vmatpush1.msra.mxu0 0.0
      %610 = vmatprep.subr.mxu0 0.0
      %611 = vmatpush1.msra.mxu0 0.0
      %612 = vmatprep.subr.mxu0 0.0
      %613 = vmatpush1.msra.mxu0 0.0
      %614 = vmatprep.subr.mxu0 0.0
      %615 = vmatpush1.msra.mxu0 0.0
      %616 = vmatprep.subr.mxu0 0.0
      %617 = vmatpush1.msra.mxu0 0.0
      %618 = vmatprep.subr.mxu0 0.0
      %619 = vmatpush1.msra.mxu0 0.0
      %620 = vmatprep.subr.mxu0 0.0
      %621 = vmatpush1.msra.mxu0 0.0
      %622 = vmatprep.subr.mxu0 0.0
      %623 = vmatpush1.msra.mxu0 0.0
      %624 = vmatprep.subr.mxu0 0.0
      %625 = vmatpush1.msra.mxu0 0.0
      %626 = vmatprep.subr.mxu0 0.0
      %627 = vmatpush1.msra.mxu0 0.0
      %628 = vmatprep.subr.mxu0 0.0
      %629 = vmatpush1.msra.mxu0 0.0
      %630 = vmatprep.subr.mxu0 0.0
      %631 = vmatpush1.msra.mxu0 0.0
      %632 = vmatprep.subr.mxu0 0.0
      %633 = vmatpush1.msra.mxu0 0.0
      %634 = vmatprep.subr.mxu0 0.0
      %635 = vmatpush1.msra.mxu0 0.0
      %636 = vmatprep.subr.mxu0 0.0
      %637 = vmatpush1.msra.mxu0 0.0
      %638 = vmatprep.subr.mxu0 0.0
      %639 = vmatpush1.msra.mxu0 0.0
      %640 = vmatprep.subr.mxu0 0.0
      %641 = vmatpush1.msra.mxu0 0.0
      %642 = vmatprep.subr.mxu0 0.0
      %643 = vmatpush1.msra.mxu0 0.0
      %644 = vmatprep.subr.mxu0 0.0
      %645 = vmatpush1.msra.mxu0 0.0
      %646 = vmatprep.subr.mxu0 0.0
      %647 = vmatpush1.msra.mxu0 0.0
      %648 = vmatprep.subr.mxu0 0.0
      %649 = vmatpush1.msra.mxu0 0.0
      %650 = vmatprep.subr.mxu0 0.0
      %651 = vmatpush1.msra.mxu0 0.0
      %652 = vmatprep.subr.mxu0 0.0
      %653 = vmatpush1.msra.mxu0 0.0
      %654 = vmatprep.subr.mxu0 0.0
      %655 = vmatpush1.msra.mxu0 0.0
      %656 = vmatprep.subr.mxu0 0.0
      %657 = vmatpush1.msra.mxu0 0.0
      %658 = vmatprep.subr.mxu0 0.0
      %659 = vmatpush1.msra.mxu0 0.0
      %660 = vmatprep.subr.mxu0 0.0
      %661 = vmatpush1.msra.mxu0 0.0
      %662 = vmatprep.subr.mxu0 0.0
      %663 = vmatpush1.msra.mxu0 0.0
      %664 = vmatprep.mubr.f32.mxu0 0.0
      %665 = vmatmul.mubr.f32.gmra.mrb[0].mxu0 %v598
      %v666 = vpop.f32.mrb[0].mxu0
      %v667 = vadd.f32 0.0, %v666
      %v668 = vpop.f32.mrb[0].mxu0
      %669 = vdwg.mxu0
      %v670 = vrcp.pop %v596
      %v671 = vmul.f32 %v667, %v670
      %v672 = vpack.c.bf16 %v671, %v671
      %v675 = vunpack.c.l.b16 %v467
      %v676 = vunpack.c.l.b16 %v468
      %v677 = vpack.c.b16 %v676, %v675
      %v680 = vsel %vm510, %v672, 0
      %682 = vmatprep.subr.bf16.mxu0 0
      %683 = vmatpush1.bf16.msra.mxu0 %v677
      %684 = vmatprep.subr.bf16.mxu0 0
      %685 = vmatpush1.bf16.msra.mxu0 0
      %686 = vmatprep.subr.bf16.mxu0 0
      %687 = vmatpush1.bf16.msra.mxu0 0
      %688 = vmatprep.subr.bf16.mxu0 0
      %689 = vmatpush1.bf16.msra.mxu0 0
      %690 = vmatprep.subr.bf16.mxu0 0
      %691 = vmatpush1.bf16.msra.mxu0 0
      %692 = vmatprep.subr.bf16.mxu0 0
      %693 = vmatpush1.bf16.msra.mxu0 0
      %694 = vmatprep.subr.bf16.mxu0 0
      %695 = vmatpush1.bf16.msra.mxu0 0
      %696 = vmatprep.subr.bf16.mxu0 0
      %697 = vmatpush1.bf16.msra.mxu0 0
      %698 = vmatprep.subr.bf16.mxu0 0
      %699 = vmatpush1.bf16.msra.mxu0 0
      %700 = vmatprep.subr.bf16.mxu0 0
      %701 = vmatpush1.bf16.msra.mxu0 0
      %702 = vmatprep.subr.bf16.mxu0 0
      %703 = vmatpush1.bf16.msra.mxu0 0
      %704 = vmatprep.subr.bf16.mxu0 0
      %705 = vmatpush1.bf16.msra.mxu0 0
      %706 = vmatprep.subr.bf16.mxu0 0
      %707 = vmatpush1.bf16.msra.mxu0 0
      %708 = vmatprep.subr.bf16.mxu0 0
      %709 = vmatpush1.bf16.msra.mxu0 0
      %710 = vmatprep.subr.bf16.mxu0 0
      %711 = vmatpush1.bf16.msra.mxu0 0
      %712 = vmatprep.subr.bf16.mxu0 0
      %713 = vmatpush1.bf16.msra.mxu0 0
      %714 = vmatprep.mubr.bf16.mxu0 0
      %715 = vmatmul.mubr.bf16.gmra.mrb[0].mxu0 %v680
      %v716 = vpop.f32.mrb[0].mxu0
      %v717 = vadd.f32 0.0, %v716
      %v718 = vpop.f32.mrb[0].mxu0
      %v719 = vpop.f32.mrb[0].mxu0
      %v720 = vpop.f32.mrb[0].mxu0
      %721 = vdwg.mxu0
      %v722 = vadd.f32 %v347, %v717
      %723 = vrot.lane.b32.xlu0 %v475, 104
      %v724 = vpop.permute.xlu0 %723
      %726 = vrot.lane.b32.xlu0 %v452, 120
      %v727 = vpop.permute.xlu0 %726
      %v729 = vsel %vm484, %v724, %v727
      %731 = vrot.lane.b32.xlu0 %v458, 16
      %v732 = vpop.permute.xlu0 %731
      %v734 = vmul.f32 %v452, %v732
      %v735 = vmul.f32 %v729, %v459
      %737 = vrot.lane.b32.xlu0 %v735, 16
      %v738 = vpop.permute.xlu0 %737
      %v740 = vadd.f32 %v734, %v738
      %741 = vrot.lane.b32.xlu0 %v475, 40
      %v742 = vpop.permute.xlu0 %741
      %744 = vrot.lane.b32.xlu0 %v452, 56
      %v745 = vpop.permute.xlu0 %744
      %v747 = vsel %vm484, %v742, %v745
      %748 = vrot.lane.b32.xlu0 %v460, 80
      %v749 = vpop.permute.xlu0 %748
      %v751 = vmul.f32 %v452, %v749
      %v752 = vmul.f32 %v747, %v461
      %754 = vrot.lane.b32.xlu0 %v752, 80
      %v755 = vpop.permute.xlu0 %754
      %v757 = vadd.f32 %v751, %v755
      %759 = vrot.lane.b32.xlu0 %v740, 112
      %v760 = vpop.permute.xlu0 %759
      %762 = vrot.lane.b32.xlu0 %v757, 48
      %v763 = vpop.permute.xlu0 %762
      %v764 = vsel %vm510, %v760, 0
      %v766 = vsel %vm510, %v763, 0
      %768 = vmatprep.subr.mxu0 0.0
      %769 = vmatpush1.xpose.msra.mxu0 %v766
      %770 = vmatprep.subr.mxu0 0.0
      %771 = vmatpush1.xpose.msra.mxu0 0.0
      %772 = vmatprep.subr.mxu0 0.0
      %773 = vmatpush1.xpose.msra.mxu0 0.0
      %774 = vmatprep.subr.mxu0 0.0
      %775 = vmatpush1.xpose.msra.mxu0 0.0
      %776 = vmatprep.subr.mxu0 0.0
      %777 = vmatpush1.xpose.msra.mxu0 0.0
      %778 = vmatprep.subr.mxu0 0.0
      %779 = vmatpush1.xpose.msra.mxu0 0.0
      %780 = vmatprep.subr.mxu0 0.0
      %781 = vmatpush1.xpose.msra.mxu0 0.0
      %782 = vmatprep.subr.mxu0 0.0
      %783 = vmatpush1.xpose.msra.mxu0 0.0
      %784 = vmatprep.subr.mxu0 0.0
      %785 = vmatpush1.xpose.msra.mxu0 0.0
      %786 = vmatprep.subr.mxu0 0.0
      %787 = vmatpush1.xpose.msra.mxu0 0.0
      %788 = vmatprep.subr.mxu0 0.0
      %789 = vmatpush1.xpose.msra.mxu0 0.0
      %790 = vmatprep.subr.mxu0 0.0
      %791 = vmatpush1.xpose.msra.mxu0 0.0
      %792 = vmatprep.subr.mxu0 0.0
      %793 = vmatpush1.xpose.msra.mxu0 0.0
      %794 = vmatprep.subr.mxu0 0.0
      %795 = vmatpush1.xpose.msra.mxu0 0.0
      %796 = vmatprep.subr.mxu0 0.0
      %797 = vmatpush1.xpose.msra.mxu0 0.0
      %798 = vmatprep.subr.mxu0 0.0
      %799 = vmatpush1.xpose.msra.mxu0 0.0
      %800 = vmatprep.subr.mxu0 0.0
      %801 = vmatpush1.xpose.msra.mxu0 0.0
      %802 = vmatprep.subr.mxu0 0.0
      %803 = vmatpush1.xpose.msra.mxu0 0.0
      %804 = vmatprep.subr.mxu0 0.0
      %805 = vmatpush1.xpose.msra.mxu0 0.0
      %806 = vmatprep.subr.mxu0 0.0
      %807 = vmatpush1.xpose.msra.mxu0 0.0
      %808 = vmatprep.subr.mxu0 0.0
      %809 = vmatpush1.xpose.msra.mxu0 0.0
      %810 = vmatprep.subr.mxu0 0.0
      %811 = vmatpush1.xpose.msra.mxu0 0.0
      %812 = vmatprep.subr.mxu0 0.0
      %813 = vmatpush1.xpose.msra.mxu0 0.0
      %814 = vmatprep.subr.mxu0 0.0
      %815 = vmatpush1.xpose.msra.mxu0 0.0
      %816 = vmatprep.subr.mxu0 0.0
      %817 = vmatpush1.xpose.msra.mxu0 0.0
      %818 = vmatprep.subr.mxu0 0.0
      %819 = vmatpush1.xpose.msra.mxu0 0.0
      %820 = vmatprep.subr.mxu0 0.0
      %821 = vmatpush1.xpose.msra.mxu0 0.0
      %822 = vmatprep.subr.mxu0 0.0
      %823 = vmatpush1.xpose.msra.mxu0 0.0
      %824 = vmatprep.subr.mxu0 0.0
      %825 = vmatpush1.xpose.msra.mxu0 0.0
      %826 = vmatprep.subr.mxu0 0.0
      %827 = vmatpush1.xpose.msra.mxu0 0.0
      %828 = vmatprep.subr.mxu0 0.0
      %829 = vmatpush1.xpose.msra.mxu0 0.0
      %830 = vmatprep.subr.mxu0 0.0
      %831 = vmatpush1.xpose.msra.mxu0 0.0
      %832 = vmatprep.mubr.f32.mxu0 0.0
      %833 = vmatmul.mubr.f32.gmra.mrb[0].mxu0 %v764
      %v834 = vpop.f32.mrb[0].mxu0
      %v835 = vadd.f32 0.0, %v834
      %v836 = vpop.f32.mrb[0].mxu0
      %837 = vdwg.mxu0
      %v838 = vmul.f32 %v835, 0.25
      %v839 = vsel %vm466, %v838, -1e+30
      %v840 = vsel %vm484, %v839, -inf
      %841 = vmax.xlane.f32.xlu0 %v840
      %v842 = vpop.xlane.xlu0 %841
      %v843 = vsub.f32 %v839, %v842
      %v844 = vmul.f32 %v843, 1.442695
      %v845 = vpow.pop %v844
      %v846 = vsel %vm484, %v845, 0.0
      %847 = vadd.xlane.f32.xlu0 %v846
      %v848 = vpop.xlane.xlu0 %847
      %850 = vrot.lane.b32.xlu0 %v454, 112
      %v851 = vpop.permute.xlu0 %850
      %v854 = vsel %vm484, %v845, 0
      %856 = vmatprep.subr.mxu0 0.0
      %857 = vmatpush1.msra.mxu0 %v851
      %858 = vmatprep.subr.mxu0 0.0
      %859 = vmatpush1.msra.mxu0 0.0
      %860 = vmatprep.subr.mxu0 0.0
      %861 = vmatpush1.msra.mxu0 0.0
      %862 = vmatprep.subr.mxu0 0.0
      %863 = vmatpush1.msra.mxu0 0.0
      %864 = vmatprep.subr.mxu0 0.0
      %865 = vmatpush1.msra.mxu0 0.0
      %866 = vmatprep.subr.mxu0 0.0
      %867 = vmatpush1.msra.mxu0 0.0
      %868 = vmatprep.subr.mxu0 0.0
      %869 = vmatpush1.msra.mxu0 0.0
      %870 = vmatprep.subr.mxu0 0.0
      %871 = vmatpush1.msra.mxu0 0.0
      %872 = vmatprep.subr.mxu0 0.0
      %873 = vmatpush1.msra.mxu0 0.0
      %874 = vmatprep.subr.mxu0 0.0
      %875 = vmatpush1.msra.mxu0 0.0
      %876 = vmatprep.subr.mxu0 0.0
      %877 = vmatpush1.msra.mxu0 0.0
      %878 = vmatprep.subr.mxu0 0.0
      %879 = vmatpush1.msra.mxu0 0.0
      %880 = vmatprep.subr.mxu0 0.0
      %881 = vmatpush1.msra.mxu0 0.0
      %882 = vmatprep.subr.mxu0 0.0
      %883 = vmatpush1.msra.mxu0 0.0
      %884 = vmatprep.subr.mxu0 0.0
      %885 = vmatpush1.msra.mxu0 0.0
      %886 = vmatprep.subr.mxu0 0.0
      %887 = vmatpush1.msra.mxu0 0.0
      %888 = vmatprep.subr.mxu0 0.0
      %889 = vmatpush1.msra.mxu0 0.0
      %890 = vmatprep.subr.mxu0 0.0
      %891 = vmatpush1.msra.mxu0 0.0
      %892 = vmatprep.subr.mxu0 0.0
      %893 = vmatpush1.msra.mxu0 0.0
      %894 = vmatprep.subr.mxu0 0.0
      %895 = vmatpush1.msra.mxu0 0.0
      %896 = vmatprep.subr.mxu0 0.0
      %897 = vmatpush1.msra.mxu0 0.0
      %898 = vmatprep.subr.mxu0 0.0
      %899 = vmatpush1.msra.mxu0 0.0
      %900 = vmatprep.subr.mxu0 0.0
      %901 = vmatpush1.msra.mxu0 0.0
      %902 = vmatprep.subr.mxu0 0.0
      %903 = vmatpush1.msra.mxu0 0.0
      %904 = vmatprep.subr.mxu0 0.0
      %905 = vmatpush1.msra.mxu0 0.0
      %906 = vmatprep.subr.mxu0 0.0
      %907 = vmatpush1.msra.mxu0 0.0
      %908 = vmatprep.subr.mxu0 0.0
      %909 = vmatpush1.msra.mxu0 0.0
      %910 = vmatprep.subr.mxu0 0.0
      %911 = vmatpush1.msra.mxu0 0.0
      %912 = vmatprep.subr.mxu0 0.0
      %913 = vmatpush1.msra.mxu0 0.0
      %914 = vmatprep.subr.mxu0 0.0
      %915 = vmatpush1.msra.mxu0 0.0
      %916 = vmatprep.subr.mxu0 0.0
      %917 = vmatpush1.msra.mxu0 0.0
      %918 = vmatprep.subr.mxu0 0.0
      %919 = vmatpush1.msra.mxu0 0.0
      %920 = vmatprep.mubr.f32.mxu0 0.0
      %921 = vmatmul.mubr.f32.gmra.mrb[0].mxu0 %v854
      %v922 = vpop.f32.mrb[0].mxu0
      %v923 = vadd.f32 0.0, %v922
      %v924 = vpop.f32.mrb[0].mxu0
      %925 = vdwg.mxu0
      %v926 = vrcp.pop %v848
      %v927 = vmul.f32 %v923, %v926
      %v928 = vpack.c.bf16 %v927, %v927
      %v931 = vunpack.c.l.b16 %v469
      %v932 = vunpack.c.l.b16 %v470
      %v933 = vpack.c.b16 %v932, %v931
      %v936 = vsel %vm510, %v928, 0
      %938 = vmatprep.subr.bf16.mxu0 0
      %939 = vmatpush1.bf16.msra.mxu0 %v933
      %940 = vmatprep.subr.bf16.mxu0 0
      %941 = vmatpush1.bf16.msra.mxu0 0
      %942 = vmatprep.subr.bf16.mxu0 0
      %943 = vmatpush1.bf16.msra.mxu0 0
      %944 = vmatprep.subr.bf16.mxu0 0
      %945 = vmatpush1.bf16.msra.mxu0 0
      %946 = vmatprep.subr.bf16.mxu0 0
      %947 = vmatpush1.bf16.msra.mxu0 0
      %948 = vmatprep.subr.bf16.mxu0 0
      %949 = vmatpush1.bf16.msra.mxu0 0
      %950 = vmatprep.subr.bf16.mxu0 0
      %951 = vmatpush1.bf16.msra.mxu0 0
      %952 = vmatprep.subr.bf16.mxu0 0
      %953 = vmatpush1.bf16.msra.mxu0 0
      %954 = vmatprep.subr.bf16.mxu0 0
      %955 = vmatpush1.bf16.msra.mxu0 0
      %956 = vmatprep.subr.bf16.mxu0 0
      %957 = vmatpush1.bf16.msra.mxu0 0
      %958 = vmatprep.subr.bf16.mxu0 0
      %959 = vmatpush1.bf16.msra.mxu0 0
      %960 = vmatprep.subr.bf16.mxu0 0
      %961 = vmatpush1.bf16.msra.mxu0 0
      %962 = vmatprep.subr.bf16.mxu0 0
      %963 = vmatpush1.bf16.msra.mxu0 0
      %964 = vmatprep.subr.bf16.mxu0 0
      %965 = vmatpush1.bf16.msra.mxu0 0
      %966 = vmatprep.subr.bf16.mxu0 0
      %967 = vmatpush1.bf16.msra.mxu0 0
      %968 = vmatprep.subr.bf16.mxu0 0
      %969 = vmatpush1.bf16.msra.mxu0 0
      %970 = vmatprep.mubr.bf16.mxu0 0
      %971 = vmatmul.mubr.bf16.gmra.mrb[0].mxu0 %v936
      %v972 = vpop.f32.mrb[0].mxu0
      %v973 = vadd.f32 0.0, %v972
      %v974 = vpop.f32.mrb[0].mxu0
      %v975 = vpop.f32.mrb[0].mxu0
      %v976 = vpop.f32.mrb[0].mxu0
      %977 = vdwg.mxu0
      %v978 = vadd.f32 %v722, %v973
      %979 = vrot.lane.b32.xlu0 %v475, 88
      %v980 = vpop.permute.xlu0 %979
      %982 = vrot.lane.b32.xlu0 %v452, 104
      %v983 = vpop.permute.xlu0 %982
      %v985 = vsel %vm484, %v980, %v983
      %986 = vrot.lane.b32.xlu0 %v458, 32
      %v987 = vpop.permute.xlu0 %986
      %v989 = vmul.f32 %v452, %v987
      %v990 = vmul.f32 %v985, %v459
      %992 = vrot.lane.b32.xlu0 %v990, 32
      %v993 = vpop.permute.xlu0 %992
      %v995 = vadd.f32 %v989, %v993
      %996 = vrot.lane.b32.xlu0 %v475, 24
      %v997 = vpop.permute.xlu0 %996
      %999 = vrot.lane.b32.xlu0 %v452, 40
      %v1000 = vpop.permute.xlu0 %999
      %v1002 = vsel %vm484, %v997, %v1000
      %1003 = vrot.lane.b32.xlu0 %v460, 96
      %v1004 = vpop.permute.xlu0 %1003
      %v1006 = vmul.f32 %v452, %v1004
      %v1007 = vmul.f32 %v1002, %v461
      %1009 = vrot.lane.b32.xlu0 %v1007, 96
      %v1010 = vpop.permute.xlu0 %1009
      %v1012 = vadd.f32 %v1006, %v1010
      %1014 = vrot.lane.b32.xlu0 %v995, 96
      %v1015 = vpop.permute.xlu0 %1014
      %1017 = vrot.lane.b32.xlu0 %v1012, 32
      %v1018 = vpop.permute.xlu0 %1017
      %v1019 = vsel %vm510, %v1015, 0
      %v1021 = vsel %vm510, %v1018, 0
      %1023 = vmatprep.subr.mxu0 0.0
      %1024 = vmatpush1.xpose.msra.mxu0 %v1021
      %1025 = vmatprep.subr.mxu0 0.0
      %1026 = vmatpush1.xpose.msra.mxu0 0.0
      %1027 = vmatprep.subr.mxu0 0.0
      %1028 = vmatpush1.xpose.msra.mxu0 0.0
      %1029 = vmatprep.subr.mxu0 0.0
      %1030 = vmatpush1.xpose.msra.mxu0 0.0
      %1031 = vmatprep.subr.mxu0 0.0
      %1032 = vmatpush1.xpose.msra.mxu0 0.0
      %1033 = vmatprep.subr.mxu0 0.0
      %1034 = vmatpush1.xpose.msra.mxu0 0.0
      %1035 = vmatprep.subr.mxu0 0.0
      %1036 = vmatpush1.xpose.msra.mxu0 0.0
      %1037 = vmatprep.subr.mxu0 0.0
      %1038 = vmatpush1.xpose.msra.mxu0 0.0
      %1039 = vmatprep.subr.mxu0 0.0
      %1040 = vmatpush1.xpose.msra.mxu0 0.0
      %1041 = vmatprep.subr.mxu0 0.0
      %1042 = vmatpush1.xpose.msra.mxu0 0.0
      %1043 = vmatprep.subr.mxu0 0.0
      %1044 = vmatpush1.xpose.msra.mxu0 0.0
      %1045 = vmatprep.subr.mxu0 0.0
      %1046 = vmatpush1.xpose.msra.mxu0 0.0
      %1047 = vmatprep.subr.mxu0 0.0
      %1048 = vmatpush1.xpose.msra.mxu0 0.0
      %1049 = vmatprep.subr.mxu0 0.0
      %1050 = vmatpush1.xpose.msra.mxu0 0.0
      %1051 = vmatprep.subr.mxu0 0.0
      %1052 = vmatpush1.xpose.msra.mxu0 0.0
      %1053 = vmatprep.subr.mxu0 0.0
      %1054 = vmatpush1.xpose.msra.mxu0 0.0
      %1055 = vmatprep.subr.mxu0 0.0
      %1056 = vmatpush1.xpose.msra.mxu0 0.0
      %1057 = vmatprep.subr.mxu0 0.0
      %1058 = vmatpush1.xpose.msra.mxu0 0.0
      %1059 = vmatprep.subr.mxu0 0.0
      %1060 = vmatpush1.xpose.msra.mxu0 0.0
      %1061 = vmatprep.subr.mxu0 0.0
      %1062 = vmatpush1.xpose.msra.mxu0 0.0
      %1063 = vmatprep.subr.mxu0 0.0
      %1064 = vmatpush1.xpose.msra.mxu0 0.0
      %1065 = vmatprep.subr.mxu0 0.0
      %1066 = vmatpush1.xpose.msra.mxu0 0.0
      %1067 = vmatprep.subr.mxu0 0.0
      %1068 = vmatpush1.xpose.msra.mxu0 0.0
      %1069 = vmatprep.subr.mxu0 0.0
      %1070 = vmatpush1.xpose.msra.mxu0 0.0
      %1071 = vmatprep.subr.mxu0 0.0
      %1072 = vmatpush1.xpose.msra.mxu0 0.0
      %1073 = vmatprep.subr.mxu0 0.0
      %1074 = vmatpush1.xpose.msra.mxu0 0.0
      %1075 = vmatprep.subr.mxu0 0.0
      %1076 = vmatpush1.xpose.msra.mxu0 0.0
      %1077 = vmatprep.subr.mxu0 0.0
      %1078 = vmatpush1.xpose.msra.mxu0 0.0
      %1079 = vmatprep.subr.mxu0 0.0
      %1080 = vmatpush1.xpose.msra.mxu0 0.0
      %1081 = vmatprep.subr.mxu0 0.0
      %1082 = vmatpush1.xpose.msra.mxu0 0.0
      %1083 = vmatprep.subr.mxu0 0.0
      %1084 = vmatpush1.xpose.msra.mxu0 0.0
      %1085 = vmatprep.subr.mxu0 0.0
      %1086 = vmatpush1.xpose.msra.mxu0 0.0
      %1087 = vmatprep.mubr.f32.mxu0 0.0
      %1088 = vmatmul.mubr.f32.gmra.mrb[0].mxu0 %v1019
      %v1089 = vpop.f32.mrb[0].mxu0
      %v1090 = vadd.f32 0.0, %v1089
      %v1091 = vpop.f32.mrb[0].mxu0
      %1092 = vdwg.mxu0
      %v1093 = vmul.f32 %v1090, 0.25
      %v1094 = vsel %vm466, %v1093, -1e+30
      %v1095 = vsel %vm484, %v1094, -inf
      %1096 = vmax.xlane.f32.xlu0 %v1095
      %v1097 = vpop.xlane.xlu0 %1096
      %v1098 = vsub.f32 %v1094, %v1097
      %v1099 = vmul.f32 %v1098, 1.442695
      %v1100 = vpow.pop %v1099
      %v1101 = vsel %vm484, %v1100, 0.0
      %1102 = vadd.xlane.f32.xlu0 %v1101
      %v1103 = vpop.xlane.xlu0 %1102
      %1104 = vrot.lane.b32.xlu0 %v454, 96
      %v1105 = vpop.permute.xlu0 %1104
      %v1108 = vsel %vm484, %v1100, 0
      %1110 = vmatprep.subr.mxu0 0.0
      %1111 = vmatpush1.msra.mxu0 %v1105
      %1112 = vmatprep.subr.mxu0 0.0
      %1113 = vmatpush1.msra.mxu0 0.0
      %1114 = vmatprep.subr.mxu0 0.0
      %1115 = vmatpush1.msra.mxu0 0.0
      %1116 = vmatprep.subr.mxu0 0.0
      %1117 = vmatpush1.msra.mxu0 0.0
      %1118 = vmatprep.subr.mxu0 0.0
      %1119 = vmatpush1.msra.mxu0 0.0
      %1120 = vmatprep.subr.mxu0 0.0
      %1121 = vmatpush1.msra.mxu0 0.0
      %1122 = vmatprep.subr.mxu0 0.0
      %1123 = vmatpush1.msra.mxu0 0.0
      %1124 = vmatprep.subr.mxu0 0.0
      %1125 = vmatpush1.msra.mxu0 0.0
      %1126 = vmatprep.subr.mxu0 0.0
      %1127 = vmatpush1.msra.mxu0 0.0
      %1128 = vmatprep.subr.mxu0 0.0
      %1129 = vmatpush1.msra.mxu0 0.0
      %1130 = vmatprep.subr.mxu0 0.0
      %1131 = vmatpush1.msra.mxu0 0.0
      %1132 = vmatprep.subr.mxu0 0.0
      %1133 = vmatpush1.msra.mxu0 0.0
      %1134 = vmatprep.subr.mxu0 0.0
      %1135 = vmatpush1.msra.mxu0 0.0
      %1136 = vmatprep.subr.mxu0 0.0
      %1137 = vmatpush1.msra.mxu0 0.0
      %1138 = vmatprep.subr.mxu0 0.0
      %1139 = vmatpush1.msra.mxu0 0.0
      %1140 = vmatprep.subr.mxu0 0.0
      %1141 = vmatpush1.msra.mxu0 0.0
      %1142 = vmatprep.subr.mxu0 0.0
      %1143 = vmatpush1.msra.mxu0 0.0
      %1144 = vmatprep.subr.mxu0 0.0
      %1145 = vmatpush1.msra.mxu0 0.0
      %1146 = vmatprep.subr.mxu0 0.0
      %1147 = vmatpush1.msra.mxu0 0.0
      %1148 = vmatprep.subr.mxu0 0.0
      %1149 = vmatpush1.msra.mxu0 0.0
      %1150 = vmatprep.subr.mxu0 0.0
      %1151 = vmatpush1.msra.mxu0 0.0
      %1152 = vmatprep.subr.mxu0 0.0
      %1153 = vmatpush1.msra.mxu0 0.0
      %1154 = vmatprep.subr.mxu0 0.0
      %1155 = vmatpush1.msra.mxu0 0.0
      %1156 = vmatprep.subr.mxu0 0.0
      %1157 = vmatpush1.msra.mxu0 0.0
      %1158 = vmatprep.subr.mxu0 0.0
      %1159 = vmatpush1.msra.mxu0 0.0
      %1160 = vmatprep.subr.mxu0 0.0
      %1161 = vmatpush1.msra.mxu0 0.0
      %1162 = vmatprep.subr.mxu0 0.0
      %1163 = vmatpush1.msra.mxu0 0.0
      %1164 = vmatprep.subr.mxu0 0.0
      %1165 = vmatpush1.msra.mxu0 0.0
      %1166 = vmatprep.subr.mxu0 0.0
      %1167 = vmatpush1.msra.mxu0 0.0
      %1168 = vmatprep.subr.mxu0 0.0
      %1169 = vmatpush1.msra.mxu0 0.0
      %1170 = vmatprep.subr.mxu0 0.0
      %1171 = vmatpush1.msra.mxu0 0.0
      %1172 = vmatprep.subr.mxu0 0.0
      %1173 = vmatpush1.msra.mxu0 0.0
      %1174 = vmatprep.mubr.f32.mxu0 0.0
      %1175 = vmatmul.mubr.f32.gmra.mrb[0].mxu0 %v1108
      %v1176 = vpop.f32.mrb[0].mxu0
      %v1177 = vadd.f32 0.0, %v1176
      %v1178 = vpop.f32.mrb[0].mxu0
      %1179 = vdwg.mxu0
      %v1180 = vrcp.pop %v1103
      %v1181 = vmul.f32 %v1177, %v1180
      %v1182 = vpack.c.bf16 %v1181, %v1181
      %v1185 = vunpack.c.l.b16 %v471
      %v1186 = vunpack.c.l.b16 %v472
      %v1187 = vpack.c.b16 %v1186, %v1185
      %v1190 = vsel %vm510, %v1182, 0
      %1192 = vmatprep.subr.bf16.mxu0 0
      %1193 = vmatpush1.bf16.msra.mxu0 %v1187
      %1194 = vmatprep.subr.bf16.mxu0 0
      %1195 = vmatpush1.bf16.msra.mxu0 0
      %1196 = vmatprep.subr.bf16.mxu0 0
      %1197 = vmatpush1.bf16.msra.mxu0 0
      %1198 = vmatprep.subr.bf16.mxu0 0
      %1199 = vmatpush1.bf16.msra.mxu0 0
      %1200 = vmatprep.subr.bf16.mxu0 0
      %1201 = vmatpush1.bf16.msra.mxu0 0
      %1202 = vmatprep.subr.bf16.mxu0 0
      %1203 = vmatpush1.bf16.msra.mxu0 0
      %1204 = vmatprep.subr.bf16.mxu0 0
      %1205 = vmatpush1.bf16.msra.mxu0 0
      %1206 = vmatprep.subr.bf16.mxu0 0
      %1207 = vmatpush1.bf16.msra.mxu0 0
      %1208 = vmatprep.subr.bf16.mxu0 0
      %1209 = vmatpush1.bf16.msra.mxu0 0
      %1210 = vmatprep.subr.bf16.mxu0 0
      %1211 = vmatpush1.bf16.msra.mxu0 0
      %1212 = vmatprep.subr.bf16.mxu0 0
      %1213 = vmatpush1.bf16.msra.mxu0 0
      %1214 = vmatprep.subr.bf16.mxu0 0
      %1215 = vmatpush1.bf16.msra.mxu0 0
      %1216 = vmatprep.subr.bf16.mxu0 0
      %1217 = vmatpush1.bf16.msra.mxu0 0
      %1218 = vmatprep.subr.bf16.mxu0 0
      %1219 = vmatpush1.bf16.msra.mxu0 0
      %1220 = vmatprep.subr.bf16.mxu0 0
      %1221 = vmatpush1.bf16.msra.mxu0 0
      %1222 = vmatprep.subr.bf16.mxu0 0
      %1223 = vmatpush1.bf16.msra.mxu0 0
      %1224 = vmatprep.mubr.bf16.mxu0 0
      %1225 = vmatmul.mubr.bf16.gmra.mrb[0].mxu0 %v1190
      %v1226 = vpop.f32.mrb[0].mxu0
      %v1227 = vadd.f32 0.0, %v1226
      %v1228 = vpop.f32.mrb[0].mxu0
      %v1229 = vpop.f32.mrb[0].mxu0
      %v1230 = vpop.f32.mrb[0].mxu0
      %1231 = vdwg.mxu0
      %v1232 = vadd.f32 %v978, %v1227
      %1233 = vrot.lane.b32.xlu0 %v475, 72
      %v1234 = vpop.permute.xlu0 %1233
      %1236 = vrot.lane.b32.xlu0 %v452, 88
      %v1237 = vpop.permute.xlu0 %1236
      %v1239 = vsel %vm484, %v1234, %v1237
      %1240 = vrot.lane.b32.xlu0 %v458, 48
      %v1241 = vpop.permute.xlu0 %1240
      %v1243 = vmul.f32 %v452, %v1241
      %v1244 = vmul.f32 %v1239, %v459
      %1246 = vrot.lane.b32.xlu0 %v1244, 48
      %v1247 = vpop.permute.xlu0 %1246
      %v1249 = vadd.f32 %v1243, %v1247
      %1250 = vrot.lane.b32.xlu0 %v475, 8
      %v1251 = vpop.permute.xlu0 %1250
      %1253 = vrot.lane.b32.xlu0 %v452, 24
      %v1254 = vpop.permute.xlu0 %1253
      %v1256 = vsel %vm484, %v1251, %v1254
      %1257 = vrot.lane.b32.xlu0 %v460, 112
      %v1258 = vpop.permute.xlu0 %1257
      %v1260 = vmul.f32 %v452, %v1258
      %v1261 = vmul.f32 %v1256, %v461
      %1263 = vrot.lane.b32.xlu0 %v1261, 112
      %v1264 = vpop.permute.xlu0 %1263
      %v1266 = vadd.f32 %v1260, %v1264
      %1268 = vrot.lane.b32.xlu0 %v1249, 80
      %v1269 = vpop.permute.xlu0 %1268
      %1271 = vrot.lane.b32.xlu0 %v1266, 16
      %v1272 = vpop.permute.xlu0 %1271
      %v1273 = vsel %vm510, %v1269, 0
      %v1275 = vsel %vm510, %v1272, 0
      %1277 = vmatprep.subr.mxu0 0.0
      %1278 = vmatpush1.xpose.msra.mxu0 %v1275
      %1279 = vmatprep.subr.mxu0 0.0
      %1280 = vmatpush1.xpose.msra.mxu0 0.0
      %1281 = vmatprep.subr.mxu0 0.0
      %1282 = vmatpush1.xpose.msra.mxu0 0.0
      %1283 = vmatprep.subr.mxu0 0.0
      %1284 = vmatpush1.xpose.msra.mxu0 0.0
      %1285 = vmatprep.subr.mxu0 0.0
      %1286 = vmatpush1.xpose.msra.mxu0 0.0
      %1287 = vmatprep.subr.mxu0 0.0
      %1288 = vmatpush1.xpose.msra.mxu0 0.0
      %1289 = vmatprep.subr.mxu0 0.0
      %1290 = vmatpush1.xpose.msra.mxu0 0.0
      %1291 = vmatprep.subr.mxu0 0.0
      %1292 = vmatpush1.xpose.msra.mxu0 0.0
      %1293 = vmatprep.subr.mxu0 0.0
      %1294 = vmatpush1.xpose.msra.mxu0 0.0
      %1295 = vmatprep.subr.mxu0 0.0
      %1296 = vmatpush1.xpose.msra.mxu0 0.0
      %1297 = vmatprep.subr.mxu0 0.0
      %1298 = vmatpush1.xpose.msra.mxu0 0.0
      %1299 = vmatprep.subr.mxu0 0.0
      %1300 = vmatpush1.xpose.msra.mxu0 0.0
      %1301 = vmatprep.subr.mxu0 0.0
      %1302 = vmatpush1.xpose.msra.mxu0 0.0
      %1303 = vmatprep.subr.mxu0 0.0
      %1304 = vmatpush1.xpose.msra.mxu0 0.0
      %1305 = vmatprep.subr.mxu0 0.0
      %1306 = vmatpush1.xpose.msra.mxu0 0.0
      %1307 = vmatprep.subr.mxu0 0.0
      %1308 = vmatpush1.xpose.msra.mxu0 0.0
      %1309 = vmatprep.subr.mxu0 0.0
      %1310 = vmatpush1.xpose.msra.mxu0 0.0
      %1311 = vmatprep.subr.mxu0 0.0
      %1312 = vmatpush1.xpose.msra.mxu0 0.0
      %1313 = vmatprep.subr.mxu0 0.0
      %1314 = vmatpush1.xpose.msra.mxu0 0.0
      %1315 = vmatprep.subr.mxu0 0.0
      %1316 = vmatpush1.xpose.msra.mxu0 0.0
      %1317 = vmatprep.subr.mxu0 0.0
      %1318 = vmatpush1.xpose.msra.mxu0 0.0
      %1319 = vmatprep.subr.mxu0 0.0
      %1320 = vmatpush1.xpose.msra.mxu0 0.0
      %1321 = vmatprep.subr.mxu0 0.0
      %1322 = vmatpush1.xpose.msra.mxu0 0.0
      %1323 = vmatprep.subr.mxu0 0.0
      %1324 = vmatpush1.xpose.msra.mxu0 0.0
      %1325 = vmatprep.subr.mxu0 0.0
      %1326 = vmatpush1.xpose.msra.mxu0 0.0
      %1327 = vmatprep.subr.mxu0 0.0
      %1328 = vmatpush1.xpose.msra.mxu0 0.0
      %1329 = vmatprep.subr.mxu0 0.0
      %1330 = vmatpush1.xpose.msra.mxu0 0.0
      %1331 = vmatprep.subr.mxu0 0.0
      %1332 = vmatpush1.xpose.msra.mxu0 0.0
      %1333 = vmatprep.subr.mxu0 0.0
      %1334 = vmatpush1.xpose.msra.mxu0 0.0
      %1335 = vmatprep.subr.mxu0 0.0
      %1336 = vmatpush1.xpose.msra.mxu0 0.0
      %1337 = vmatprep.subr.mxu0 0.0
      %1338 = vmatpush1.xpose.msra.mxu0 0.0
      %1339 = vmatprep.subr.mxu0 0.0
      %1340 = vmatpush1.xpose.msra.mxu0 0.0
      %1341 = vmatprep.mubr.f32.mxu0 0.0
      %1342 = vmatmul.mubr.f32.gmra.mrb[0].mxu0 %v1273
      %v1343 = vpop.f32.mrb[0].mxu0
      %v1344 = vadd.f32 0.0, %v1343
      %v1345 = vpop.f32.mrb[0].mxu0
      %1346 = vdwg.mxu0
      %v1347 = vmul.f32 %v1344, 0.25
      %v1348 = vsel %vm466, %v1347, -1e+30
      %v1349 = vsel %vm484, %v1348, -inf
      %1350 = vmax.xlane.f32.xlu0 %v1349
      %v1351 = vpop.xlane.xlu0 %1350
      %v1352 = vsub.f32 %v1348, %v1351
      %v1353 = vmul.f32 %v1352, 1.442695
      %v1354 = vpow.pop %v1353
      %v1355 = vsel %vm484, %v1354, 0.0
      %1356 = vadd.xlane.f32.xlu0 %v1355
      %v1357 = vpop.xlane.xlu0 %1356
      %1358 = vrot.lane.b32.xlu0 %v454, 80
      %v1359 = vpop.permute.xlu0 %1358
      %v1362 = vsel %vm484, %v1354, 0
      %1364 = vmatprep.subr.mxu0 0.0
      %1365 = vmatpush1.msra.mxu0 %v1359
      %1366 = vmatprep.subr.mxu0 0.0
      %1367 = vmatpush1.msra.mxu0 0.0
      %1368 = vmatprep.subr.mxu0 0.0
      %1369 = vmatpush1.msra.mxu0 0.0
      %1370 = vmatprep.subr.mxu0 0.0
      %1371 = vmatpush1.msra.mxu0 0.0
      %1372 = vmatprep.subr.mxu0 0.0
      %1373 = vmatpush1.msra.mxu0 0.0
      %1374 = vmatprep.subr.mxu0 0.0
      %1375 = vmatpush1.msra.mxu0 0.0
      %1376 = vmatprep.subr.mxu0 0.0
      %1377 = vmatpush1.msra.mxu0 0.0
      %1378 = vmatprep.subr.mxu0 0.0
      %1379 = vmatpush1.msra.mxu0 0.0
      %1380 = vmatprep.subr.mxu0 0.0
      %1381 = vmatpush1.msra.mxu0 0.0
      %1382 = vmatprep.subr.mxu0 0.0
      %1383 = vmatpush1.msra.mxu0 0.0
      %1384 = vmatprep.subr.mxu0 0.0
      %1385 = vmatpush1.msra.mxu0 0.0
      %1386 = vmatprep.subr.mxu0 0.0
      %1387 = vmatpush1.msra.mxu0 0.0
      %1388 = vmatprep.subr.mxu0 0.0
      %1389 = vmatpush1.msra.mxu0 0.0
      %1390 = vmatprep.subr.mxu0 0.0
      %1391 = vmatpush1.msra.mxu0 0.0
      %1392 = vmatprep.subr.mxu0 0.0
      %1393 = vmatpush1.msra.mxu0 0.0
      %1394 = vmatprep.subr.mxu0 0.0
      %1395 = vmatpush1.msra.mxu0 0.0
      %1396 = vmatprep.subr.mxu0 0.0
      %1397 = vmatpush1.msra.mxu0 0.0
      %1398 = vmatprep.subr.mxu0 0.0
      %1399 = vmatpush1.msra.mxu0 0.0
      %1400 = vmatprep.subr.mxu0 0.0
      %1401 = vmatpush1.msra.mxu0 0.0
      %1402 = vmatprep.subr.mxu0 0.0
      %1403 = vmatpush1.msra.mxu0 0.0
      %1404 = vmatprep.subr.mxu0 0.0
      %1405 = vmatpush1.msra.mxu0 0.0
      %1406 = vmatprep.subr.mxu0 0.0
      %1407 = vmatpush1.msra.mxu0 0.0
      %1408 = vmatprep.subr.mxu0 0.0
      %1409 = vmatpush1.msra.mxu0 0.0
      %1410 = vmatprep.subr.mxu0 0.0
      %1411 = vmatpush1.msra.mxu0 0.0
      %1412 = vmatprep.subr.mxu0 0.0
      %1413 = vmatpush1.msra.mxu0 0.0
      %1414 = vmatprep.subr.mxu0 0.0
      %1415 = vmatpush1.msra.mxu0 0.0
      %1416 = vmatprep.subr.mxu0 0.0
      %1417 = vmatpush1.msra.mxu0 0.0
      %1418 = vmatprep.subr.mxu0 0.0
      %1419 = vmatpush1.msra.mxu0 0.0
      %1420 = vmatprep.subr.mxu0 0.0
      %1421 = vmatpush1.msra.mxu0 0.0
      %1422 = vmatprep.subr.mxu0 0.0
      %1423 = vmatpush1.msra.mxu0 0.0
      %1424 = vmatprep.subr.mxu0 0.0
      %1425 = vmatpush1.msra.mxu0 0.0
      %1426 = vmatprep.subr.mxu0 0.0
      %1427 = vmatpush1.msra.mxu0 0.0
      %1428 = vmatprep.mubr.f32.mxu0 0.0
      %1429 = vmatmul.mubr.f32.gmra.mrb[0].mxu0 %v1362
      %v1430 = vpop.f32.mrb[0].mxu0
      %v1431 = vadd.f32 0.0, %v1430
      %v1432 = vpop.f32.mrb[0].mxu0
      %1433 = vdwg.mxu0
      %v1434 = vrcp.pop %v1357
      %v1435 = vmul.f32 %v1431, %v1434
      %v1436 = vpack.c.bf16 %v1435, %v1435
      %v1439 = vunpack.c.l.b16 %v473
      %v1440 = vunpack.c.l.b16 %v474
      %v1441 = vpack.c.b16 %v1440, %v1439
      %v1444 = vsel %vm510, %v1436, 0
      %1446 = vmatprep.subr.bf16.mxu0 0
      %1447 = vmatpush1.bf16.msra.mxu0 %v1441
      %1448 = vmatprep.subr.bf16.mxu0 0
      %1449 = vmatpush1.bf16.msra.mxu0 0
      %1450 = vmatprep.subr.bf16.mxu0 0
      %1451 = vmatpush1.bf16.msra.mxu0 0
      %1452 = vmatprep.subr.bf16.mxu0 0
      %1453 = vmatpush1.bf16.msra.mxu0 0
      %1454 = vmatprep.subr.bf16.mxu0 0
      %1455 = vmatpush1.bf16.msra.mxu0 0
      %1456 = vmatprep.subr.bf16.mxu0 0
      %1457 = vmatpush1.bf16.msra.mxu0 0
      %1458 = vmatprep.subr.bf16.mxu0 0
      %1459 = vmatpush1.bf16.msra.mxu0 0
      %1460 = vmatprep.subr.bf16.mxu0 0
      %1461 = vmatpush1.bf16.msra.mxu0 0
      %1462 = vmatprep.subr.bf16.mxu0 0
      %1463 = vmatpush1.bf16.msra.mxu0 0
      %1464 = vmatprep.subr.bf16.mxu0 0
      %1465 = vmatpush1.bf16.msra.mxu0 0
      %1466 = vmatprep.subr.bf16.mxu0 0
      %1467 = vmatpush1.bf16.msra.mxu0 0
      %1468 = vmatprep.subr.bf16.mxu0 0
      %1469 = vmatpush1.bf16.msra.mxu0 0
      %1470 = vmatprep.subr.bf16.mxu0 0
      %1471 = vmatpush1.bf16.msra.mxu0 0
      %1472 = vmatprep.subr.bf16.mxu0 0
      %1473 = vmatpush1.bf16.msra.mxu0 0
      %1474 = vmatprep.subr.bf16.mxu0 0
      %1475 = vmatpush1.bf16.msra.mxu0 0
      %1476 = vmatprep.subr.bf16.mxu0 0
      %1477 = vmatpush1.bf16.msra.mxu0 0
      %1478 = vmatprep.mubr.bf16.mxu0 0
      %1479 = vmatmul.mubr.bf16.gmra.mrb[0].mxu0 %v1444
      %v1480 = vpop.f32.mrb[0].mxu0
      %v1481 = vadd.f32 0.0, %v1480
      %v1482 = vpop.f32.mrb[0].mxu0
      %v1483 = vpop.f32.mrb[0].mxu0
      %v1484 = vpop.f32.mrb[0].mxu0
      %1485 = vdwg.mxu0
      %v1486 = vadd.f32 %v1232, %v1481
      %v1487 = vpack.c.bf16 %v1486, %v1486
      %vm1488 = vcmask 519168
      %1489 = vst.msk [vmem:[%s344] sm:$0xf] %vm1488, %v1487
      %p1490 = scmp.lt.s32.totalorder %s20, 1
      %s1491 = scalar_select %p1490, %s20, 1
      %s1492 = smul.addr %s1491, 4
      %s1493 = scalar_lea.vmem %s9, %s1492
      // Predicated region
      $region57: #{encoder_forward.6} parent=55 // pred_check
        %p1494 = pneg %p237
      $region58: #{encoder_forward.6} parent=55 // pred_check_branch
        %1496 = sbr.rel (%p1494) target = $region60
      $region59: #{encoder_forward.6} parent=55 // pred_region
        _
      $region60: #{encoder_forward.6} parent=55 // pred_fallthru
        _
    $region56: #{encoder_forward.6} parent=5 // pred_fallthru
      _
    %p1497 = scmp.le.s32.totalorder 2, %s15
    // Predicated region
    $region61: #{encoder_forward.6} parent=5 // pred_check
      %p1498 = pneg %p1497
    $region62: #{encoder_forward.6} parent=5 // pred_check_branch
      %1500 = sbr.rel (%p1498) target = $region64
    $region63: #{encoder_forward.6} parent=5 // pred_region
      %s1501 = ssub.s32 %s15, 2
      // Predicated region
      $region65: #{encoder_forward.6} parent=63 // pred_check
        %p1502 = pneg %p243
      $region66: #{encoder_forward.6} parent=63 // pred_check_branch
        %1504 = sbr.rel (%p1502) target = $region68
      $region67: #{encoder_forward.6} parent=63 // pred_region
        %p1505 = scmp.lt.s32.totalorder %s21, 1
        %s1506 = scalar_select %p1505, %s21, 1
        %s1507 = smul.addr %s1506, 4
        %s1508 = scalar_lea.vmem %s9, %s1507
      $region68: #{encoder_forward.6} parent=63 // pred_fallthru
        _
    $region64: #{encoder_forward.6} parent=5 // pred_fallthru
      _
  $region6: #{encoder_forward.6} parent=0 // loop_footer
    %s19 = sadd.s32 1, %s15
  $region7: #{encoder_forward.6} parent=0 // loop_footer_branch
    %14 = sbr.rel target = $region3
  $region8: #{encoder_forward.6} parent=0 // loop_exit
    _

// kernel: encoder_forward.7
$region0: #{encoder_forward.7}
  #allocation0 [shape = 'u32[]', space=smem, size = 0x4, offset = 0x4, fixed_abs, tag = 'smem constant byte address 0x4 - core index']
  #allocation1 [shape = 'u32[144,128]{1,0:T(1,128)}', space=vmem, size = 0x12000, scoped, tag = 'internal scratch']
  %s0 = inlined_call_operand.vmem [shape: bf16[2,8,64], index: 0, kind: input, shape index: {}]
  %s1 = inlined_call_operand.vmem [shape: bf16[2,8,64], index: 1, kind: input, shape index: {}]
  %s2 = inlined_call_operand.vmem [shape: bf16[1,64], index: 2, kind: input, shape index: {}]
  %s3 = inlined_call_operand.vmem [shape: bf16[64,192], index: 3, kind: input, shape index: {}]
  %s4 = inlined_call_operand.vmem [shape: bf16[64,64], index: 4, kind: input, shape index: {}]
  %s5 = inlined_call_operand.vmem [shape: f32[8,16], index: 5, kind: input, shape index: {}, may-alias: {5,7}]
  %s6 = inlined_call_operand.vmem [shape: f32[8,16], index: 6, kind: input, shape index: {}, may-alias: {6,8}]
  %s7 = inlined_call_operand.vmem [shape: f32[8,16], index: 7, kind: input, shape index: {}, may-alias: {5,7}]
  %s8 = inlined_call_operand.vmem [shape: f32[8,16], index: 8, kind: input, shape index: {}, may-alias: {6,8}]
  %s9 = inlined_call_operand.vmem [shape: bf16[2,8,64], index: 9, kind: output, shape index: {}]
  %s10 = sld [smem:[#allocation0]]
  $region69: #{encoder_forward.7} parent=0
    _
  %s12 = ssub.s32 1, %s10
  %s13 = scalar_select 0, %s12, %s10
  loop: start=0, step=1, limit=4
  $region2: #{encoder_forward.7} parent=0 // loop_pre_header
    _
  $region3: #{encoder_forward.7} parent=0 // loop_header
    %s15 = sphi 0, %s19
    %p16 = scmp.ge.s32.totalorder %s15, 4
    %s25 = sphi 0, %s27
    %s28 = sphi 0, %s25
    %s29 = sphi 0, %s28
    %s45 = sphi 0, %s29
    %s51 = sphi 0, %s53
    %s54 = sphi 0, %s51
    %s55 = sphi 0, %s54
    %s71 = sphi 0, %s55
    %s75 = sphi 0, %s75
    %s77 = sphi 0, %s75
    %s78 = sphi 0, %s77
    %s92 = sphi 0, %s78
    %s96 = sphi 0, %s96
    %s98 = sphi 0, %s96
    %s99 = sphi 0, %s98
    %s113 = sphi 0, %s99
    %s117 = sphi 0, %s117
    %s119 = sphi 0, %s117
    %s120 = sphi 0, %s119
    %s134 = sphi 0, %s120
    %s138 = sphi 0, %s138
    %s140 = sphi 0, %s138
    %s141 = sphi 0, %s140
    %s155 = sphi 0, %s141
    %s159 = sphi 0, %s159
    %s161 = sphi 0, %s159
    %s162 = sphi 0, %s161
    %s176 = sphi 0, %s162
    %s180 = sphi 0, %s180
    %s182 = sphi 0, %s180
    %s183 = sphi 0, %s182
    %s197 = sphi 0, %s183
    %s201 = sphi 0, %s201
    %s203 = sphi 0, %s201
    %s204 = sphi 0, %s203
    %s218 = sphi 0, %s204
    %s224 = sphi 0, %s226
    %s227 = sphi 0, %s224
    %s228 = sphi 0, %s227
    %s244 = sphi 0, %s228
  $region4: #{encoder_forward.7} parent=0 // loop_header_branch
    %18 = sbr.rel (%p16) target = $region8
  $region5: #{encoder_forward.7} parent=0 // loop_body
    %s20 = ssub.s32 %s15, 1
    %s21 = ssub.s32 %s15, 2
    %s22 = sadd.s32 %s15, 1
    %s23 = ssub.s32 %s15, %s22
    %p24 = scmp.eq.s32.totalorder %s23, 0
    %s26 = sadd.s32 %s25, 1
    %s27 = scalar_select %p24, %s25, %s26
    %p30 = pneg %p24
    %p31 = scmp.eq.s32.totalorder %s15, 1
    %p32 = por %p30, %p31
    %p33 = scmp.ne.s32.totalorder %s25, %s28
    %p34 = scmp.eq.s32.totalorder %s15, 0
    %p35 = por %p33, %p34
    %p36 = scmp.ne.s32.totalorder %s25, %s28
    %p37 = scmp.eq.s32.totalorder %s20, 1
    %p38 = por %p36, %p37
    %p39 = scmp.ne.s32.totalorder %s28, %s29
    %p40 = scmp.eq.s32.totalorder %s20, 0
    %p41 = por %p39, %p40
    %p42 = scmp.ne.s32.totalorder %s28, %s29
    %p43 = scmp.eq.s32.totalorder %s21, 1
    %p44 = por %p42, %p43
    %p46 = scmp.ne.s32.totalorder %s29, %s45
    %p47 = scmp.eq.s32.totalorder %s21, 0
    %p48 = por %p46, %p47
    %s49 = ssub.s32 %s15, %s22
    %p50 = scmp.eq.s32.totalorder %s49, 0
    %s52 = sadd.s32 %s51, 1
    %s53 = scalar_select %p50, %s51, %s52
    %p56 = pneg %p50
    %p57 = scmp.eq.s32.totalorder %s15, 1
    %p58 = por %p56, %p57
    %p59 = scmp.ne.s32.totalorder %s51, %s54
    %p60 = scmp.eq.s32.totalorder %s15, 0
    %p61 = por %p59, %p60
    %p62 = scmp.ne.s32.totalorder %s51, %s54
    %p63 = scmp.eq.s32.totalorder %s20, 1
    %p64 = por %p62, %p63
    %p65 = scmp.ne.s32.totalorder %s54, %s55
    %p66 = scmp.eq.s32.totalorder %s20, 0
    %p67 = por %p65, %p66
    %p68 = scmp.ne.s32.totalorder %s54, %s55
    %p69 = scmp.eq.s32.totalorder %s21, 1
    %p70 = por %p68, %p69
    %p72 = scmp.ne.s32.totalorder %s55, %s71
    %p73 = scmp.eq.s32.totalorder %s21, 0
    %p74 = por %p72, %p73
    %s76 = sadd.s32 %s75, 1
    %p79 = scmp.eq.s32.totalorder %s15, 1
    %p80 = scmp.ne.s32.totalorder %s75, %s77
    %p81 = scmp.eq.s32.totalorder %s15, 0
    %p82 = por %p80, %p81
    %p83 = scmp.ne.s32.totalorder %s75, %s77
    %p84 = scmp.eq.s32.totalorder %s20, 1
    %p85 = por %p83, %p84
    %p86 = scmp.ne.s32.totalorder %s77, %s78
    %p87 = scmp.eq.s32.totalorder %s20, 0
    %p88 = por %p86, %p87
    %p89 = scmp.ne.s32.totalorder %s77, %s78
    %p90 = scmp.eq.s32.totalorder %s21, 1
    %p91 = por %p89, %p90
    %p93 = scmp.ne.s32.totalorder %s78, %s92
    %p94 = scmp.eq.s32.totalorder %s21, 0
    %p95 = por %p93, %p94
    %s97 = sadd.s32 %s96, 1
    %p100 = scmp.eq.s32.totalorder %s15, 1
    %p101 = scmp.ne.s32.totalorder %s96, %s98
    %p102 = scmp.eq.s32.totalorder %s15, 0
    %p103 = por %p101, %p102
    %p104 = scmp.ne.s32.totalorder %s96, %s98
    %p105 = scmp.eq.s32.totalorder %s20, 1
    %p106 = por %p104, %p105
    %p107 = scmp.ne.s32.totalorder %s98, %s99
    %p108 = scmp.eq.s32.totalorder %s20, 0
    %p109 = por %p107, %p108
    %p110 = scmp.ne.s32.totalorder %s98, %s99
    %p111 = scmp.eq.s32.totalorder %s21, 1
    %p112 = por %p110, %p111
    %p114 = scmp.ne.s32.totalorder %s99, %s113
    %p115 = scmp.eq.s32.totalorder %s21, 0
    %p116 = por %p114, %p115
    %s118 = sadd.s32 %s117, 1
    %p121 = scmp.eq.s32.totalorder %s15, 1
    %p122 = scmp.ne.s32.totalorder %s117, %s119
    %p123 = scmp.eq.s32.totalorder %s15, 0
    %p124 = por %p122, %p123
    %p125 = scmp.ne.s32.totalorder %s117, %s119
    %p126 = scmp.eq.s32.totalorder %s20, 1
    %p127 = por %p125, %p126
    %p128 = scmp.ne.s32.totalorder %s119, %s120
    %p129 = scmp.eq.s32.totalorder %s20, 0
    %p130 = por %p128, %p129
    %p131 = scmp.ne.s32.totalorder %s119, %s120
    %p132 = scmp.eq.s32.totalorder %s21, 1
    %p133 = por %p131, %p132
    %p135 = scmp.ne.s32.totalorder %s120, %s134
    %p136 = scmp.eq.s32.totalorder %s21, 0
    %p137 = por %p135, %p136
    %s139 = sadd.s32 %s138, 1
    %p142 = scmp.eq.s32.totalorder %s15, 1
    %p143 = scmp.ne.s32.totalorder %s138, %s140
    %p144 = scmp.eq.s32.totalorder %s15, 0
    %p145 = por %p143, %p144
    %p146 = scmp.ne.s32.totalorder %s138, %s140
    %p147 = scmp.eq.s32.totalorder %s20, 1
    %p148 = por %p146, %p147
    %p149 = scmp.ne.s32.totalorder %s140, %s141
    %p150 = scmp.eq.s32.totalorder %s20, 0
    %p151 = por %p149, %p150
    %p152 = scmp.ne.s32.totalorder %s140, %s141
    %p153 = scmp.eq.s32.totalorder %s21, 1
    %p154 = por %p152, %p153
    %p156 = scmp.ne.s32.totalorder %s141, %s155
    %p157 = scmp.eq.s32.totalorder %s21, 0
    %p158 = por %p156, %p157
    %s160 = sadd.s32 %s159, 1
    %p163 = scmp.eq.s32.totalorder %s15, 1
    %p164 = scmp.ne.s32.totalorder %s159, %s161
    %p165 = scmp.eq.s32.totalorder %s15, 0
    %p166 = por %p164, %p165
    %p167 = scmp.ne.s32.totalorder %s159, %s161
    %p168 = scmp.eq.s32.totalorder %s20, 1
    %p169 = por %p167, %p168
    %p170 = scmp.ne.s32.totalorder %s161, %s162
    %p171 = scmp.eq.s32.totalorder %s20, 0
    %p172 = por %p170, %p171
    %p173 = scmp.ne.s32.totalorder %s161, %s162
    %p174 = scmp.eq.s32.totalorder %s21, 1
    %p175 = por %p173, %p174
    %p177 = scmp.ne.s32.totalorder %s162, %s176
    %p178 = scmp.eq.s32.totalorder %s21, 0
    %p179 = por %p177, %p178
    %s181 = sadd.s32 %s180, 1
    %p184 = scmp.eq.s32.totalorder %s15, 1
    %p185 = scmp.ne.s32.totalorder %s180, %s182
    %p186 = scmp.eq.s32.totalorder %s15, 0
    %p187 = por %p185, %p186
    %p188 = scmp.ne.s32.totalorder %s180, %s182
    %p189 = scmp.eq.s32.totalorder %s20, 1
    %p190 = por %p188, %p189
    %p191 = scmp.ne.s32.totalorder %s182, %s183
    %p192 = scmp.eq.s32.totalorder %s20, 0
    %p193 = por %p191, %p192
    %p194 = scmp.ne.s32.totalorder %s182, %s183
    %p195 = scmp.eq.s32.totalorder %s21, 1
    %p196 = por %p194, %p195
    %p198 = scmp.ne.s32.totalorder %s183, %s197
    %p199 = scmp.eq.s32.totalorder %s21, 0
    %p200 = por %p198, %p199
    %s202 = sadd.s32 %s201, 1
    %p205 = scmp.eq.s32.totalorder %s15, 1
    %p206 = scmp.ne.s32.totalorder %s201, %s203
    %p207 = scmp.eq.s32.totalorder %s15, 0
    %p208 = por %p206, %p207
    %p209 = scmp.ne.s32.totalorder %s201, %s203
    %p210 = scmp.eq.s32.totalorder %s20, 1
    %p211 = por %p209, %p210
    %p212 = scmp.ne.s32.totalorder %s203, %s204
    %p213 = scmp.eq.s32.totalorder %s20, 0
    %p214 = por %p212, %p213
    %p215 = scmp.ne.s32.totalorder %s203, %s204
    %p216 = scmp.eq.s32.totalorder %s21, 1
    %p217 = por %p215, %p216
    %p219 = scmp.ne.s32.totalorder %s204, %s218
    %p220 = scmp.eq.s32.totalorder %s21, 0
    %p221 = por %p219, %p220
    %s222 = ssub.s32 %s15, %s22
    %p223 = scmp.eq.s32.totalorder %s222, 0
    %s225 = sadd.s32 %s224, 1
    %s226 = scalar_select %p223, %s224, %s225
    %p229 = pneg %p223
    %p230 = scmp.eq.s32.totalorder %s15, 1
    %p231 = por %p229, %p230
    %p232 = scmp.ne.s32.totalorder %s224, %s227
    %p233 = scmp.eq.s32.totalorder %s15, 0
    %p234 = por %p232, %p233
    %p235 = scmp.ne.s32.totalorder %s224, %s227
    %p236 = scmp.eq.s32.totalorder %s20, 1
    %p237 = por %p235, %p236
    %p238 = scmp.ne.s32.totalorder %s227, %s228
    %p239 = scmp.eq.s32.totalorder %s20, 0
    %p240 = por %p238, %p239
    %p241 = scmp.ne.s32.totalorder %s227, %s228
    %p242 = scmp.eq.s32.totalorder %s21, 1
    %p243 = por %p241, %p242
    %p245 = scmp.ne.s32.totalorder %s228, %s244
    %p246 = scmp.eq.s32.totalorder %s21, 0
    %p247 = por %p245, %p246
    %p248 = scmp.le.s32.totalorder 1, %s15
    %p249 = scmp.lt.s32.totalorder %s15, 3
    %p250 = pnand %p248, %p249
    %p251 = pneg %p250
    // Predicated region
    $region9: #{encoder_forward.7} parent=5 // pred_check
      _
    $region10: #{encoder_forward.7} parent=5 // pred_check_branch
      %253 = sbr.rel (%p250) target = $region12
    $region11: #{encoder_forward.7} parent=5 // pred_region
      %s254 = ssub.s32 %s15, 1
      // Predicated region
      $region13: #{encoder_forward.7} parent=11 // pred_check
        %p255 = pneg %p88
      $region14: #{encoder_forward.7} parent=11 // pred_check_branch
        %257 = sbr.rel (%p255) target = $region16
      $region15: #{encoder_forward.7} parent=11 // pred_region
        _
      $region16: #{encoder_forward.7} parent=11 // pred_fallthru
        _
      // Predicated region
      $region17: #{encoder_forward.7} parent=11 // pred_check
        %p258 = pneg %p109
      $region18: #{encoder_forward.7} parent=11 // pred_check_branch
        %260 = sbr.rel (%p258) target = $region20
      $region19: #{encoder_forward.7} parent=11 // pred_region
        _
      $region20: #{encoder_forward.7} parent=11 // pred_fallthru
        _
      // Predicated region
      $region21: #{encoder_forward.7} parent=11 // pred_check
        %p261 = pneg %p130
      $region22: #{encoder_forward.7} parent=11 // pred_check_branch
        %263 = sbr.rel (%p261) target = $region24
      $region23: #{encoder_forward.7} parent=11 // pred_region
        _
      $region24: #{encoder_forward.7} parent=11 // pred_fallthru
        _
      // Predicated region
      $region25: #{encoder_forward.7} parent=11 // pred_check
        %p264 = pneg %p151
      $region26: #{encoder_forward.7} parent=11 // pred_check_branch
        %266 = sbr.rel (%p264) target = $region28
      $region27: #{encoder_forward.7} parent=11 // pred_region
        _
      $region28: #{encoder_forward.7} parent=11 // pred_fallthru
        _
      // Predicated region
      $region29: #{encoder_forward.7} parent=11 // pred_check
        %p267 = pneg %p172
      $region30: #{encoder_forward.7} parent=11 // pred_check_branch
        %269 = sbr.rel (%p267) target = $region32
      $region31: #{encoder_forward.7} parent=11 // pred_region
        _
      $region32: #{encoder_forward.7} parent=11 // pred_fallthru
        _
      // Predicated region
      $region33: #{encoder_forward.7} parent=11 // pred_check
        %p270 = pneg %p193
      $region34: #{encoder_forward.7} parent=11 // pred_check_branch
        %272 = sbr.rel (%p270) target = $region36
      $region35: #{encoder_forward.7} parent=11 // pred_region
        _
      $region36: #{encoder_forward.7} parent=11 // pred_fallthru
        _
      // Predicated region
      $region37: #{encoder_forward.7} parent=11 // pred_check
        %p273 = pneg %p214
      $region38: #{encoder_forward.7} parent=11 // pred_check_branch
        %275 = sbr.rel (%p273) target = $region40
      $region39: #{encoder_forward.7} parent=11 // pred_region
        _
      $region40: #{encoder_forward.7} parent=11 // pred_fallthru
        _
    $region12: #{encoder_forward.7} parent=5 // pred_fallthru
      _
    %p276 = scmp.lt.s32.totalorder %s15, 2
    // Predicated region
    $region41: #{encoder_forward.7} parent=5 // pred_check
      %p277 = pneg %p276
    $region42: #{encoder_forward.7} parent=5 // pred_check_branch
      %279 = sbr.rel (%p277) target = $region44
    $region43: #{encoder_forward.7} parent=5 // pred_region
      // Predicated region
      $region45: #{encoder_forward.7} parent=43 // pred_check
        %p280 = pneg %p35
      $region46: #{encoder_forward.7} parent=43 // pred_check_branch
        %282 = sbr.rel (%p280) target = $region48
      $region47: #{encoder_forward.7} parent=43 // pred_region
        %p283 = scmp.lt.s32.totalorder %s15, 1
        %s284 = scalar_select %p283, %s15, 1
        %s285 = smul.addr %s284, 4
        %s286 = scalar_lea.vmem %s0, %s285
      $region48: #{encoder_forward.7} parent=43 // pred_fallthru
        _
      // Predicated region
      $region49: #{encoder_forward.7} parent=43 // pred_check
        %p287 = pneg %p61
      $region50: #{encoder_forward.7} parent=43 // pred_check_branch
        %289 = sbr.rel (%p287) target = $region52
      $region51: #{encoder_forward.7} parent=43 // pred_region
        %p290 = scmp.lt.s32.totalorder %s15, 1
        %s291 = scalar_select %p290, %s15, 1
        %s292 = smul.addr %s291, 4
        %s293 = scalar_lea.vmem %s1, %s292
      $region52: #{encoder_forward.7} parent=43 // pred_fallthru
        _
    $region44: #{encoder_forward.7} parent=5 // pred_fallthru
      _
    %p294 = scmp.le.s32.totalorder 1, %s15
    %p295 = scmp.lt.s32.totalorder %s15, 3
    %p296 = pnand %p294, %p295
    %p297 = pneg %p296
    // Predicated region
    $region53: #{encoder_forward.7} parent=5 // pred_check
      _
    $region54: #{encoder_forward.7} parent=5 // pred_check_branch
      %299 = sbr.rel (%p296) target = $region56
    $region55: #{encoder_forward.7} parent=5 // pred_region
      %s300 = ssub.s32 %s15, 1
      %p301 = scmp.lt.s32.totalorder %s20, 1
      %s302 = scalar_select %p301, %s20, 1
      %s303 = smul.addr %s302, 4
      %s304 = scalar_lea.vmem %s0, %s303
      %p305 = pneg %p41
      %p306 = pneg %p38
      %p307 = scmp.lt.s32.totalorder %s20, 1
      %s308 = scalar_select %p307, %s20, 1
      %s309 = smul.addr %s308, 4
      %s310 = scalar_lea.vmem %s1, %s309
      %p311 = pneg %p67
      %p312 = pneg %p64
      %p313 = pneg %p88
      %p314 = pneg %p85
      %p315 = pneg %p109
      %p316 = pneg %p106
      %p317 = pneg %p130
      %p318 = pneg %p127
      %p319 = pneg %p151
      %p320 = pneg %p148
      %p321 = pneg %p172
      %p322 = pneg %p169
      %p323 = pneg %p193
      %p324 = pneg %p190
      %p325 = pneg %p214
      %p326 = pneg %p211
      %p327 = pneg %p240
      %p328 = pneg %p237
      %p329 = scmp.lt.s32.totalorder %s20, 1
      %s330 = scalar_select %p329, %s20, 1
      %s331 = smul.addr %s330, 4
      %s332 = scalar_lea.vmem %s9, %s331
      %p333 = scmp.lt.s32.totalorder %s20, 1
      %s334 = scalar_select %p333, %s20, 1
      %s335 = smul.addr %s334, 4
      %s336 = scalar_lea.vmem %s0, %s335
      %p337 = scmp.lt.s32.totalorder %s20, 1
      %s338 = scalar_select %p337, %s20, 1
      %s339 = smul.addr %s338, 4
      %s340 = scalar_lea.vmem %s1, %s339
      %p341 = scmp.lt.s32.totalorder %s20, 1
      %s342 = scalar_select %p341, %s20, 1
      %s343 = smul.addr %s342, 4
      %s344 = scalar_lea.vmem %s9, %s343
      %v346 = vld [vmem:[%s336] sm:$0xf]
      %v347 = vunpack.c.l.bf16 %v346
      %v348 = vld [vmem:[%s2] sm:$0x1]
      %v349 = vunpack.c.l.bf16 %v348
      %v350 = vmul.f32 %v347, %v347
      %vm351 = vcmask 523264
      %v352 = vsel %vm351, %v350, 0.0
      %353 = vadd.xlane.f32.xlu0 %v352
      %v354 = vpop.xlane.xlu0 %353
      %v355 = vrcp.pop 64.0
      %v356 = vmul.f32 %v354, %v355
      %v357 = vadd.f32 %v356, 1e-06
      %v358 = vrsqrt.pop %v357
      %v359 = vmul.f32 %v347, %v358
      %v360 = vlaneseq
      %v361 = vshrl.u32 %v360, 7
      %v362 = vsub.s32 0, %v361
      %v363 = vrot.slane %v349, %v362
      %v364 = vmul.f32 %v359, %v363
      %v365 = vld [vmem:[%s3] sm:$0xff]
      %v366 = vld [vmem:[%s3 + $0x8] sm:$0xff]
      %v367 = vld [vmem:[%s3 + $0x10] sm:$0xff]
      %v368 = vld [vmem:[%s3 + $0x18] sm:$0xff]
      %v369 = vld [vmem:[%s3 + $0x20] sm:$0xff]
      %v370 = vld [vmem:[%s3 + $0x28] sm:$0xff]
      %v371 = vld [vmem:[%s3 + $0x30] sm:$0xff]
      %v372 = vld [vmem:[%s3 + $0x38] sm:$0xff]
      %v373 = vpack.c.bf16 %v364, %v364
      %v382 = vunpack.c.l.b16 %v365
      %v383 = vunpack.c.l.b16 %v366
      %v384 = vunpack.c.l.b16 %v367
      %v385 = vunpack.c.l.b16 %v368
      %v386 = vunpack.c.l.b16 %v369
      %v387 = vunpack.c.l.b16 %v370
      %v388 = vunpack.c.l.b16 %v371
      %v389 = vunpack.c.l.b16 %v372
      %v390 = vpack.c.b16 %v383, %v382
      %v391 = vpack.c.b16 %v385, %v384
      %v392 = vpack.c.b16 %v387, %v386
      %v393 = vpack.c.b16 %v389, %v388
      %v399 = vsel %vm351, %v373, 0
      %401 = vmatprep.subr.bf16.mxu0 0
      %402 = vmatpush1.bf16.msra.mxu0 %v390
      %403 = vmatprep.subr.bf16.mxu0 0
      %404 = vmatpush1.bf16.msra.mxu0 %v391
      %405 = vmatprep.subr.bf16.mxu0 0
      %406 = vmatpush1.bf16.msra.mxu0 %v392
      %407 = vmatprep.subr.bf16.mxu0 0
      %408 = vmatpush1.bf16.msra.mxu0 %v393
      %409 = vmatprep.subr.bf16.mxu0 0
      %410 = vmatpush1.bf16.msra.mxu0 0
      %411 = vmatprep.subr.bf16.mxu0 0
      %412 = vmatpush1.bf16.msra.mxu0 0
      %413 = vmatprep.subr.bf16.mxu0 0
      %414 = vmatpush1.bf16.msra.mxu0 0
      %415 = vmatprep.subr.bf16.mxu0 0
      %416 = vmatpush1.bf16.msra.mxu0 0
      %417 = vmatprep.subr.bf16.mxu0 0
      %418 = vmatpush1.bf16.msra.mxu0 0
      %419 = vmatprep.subr.bf16.mxu0 0
      %420 = vmatpush1.bf16.msra.mxu0 0
      %421 = vmatprep.subr.bf16.mxu0 0
      %422 = vmatpush1.bf16.msra.mxu0 0
      %423 = vmatprep.subr.bf16.mxu0 0
      %424 = vmatpush1.bf16.msra.mxu0 0
      %425 = vmatprep.subr.bf16.mxu0 0
      %426 = vmatpush1.bf16.msra.mxu0 0
      %427 = vmatprep.subr.bf16.mxu0 0
      %428 = vmatpush1.bf16.msra.mxu0 0
      %429 = vmatprep.subr.bf16.mxu0 0
      %430 = vmatpush1.bf16.msra.mxu0 0
      %431 = vmatprep.subr.bf16.mxu0 0
      %432 = vmatpush1.bf16.msra.mxu0 0
      %433 = vmatprep.mubr.bf16.mxu0 0
      %434 = vmatmul.mubr.bf16.gmra.mrb[0].mxu0 %v399
      %v435 = vpop.f32.mrb[0].mxu0
      %v436 = vadd.f32 0.0, %v435
      %v437 = vpop.f32.mrb[0].mxu0
      %v438 = vpop.f32.mrb[0].mxu0
      %v439 = vpop.f32.mrb[0].mxu0
      %440 = vdwg.mxu0
      %v441 = vld [vmem:[%s340] sm:$0xf]
      %v442 = vunpack.c.h.b16 %v365
      %v443 = vunpack.c.h.b16 %v366
      %v444 = vunpack.c.h.b16 %v367
      %v445 = vunpack.c.h.b16 %v368
      %v446 = vunpack.c.h.b16 %v369
      %v447 = vunpack.c.h.b16 %v370
      %v448 = vunpack.c.h.b16 %v371
      %v449 = vunpack.c.h.b16 %v372
      %v450 = vpack.c.b16 %v443, %v442
      %v451 = vpack.c.b16 %v445, %v444
      %v452 = vpack.c.b16 %v447, %v446
      %v453 = vpack.c.b16 %v449, %v448
      %454 = vrot.lane.b32.xlu0 %v390, 64
      %v455 = vpop.permute.xlu0 %454
      %456 = vrot.lane.b32.xlu0 %v450, 64
      %v457 = vpop.permute.xlu0 %456
      %458 = vrot.lane.b32.xlu0 %v391, 64
      %v459 = vpop.permute.xlu0 %458
      %460 = vrot.lane.b32.xlu0 %v451, 64
      %v461 = vpop.permute.xlu0 %460
      %462 = vrot.lane.b32.xlu0 %v392, 64
      %v463 = vpop.permute.xlu0 %462
      %464 = vrot.lane.b32.xlu0 %v452, 64
      %v465 = vpop.permute.xlu0 %464
      %466 = vrot.lane.b32.xlu0 %v393, 64
      %v467 = vpop.permute.xlu0 %466
      %468 = vrot.lane.b32.xlu0 %v453, 64
      %v469 = vpop.permute.xlu0 %468
      %vm470 = vcmask 523264
      %v471 = vsel %vm470, %v455, %v457
      %v472 = vsel %vm470, %v459, %v461
      %v473 = vsel %vm470, %v463, %v465
      %v474 = vsel %vm470, %v467, %v469
      %v480 = vsel %vm351, %v441, 0
      %482 = vmatprep.subr.bf16.mxu0 0
      %483 = vmatpush1.bf16.msra.mxu0 %v471
      %484 = vmatprep.subr.bf16.mxu0 0
      %485 = vmatpush1.bf16.msra.mxu0 %v472
      %486 = vmatprep.subr.bf16.mxu0 0
      %487 = vmatpush1.bf16.msra.mxu0 %v473
      %488 = vmatprep.subr.bf16.mxu0 0
      %489 = vmatpush1.bf16.msra.mxu0 %v474
      %490 = vmatprep.subr.bf16.mxu0 0
      %491 = vmatpush1.bf16.msra.mxu0 0
      %492 = vmatprep.subr.bf16.mxu0 0
      %493 = vmatpush1.bf16.msra.mxu0 0
      %494 = vmatprep.subr.bf16.mxu0 0
      %495 = vmatpush1.bf16.msra.mxu0 0
      %496 = vmatprep.subr.bf16.mxu0 0
      %497 = vmatpush1.bf16.msra.mxu0 0
      %498 = vmatprep.subr.bf16.mxu0 0
      %499 = vmatpush1.bf16.msra.mxu0 0
      %500 = vmatprep.subr.bf16.mxu0 0
      %501 = vmatpush1.bf16.msra.mxu0 0
      %502 = vmatprep.subr.bf16.mxu0 0
      %503 = vmatpush1.bf16.msra.mxu0 0
      %504 = vmatprep.subr.bf16.mxu0 0
      %505 = vmatpush1.bf16.msra.mxu0 0
      %506 = vmatprep.subr.bf16.mxu0 0
      %507 = vmatpush1.bf16.msra.mxu0 0
      %508 = vmatprep.subr.bf16.mxu0 0
      %509 = vmatpush1.bf16.msra.mxu0 0
      %510 = vmatprep.subr.bf16.mxu0 0
      %511 = vmatpush1.bf16.msra.mxu0 0
      %512 = vmatprep.subr.bf16.mxu0 0
      %513 = vmatpush1.bf16.msra.mxu0 0
      %514 = vmatprep.mubr.bf16.mxu0 0
      %515 = vmatmul.mubr.bf16.gmra.mrb[0].mxu0 %v480
      %v516 = vpop.f32.mrb[0].mxu0
      %v517 = vadd.f32 0.0, %v516
      %v518 = vpop.f32.mrb[0].mxu0
      %v519 = vpop.f32.mrb[0].mxu0
      %v520 = vpop.f32.mrb[0].mxu0
      %521 = vdwg.mxu0
      %v522 = vld [vmem:[%s5] sm:$0xff]
      %v523 = vld [vmem:[%s6] sm:$0xff]
      %v524 = vld [vmem:[%s7] sm:$0xff]
      %v525 = vld [vmem:[%s8] sm:$0xff]
      %v526 = vld [vmem:[%s4] sm:$0xf]
      %v527 = vld [vmem:[%s4 + $0x4] sm:$0xf]
      %v528 = vld [vmem:[%s4 + $0x8] sm:$0xf]
      %v529 = vld [vmem:[%s4 + $0xc] sm:$0xf]
      %v530 = vld [vmem:[%s4 + $0x10] sm:$0xf]
      %v531 = vld [vmem:[%s4 + $0x14] sm:$0xf]
      %v532 = vld [vmem:[%s4 + $0x18] sm:$0xf]
      %v533 = vld [vmem:[%s4 + $0x1c] sm:$0xf]
      %v534 = vsub.f32 0.0, %v436
      %536 = vrot.lane.b32.xlu0 %v534, 120
      %v537 = vpop.permute.xlu0 %536
      %540 = vrot.lane.b32.xlu0 %v436, 8
      %v541 = vpop.permute.xlu0 %540
      %vm543 = vcmask 64512
      %v544 = vsel %vm543, %v537, %v541
      %v545 = vmul.f32 %v436, %v522
      %v546 = vmul.f32 %v544, %v523
      %v547 = vadd.f32 %v545, %v546
      %v548 = vsub.f32 0.0, %v517
      %550 = vrot.lane.b32.xlu0 %v548, 120
      %v551 = vpop.permute.xlu0 %550
      %554 = vrot.lane.b32.xlu0 %v517, 8
      %v555 = vpop.permute.xlu0 %554
      %v557 = vsel %vm543, %v551, %v555
      %v558 = vmul.f32 %v517, %v524
      %v559 = vmul.f32 %v557, %v525
      %v560 = vadd.f32 %v558, %v559
      %vm561 = vcmask 130048
      %v563 = vsel %vm561, %v547, 0
      %v566 = vsel %vm561, %v560, 0
      %568 = vmatprep.subr.mxu0 0.0
      %569 = vmatpush1.xpose.msra.mxu0 %v566
      %570 = vmatprep.subr.mxu0 0.0
      %571 = vmatpush1.xpose.msra.mxu0 0.0
      %572 = vmatprep.subr.mxu0 0.0
      %573 = vmatpush1.xpose.msra.mxu0 0.0
      %574 = vmatprep.subr.mxu0 0.0
      %575 = vmatpush1.xpose.msra.mxu0 0.0
      %576 = vmatprep.subr.mxu0 0.0
      %577 = vmatpush1.xpose.msra.mxu0 0.0
      %578 = vmatprep.subr.mxu0 0.0
      %579 = vmatpush1.xpose.msra.mxu0 0.0
      %580 = vmatprep.subr.mxu0 0.0
      %581 = vmatpush1.xpose.msra.mxu0 0.0
      %582 = vmatprep.subr.mxu0 0.0
      %583 = vmatpush1.xpose.msra.mxu0 0.0
      %584 = vmatprep.subr.mxu0 0.0
      %585 = vmatpush1.xpose.msra.mxu0 0.0
      %586 = vmatprep.subr.mxu0 0.0
      %587 = vmatpush1.xpose.msra.mxu0 0.0
      %588 = vmatprep.subr.mxu0 0.0
      %589 = vmatpush1.xpose.msra.mxu0 0.0
      %590 = vmatprep.subr.mxu0 0.0
      %591 = vmatpush1.xpose.msra.mxu0 0.0
      %592 = vmatprep.subr.mxu0 0.0
      %593 = vmatpush1.xpose.msra.mxu0 0.0
      %594 = vmatprep.subr.mxu0 0.0
      %595 = vmatpush1.xpose.msra.mxu0 0.0
      %596 = vmatprep.subr.mxu0 0.0
      %597 = vmatpush1.xpose.msra.mxu0 0.0
      %598 = vmatprep.subr.mxu0 0.0
      %599 = vmatpush1.xpose.msra.mxu0 0.0
      %600 = vmatprep.subr.mxu0 0.0
      %601 = vmatpush1.xpose.msra.mxu0 0.0
      %602 = vmatprep.subr.mxu0 0.0
      %603 = vmatpush1.xpose.msra.mxu0 0.0
      %604 = vmatprep.subr.mxu0 0.0
      %605 = vmatpush1.xpose.msra.mxu0 0.0
      %606 = vmatprep.subr.mxu0 0.0
      %607 = vmatpush1.xpose.msra.mxu0 0.0
      %608 = vmatprep.subr.mxu0 0.0
      %609 = vmatpush1.xpose.msra.mxu0 0.0
      %610 = vmatprep.subr.mxu0 0.0
      %611 = vmatpush1.xpose.msra.mxu0 0.0
      %612 = vmatprep.subr.mxu0 0.0
      %613 = vmatpush1.xpose.msra.mxu0 0.0
      %614 = vmatprep.subr.mxu0 0.0
      %615 = vmatpush1.xpose.msra.mxu0 0.0
      %616 = vmatprep.subr.mxu0 0.0
      %617 = vmatpush1.xpose.msra.mxu0 0.0
      %618 = vmatprep.subr.mxu0 0.0
      %619 = vmatpush1.xpose.msra.mxu0 0.0
      %620 = vmatprep.subr.mxu0 0.0
      %621 = vmatpush1.xpose.msra.mxu0 0.0
      %622 = vmatprep.subr.mxu0 0.0
      %623 = vmatpush1.xpose.msra.mxu0 0.0
      %624 = vmatprep.subr.mxu0 0.0
      %625 = vmatpush1.xpose.msra.mxu0 0.0
      %626 = vmatprep.subr.mxu0 0.0
      %627 = vmatpush1.xpose.msra.mxu0 0.0
      %628 = vmatprep.subr.mxu0 0.0
      %629 = vmatpush1.xpose.msra.mxu0 0.0
      %630 = vmatprep.subr.mxu0 0.0
      %631 = vmatpush1.xpose.msra.mxu0 0.0
      %632 = vmatprep.mubr.f32.mxu0 0.0
      %633 = vmatmul.mubr.f32.gmra.mrb[0].mxu0 %v563
      %v634 = vpop.f32.mrb[0].mxu0
      %v635 = vadd.f32 0.0, %v634
      %v636 = vpop.f32.mrb[0].mxu0
      %637 = vdwg.mxu0
      %v638 = vmul.f32 %v635, 0.25
      %v639 = vsel %vm543, %v638, -inf
      %640 = vmax.xlane.f32.xlu0 %v639
      %v641 = vpop.xlane.xlu0 %640
      %v642 = vsub.f32 %v638, %v641
      %v643 = vmul.f32 %v642, 1.442695
      %v644 = vpow.pop %v643
      %v645 = vsel %vm543, %v644, 0.0
      %646 = vadd.xlane.f32.xlu0 %v645
      %v647 = vpop.xlane.xlu0 %646
      %648 = vrot.lane.b32.xlu0 %v517, 64
      %v649 = vpop.permute.xlu0 %648
      %v652 = vsel %vm543, %v644, 0
      %654 = vmatprep.subr.mxu0 0.0
      %655 = vmatpush1.msra.mxu0 %v649
      %656 = vmatprep.subr.mxu0 0.0
      %657 = vmatpush1.msra.mxu0 0.0
      %658 = vmatprep.subr.mxu0 0.0
      %659 = vmatpush1.msra.mxu0 0.0
      %660 = vmatprep.subr.mxu0 0.0
      %661 = vmatpush1.msra.mxu0 0.0
      %662 = vmatprep.subr.mxu0 0.0
      %663 = vmatpush1.msra.mxu0 0.0
      %664 = vmatprep.subr.mxu0 0.0
      %665 = vmatpush1.msra.mxu0 0.0
      %666 = vmatprep.subr.mxu0 0.0
      %667 = vmatpush1.msra.mxu0 0.0
      %668 = vmatprep.subr.mxu0 0.0
      %669 = vmatpush1.msra.mxu0 0.0
      %670 = vmatprep.subr.mxu0 0.0
      %671 = vmatpush1.msra.mxu0 0.0
      %672 = vmatprep.subr.mxu0 0.0
      %673 = vmatpush1.msra.mxu0 0.0
      %674 = vmatprep.subr.mxu0 0.0
      %675 = vmatpush1.msra.mxu0 0.0
      %676 = vmatprep.subr.mxu0 0.0
      %677 = vmatpush1.msra.mxu0 0.0
      %678 = vmatprep.subr.mxu0 0.0
      %679 = vmatpush1.msra.mxu0 0.0
      %680 = vmatprep.subr.mxu0 0.0
      %681 = vmatpush1.msra.mxu0 0.0
      %682 = vmatprep.subr.mxu0 0.0
      %683 = vmatpush1.msra.mxu0 0.0
      %684 = vmatprep.subr.mxu0 0.0
      %685 = vmatpush1.msra.mxu0 0.0
      %686 = vmatprep.subr.mxu0 0.0
      %687 = vmatpush1.msra.mxu0 0.0
      %688 = vmatprep.subr.mxu0 0.0
      %689 = vmatpush1.msra.mxu0 0.0
      %690 = vmatprep.subr.mxu0 0.0
      %691 = vmatpush1.msra.mxu0 0.0
      %692 = vmatprep.subr.mxu0 0.0
      %693 = vmatpush1.msra.mxu0 0.0
      %694 = vmatprep.subr.mxu0 0.0
      %695 = vmatpush1.msra.mxu0 0.0
      %696 = vmatprep.subr.mxu0 0.0
      %697 = vmatpush1.msra.mxu0 0.0
      %698 = vmatprep.subr.mxu0 0.0
      %699 = vmatpush1.msra.mxu0 0.0
      %700 = vmatprep.subr.mxu0 0.0
      %701 = vmatpush1.msra.mxu0 0.0
      %702 = vmatprep.subr.mxu0 0.0
      %703 = vmatpush1.msra.mxu0 0.0
      %704 = vmatprep.subr.mxu0 0.0
      %705 = vmatpush1.msra.mxu0 0.0
      %706 = vmatprep.subr.mxu0 0.0
      %707 = vmatpush1.msra.mxu0 0.0
      %708 = vmatprep.subr.mxu0 0.0
      %709 = vmatpush1.msra.mxu0 0.0
      %710 = vmatprep.subr.mxu0 0.0
      %711 = vmatpush1.msra.mxu0 0.0
      %712 = vmatprep.subr.mxu0 0.0
      %713 = vmatpush1.msra.mxu0 0.0
      %714 = vmatprep.subr.mxu0 0.0
      %715 = vmatpush1.msra.mxu0 0.0
      %716 = vmatprep.subr.mxu0 0.0
      %717 = vmatpush1.msra.mxu0 0.0
      %718 = vmatprep.mubr.f32.mxu0 0.0
      %719 = vmatmul.mubr.f32.gmra.mrb[0].mxu0 %v652
      %v720 = vpop.f32.mrb[0].mxu0
      %v721 = vadd.f32 0.0, %v720
      %v722 = vpop.f32.mrb[0].mxu0
      %723 = vdwg.mxu0
      %v724 = vrcp.pop %v647
      %v725 = vmul.f32 %v721, %v724
      %v726 = vpack.c.bf16 %v725, %v725
      %v729 = vunpack.c.l.b16 %v526
      %v730 = vunpack.c.l.b16 %v527
      %v731 = vpack.c.b16 %v730, %v729
      %v734 = vsel %vm561, %v726, 0
      %736 = vmatprep.subr.bf16.mxu0 0
      %737 = vmatpush1.bf16.msra.mxu0 %v731
      %738 = vmatprep.subr.bf16.mxu0 0
      %739 = vmatpush1.bf16.msra.mxu0 0
      %740 = vmatprep.subr.bf16.mxu0 0
      %741 = vmatpush1.bf16.msra.mxu0 0
      %742 = vmatprep.subr.bf16.mxu0 0
      %743 = vmatpush1.bf16.msra.mxu0 0
      %744 = vmatprep.subr.bf16.mxu0 0
      %745 = vmatpush1.bf16.msra.mxu0 0
      %746 = vmatprep.subr.bf16.mxu0 0
      %747 = vmatpush1.bf16.msra.mxu0 0
      %748 = vmatprep.subr.bf16.mxu0 0
      %749 = vmatpush1.bf16.msra.mxu0 0
      %750 = vmatprep.subr.bf16.mxu0 0
      %751 = vmatpush1.bf16.msra.mxu0 0
      %752 = vmatprep.subr.bf16.mxu0 0
      %753 = vmatpush1.bf16.msra.mxu0 0
      %754 = vmatprep.subr.bf16.mxu0 0
      %755 = vmatpush1.bf16.msra.mxu0 0
      %756 = vmatprep.subr.bf16.mxu0 0
      %757 = vmatpush1.bf16.msra.mxu0 0
      %758 = vmatprep.subr.bf16.mxu0 0
      %759 = vmatpush1.bf16.msra.mxu0 0
      %760 = vmatprep.subr.bf16.mxu0 0
      %761 = vmatpush1.bf16.msra.mxu0 0
      %762 = vmatprep.subr.bf16.mxu0 0
      %763 = vmatpush1.bf16.msra.mxu0 0
      %764 = vmatprep.subr.bf16.mxu0 0
      %765 = vmatpush1.bf16.msra.mxu0 0
      %766 = vmatprep.subr.bf16.mxu0 0
      %767 = vmatpush1.bf16.msra.mxu0 0
      %768 = vmatprep.mubr.bf16.mxu0 0
      %769 = vmatmul.mubr.bf16.gmra.mrb[0].mxu0 %v734
      %v770 = vpop.f32.mrb[0].mxu0
      %v771 = vadd.f32 0.0, %v770
      %v772 = vpop.f32.mrb[0].mxu0
      %v773 = vpop.f32.mrb[0].mxu0
      %v774 = vpop.f32.mrb[0].mxu0
      %775 = vdwg.mxu0
      %v776 = vadd.f32 %v347, %v771
      %777 = vrot.lane.b32.xlu0 %v534, 104
      %v778 = vpop.permute.xlu0 %777
      %780 = vrot.lane.b32.xlu0 %v436, 120
      %v781 = vpop.permute.xlu0 %780
      %v783 = vsel %vm543, %v778, %v781
      %785 = vrot.lane.b32.xlu0 %v522, 16
      %v786 = vpop.permute.xlu0 %785
      %v788 = vmul.f32 %v436, %v786
      %v789 = vmul.f32 %v783, %v523
      %791 = vrot.lane.b32.xlu0 %v789, 16
      %v792 = vpop.permute.xlu0 %791
      %v794 = vadd.f32 %v788, %v792
      %795 = vrot.lane.b32.xlu0 %v548, 104
      %v796 = vpop.permute.xlu0 %795
      %798 = vrot.lane.b32.xlu0 %v517, 120
      %v799 = vpop.permute.xlu0 %798
      %v801 = vsel %vm543, %v796, %v799
      %803 = vrot.lane.b32.xlu0 %v524, 16
      %v804 = vpop.permute.xlu0 %803
      %v806 = vmul.f32 %v517, %v804
      %v807 = vmul.f32 %v801, %v525
      %809 = vrot.lane.b32.xlu0 %v807, 16
      %v810 = vpop.permute.xlu0 %809
      %v812 = vadd.f32 %v806, %v810
      %814 = vrot.lane.b32.xlu0 %v794, 112
      %v815 = vpop.permute.xlu0 %814
      %817 = vrot.lane.b32.xlu0 %v812, 112
      %v818 = vpop.permute.xlu0 %817
      %v819 = vsel %vm561, %v815, 0
      %v821 = vsel %vm561, %v818, 0
      %823 = vmatprep.subr.mxu0 0.0
      %824 = vmatpush1.xpose.msra.mxu0 %v821
      %825 = vmatprep.subr.mxu0 0.0
      %826 = vmatpush1.xpose.msra.mxu0 0.0
      %827 = vmatprep.subr.mxu0 0.0
      %828 = vmatpush1.xpose.msra.mxu0 0.0
      %829 = vmatprep.subr.mxu0 0.0
      %830 = vmatpush1.xpose.msra.mxu0 0.0
      %831 = vmatprep.subr.mxu0 0.0
      %832 = vmatpush1.xpose.msra.mxu0 0.0
      %833 = vmatprep.subr.mxu0 0.0
      %834 = vmatpush1.xpose.msra.mxu0 0.0
      %835 = vmatprep.subr.mxu0 0.0
      %836 = vmatpush1.xpose.msra.mxu0 0.0
      %837 = vmatprep.subr.mxu0 0.0
      %838 = vmatpush1.xpose.msra.mxu0 0.0
      %839 = vmatprep.subr.mxu0 0.0
      %840 = vmatpush1.xpose.msra.mxu0 0.0
      %841 = vmatprep.subr.mxu0 0.0
      %842 = vmatpush1.xpose.msra.mxu0 0.0
      %843 = vmatprep.subr.mxu0 0.0
      %844 = vmatpush1.xpose.msra.mxu0 0.0
      %845 = vmatprep.subr.mxu0 0.0
      %846 = vmatpush1.xpose.msra.mxu0 0.0
      %847 = vmatprep.subr.mxu0 0.0
      %848 = vmatpush1.xpose.msra.mxu0 0.0
      %849 = vmatprep.subr.mxu0 0.0
      %850 = vmatpush1.xpose.msra.mxu0 0.0
      %851 = vmatprep.subr.mxu0 0.0
      %852 = vmatpush1.xpose.msra.mxu0 0.0
      %853 = vmatprep.subr.mxu0 0.0
      %854 = vmatpush1.xpose.msra.mxu0 0.0
      %855 = vmatprep.subr.mxu0 0.0
      %856 = vmatpush1.xpose.msra.mxu0 0.0
      %857 = vmatprep.subr.mxu0 0.0
      %858 = vmatpush1.xpose.msra.mxu0 0.0
      %859 = vmatprep.subr.mxu0 0.0
      %860 = vmatpush1.xpose.msra.mxu0 0.0
      %861 = vmatprep.subr.mxu0 0.0
      %862 = vmatpush1.xpose.msra.mxu0 0.0
      %863 = vmatprep.subr.mxu0 0.0
      %864 = vmatpush1.xpose.msra.mxu0 0.0
      %865 = vmatprep.subr.mxu0 0.0
      %866 = vmatpush1.xpose.msra.mxu0 0.0
      %867 = vmatprep.subr.mxu0 0.0
      %868 = vmatpush1.xpose.msra.mxu0 0.0
      %869 = vmatprep.subr.mxu0 0.0
      %870 = vmatpush1.xpose.msra.mxu0 0.0
      %871 = vmatprep.subr.mxu0 0.0
      %872 = vmatpush1.xpose.msra.mxu0 0.0
      %873 = vmatprep.subr.mxu0 0.0
      %874 = vmatpush1.xpose.msra.mxu0 0.0
      %875 = vmatprep.subr.mxu0 0.0
      %876 = vmatpush1.xpose.msra.mxu0 0.0
      %877 = vmatprep.subr.mxu0 0.0
      %878 = vmatpush1.xpose.msra.mxu0 0.0
      %879 = vmatprep.subr.mxu0 0.0
      %880 = vmatpush1.xpose.msra.mxu0 0.0
      %881 = vmatprep.subr.mxu0 0.0
      %882 = vmatpush1.xpose.msra.mxu0 0.0
      %883 = vmatprep.subr.mxu0 0.0
      %884 = vmatpush1.xpose.msra.mxu0 0.0
      %885 = vmatprep.subr.mxu0 0.0
      %886 = vmatpush1.xpose.msra.mxu0 0.0
      %887 = vmatprep.mubr.f32.mxu0 0.0
      %888 = vmatmul.mubr.f32.gmra.mrb[0].mxu0 %v819
      %v889 = vpop.f32.mrb[0].mxu0
      %v890 = vadd.f32 0.0, %v889
      %v891 = vpop.f32.mrb[0].mxu0
      %892 = vdwg.mxu0
      %v893 = vmul.f32 %v890, 0.25
      %v894 = vsel %vm543, %v893, -inf
      %895 = vmax.xlane.f32.xlu0 %v894
      %v896 = vpop.xlane.xlu0 %895
      %v897 = vsub.f32 %v893, %v896
      %v898 = vmul.f32 %v897, 1.442695
      %v899 = vpow.pop %v898
      %v900 = vsel %vm543, %v899, 0.0
      %901 = vadd.xlane.f32.xlu0 %v900
      %v902 = vpop.xlane.xlu0 %901
      %903 = vrot.lane.b32.xlu0 %v517, 48
      %v904 = vpop.permute.xlu0 %903
      %v907 = vsel %vm543, %v899, 0
      %909 = vmatprep.subr.mxu0 0.0
      %910 = vmatpush1.msra.mxu0 %v904
      %911 = vmatprep.subr.mxu0 0.0
      %912 = vmatpush1.msra.mxu0 0.0
      %913 = vmatprep.subr.mxu0 0.0
      %914 = vmatpush1.msra.mxu0 0.0
      %915 = vmatprep.subr.mxu0 0.0
      %916 = vmatpush1.msra.mxu0 0.0
      %917 = vmatprep.subr.mxu0 0.0
      %918 = vmatpush1.msra.mxu0 0.0
      %919 = vmatprep.subr.mxu0 0.0
      %920 = vmatpush1.msra.mxu0 0.0
      %921 = vmatprep.subr.mxu0 0.0
      %922 = vmatpush1.msra.mxu0 0.0
      %923 = vmatprep.subr.mxu0 0.0
      %924 = vmatpush1.msra.mxu0 0.0
      %925 = vmatprep.subr.mxu0 0.0
      %926 = vmatpush1.msra.mxu0 0.0
      %927 = vmatprep.subr.mxu0 0.0
      %928 = vmatpush1.msra.mxu0 0.0
      %929 = vmatprep.subr.mxu0 0.0
      %930 = vmatpush1.msra.mxu0 0.0
      %931 = vmatprep.subr.mxu0 0.0
      %932 = vmatpush1.msra.mxu0 0.0
      %933 = vmatprep.subr.mxu0 0.0
      %934 = vmatpush1.msra.mxu0 0.0
      %935 = vmatprep.subr.mxu0 0.0
      %936 = vmatpush1.msra.mxu0 0.0
      %937 = vmatprep.subr.mxu0 0.0
      %938 = vmatpush1.msra.mxu0 0.0
      %939 = vmatprep.subr.mxu0 0.0
      %940 = vmatpush1.msra.mxu0 0.0
      %941 = vmatprep.subr.mxu0 0.0
      %942 = vmatpush1.msra.mxu0 0.0
      %943 = vmatprep.subr.mxu0 0.0
      %944 = vmatpush1.msra.mxu0 0.0
      %945 = vmatprep.subr.mxu0 0.0
      %946 = vmatpush1.msra.mxu0 0.0
      %947 = vmatprep.subr.mxu0 0.0
      %948 = vmatpush1.msra.mxu0 0.0
      %949 = vmatprep.subr.mxu0 0.0
      %950 = vmatpush1.msra.mxu0 0.0
      %951 = vmatprep.subr.mxu0 0.0
      %952 = vmatpush1.msra.mxu0 0.0
      %953 = vmatprep.subr.mxu0 0.0
      %954 = vmatpush1.msra.mxu0 0.0
      %955 = vmatprep.subr.mxu0 0.0
      %956 = vmatpush1.msra.mxu0 0.0
      %957 = vmatprep.subr.mxu0 0.0
      %958 = vmatpush1.msra.mxu0 0.0
      %959 = vmatprep.subr.mxu0 0.0
      %960 = vmatpush1.msra.mxu0 0.0
      %961 = vmatprep.subr.mxu0 0.0
      %962 = vmatpush1.msra.mxu0 0.0
      %963 = vmatprep.subr.mxu0 0.0
      %964 = vmatpush1.msra.mxu0 0.0
      %965 = vmatprep.subr.mxu0 0.0
      %966 = vmatpush1.msra.mxu0 0.0
      %967 = vmatprep.subr.mxu0 0.0
      %968 = vmatpush1.msra.mxu0 0.0
      %969 = vmatprep.subr.mxu0 0.0
      %970 = vmatpush1.msra.mxu0 0.0
      %971 = vmatprep.subr.mxu0 0.0
      %972 = vmatpush1.msra.mxu0 0.0
      %973 = vmatprep.mubr.f32.mxu0 0.0
      %974 = vmatmul.mubr.f32.gmra.mrb[0].mxu0 %v907
      %v975 = vpop.f32.mrb[0].mxu0
      %v976 = vadd.f32 0.0, %v975
      %v977 = vpop.f32.mrb[0].mxu0
      %978 = vdwg.mxu0
      %v979 = vrcp.pop %v902
      %v980 = vmul.f32 %v976, %v979
      %v981 = vpack.c.bf16 %v980, %v980
      %v984 = vunpack.c.l.b16 %v528
      %v985 = vunpack.c.l.b16 %v529
      %v986 = vpack.c.b16 %v985, %v984
      %v989 = vsel %vm561, %v981, 0
      %991 = vmatprep.subr.bf16.mxu0 0
      %992 = vmatpush1.bf16.msra.mxu0 %v986
      %993 = vmatprep.subr.bf16.mxu0 0
      %994 = vmatpush1.bf16.msra.mxu0 0
      %995 = vmatprep.subr.bf16.mxu0 0
      %996 = vmatpush1.bf16.msra.mxu0 0
      %997 = vmatprep.subr.bf16.mxu0 0
      %998 = vmatpush1.bf16.msra.mxu0 0
      %999 = vmatprep.subr.bf16.mxu0 0
      %1000 = vmatpush1.bf16.msra.mxu0 0
      %1001 = vmatprep.subr.bf16.mxu0 0
      %1002 = vmatpush1.bf16.msra.mxu0 0
      %1003 = vmatprep.subr.bf16.mxu0 0
      %1004 = vmatpush1.bf16.msra.mxu0 0
      %1005 = vmatprep.subr.bf16.mxu0 0
      %1006 = vmatpush1.bf16.msra.mxu0 0
      %1007 = vmatprep.subr.bf16.mxu0 0
      %1008 = vmatpush1.bf16.msra.mxu0 0
      %1009 = vmatprep.subr.bf16.mxu0 0
      %1010 = vmatpush1.bf16.msra.mxu0 0
      %1011 = vmatprep.subr.bf16.mxu0 0
      %1012 = vmatpush1.bf16.msra.mxu0 0
      %1013 = vmatprep.subr.bf16.mxu0 0
      %1014 = vmatpush1.bf16.msra.mxu0 0
      %1015 = vmatprep.subr.bf16.mxu0 0
      %1016 = vmatpush1.bf16.msra.mxu0 0
      %1017 = vmatprep.subr.bf16.mxu0 0
      %1018 = vmatpush1.bf16.msra.mxu0 0
      %1019 = vmatprep.subr.bf16.mxu0 0
      %1020 = vmatpush1.bf16.msra.mxu0 0
      %1021 = vmatprep.subr.bf16.mxu0 0
      %1022 = vmatpush1.bf16.msra.mxu0 0
      %1023 = vmatprep.mubr.bf16.mxu0 0
      %1024 = vmatmul.mubr.bf16.gmra.mrb[0].mxu0 %v989
      %v1025 = vpop.f32.mrb[0].mxu0
      %v1026 = vadd.f32 0.0, %v1025
      %v1027 = vpop.f32.mrb[0].mxu0
      %v1028 = vpop.f32.mrb[0].mxu0
      %v1029 = vpop.f32.mrb[0].mxu0
      %1030 = vdwg.mxu0
      %v1031 = vadd.f32 %v776, %v1026
      %1032 = vrot.lane.b32.xlu0 %v534, 88
      %v1033 = vpop.permute.xlu0 %1032
      %1035 = vrot.lane.b32.xlu0 %v436, 104
      %v1036 = vpop.permute.xlu0 %1035
      %v1038 = vsel %vm543, %v1033, %v1036
      %1039 = vrot.lane.b32.xlu0 %v522, 32
      %v1040 = vpop.permute.xlu0 %1039
      %v1042 = vmul.f32 %v436, %v1040
      %v1043 = vmul.f32 %v1038, %v523
      %1045 = vrot.lane.b32.xlu0 %v1043, 32
      %v1046 = vpop.permute.xlu0 %1045
      %v1048 = vadd.f32 %v1042, %v1046
      %1049 = vrot.lane.b32.xlu0 %v548, 88
      %v1050 = vpop.permute.xlu0 %1049
      %1052 = vrot.lane.b32.xlu0 %v517, 104
      %v1053 = vpop.permute.xlu0 %1052
      %v1055 = vsel %vm543, %v1050, %v1053
      %1056 = vrot.lane.b32.xlu0 %v524, 32
      %v1057 = vpop.permute.xlu0 %1056
      %v1059 = vmul.f32 %v517, %v1057
      %v1060 = vmul.f32 %v1055, %v525
      %1062 = vrot.lane.b32.xlu0 %v1060, 32
      %v1063 = vpop.permute.xlu0 %1062
      %v1065 = vadd.f32 %v1059, %v1063
      %1067 = vrot.lane.b32.xlu0 %v1048, 96
      %v1068 = vpop.permute.xlu0 %1067
      %1070 = vrot.lane.b32.xlu0 %v1065, 96
      %v1071 = vpop.permute.xlu0 %1070
      %v1072 = vsel %vm561, %v1068, 0
      %v1074 = vsel %vm561, %v1071, 0
      %1076 = vmatprep.subr.mxu0 0.0
      %1077 = vmatpush1.xpose.msra.mxu0 %v1074
      %1078 = vmatprep.subr.mxu0 0.0
      %1079 = vmatpush1.xpose.msra.mxu0 0.0
      %1080 = vmatprep.subr.mxu0 0.0
      %1081 = vmatpush1.xpose.msra.mxu0 0.0
      %1082 = vmatprep.subr.mxu0 0.0
      %1083 = vmatpush1.xpose.msra.mxu0 0.0
      %1084 = vmatprep.subr.mxu0 0.0
      %1085 = vmatpush1.xpose.msra.mxu0 0.0
      %1086 = vmatprep.subr.mxu0 0.0
      %1087 = vmatpush1.xpose.msra.mxu0 0.0
      %1088 = vmatprep.subr.mxu0 0.0
      %1089 = vmatpush1.xpose.msra.mxu0 0.0
      %1090 = vmatprep.subr.mxu0 0.0
      %1091 = vmatpush1.xpose.msra.mxu0 0.0
      %1092 = vmatprep.subr.mxu0 0.0
      %1093 = vmatpush1.xpose.msra.mxu0 0.0
      %1094 = vmatprep.subr.mxu0 0.0
      %1095 = vmatpush1.xpose.msra.mxu0 0.0
      %1096 = vmatprep.subr.mxu0 0.0
      %1097 = vmatpush1.xpose.msra.mxu0 0.0
      %1098 = vmatprep.subr.mxu0 0.0
      %1099 = vmatpush1.xpose.msra.mxu0 0.0
      %1100 = vmatprep.subr.mxu0 0.0
      %1101 = vmatpush1.xpose.msra.mxu0 0.0
      %1102 = vmatprep.subr.mxu0 0.0
      %1103 = vmatpush1.xpose.msra.mxu0 0.0
      %1104 = vmatprep.subr.mxu0 0.0
      %1105 = vmatpush1.xpose.msra.mxu0 0.0
      %1106 = vmatprep.subr.mxu0 0.0
      %1107 = vmatpush1.xpose.msra.mxu0 0.0
      %1108 = vmatprep.subr.mxu0 0.0
      %1109 = vmatpush1.xpose.msra.mxu0 0.0
      %1110 = vmatprep.subr.mxu0 0.0
      %1111 = vmatpush1.xpose.msra.mxu0 0.0
      %1112 = vmatprep.subr.mxu0 0.0
      %1113 = vmatpush1.xpose.msra.mxu0 0.0
      %1114 = vmatprep.subr.mxu0 0.0
      %1115 = vmatpush1.xpose.msra.mxu0 0.0
      %1116 = vmatprep.subr.mxu0 0.0
      %1117 = vmatpush1.xpose.msra.mxu0 0.0
      %1118 = vmatprep.subr.mxu0 0.0
      %1119 = vmatpush1.xpose.msra.mxu0 0.0
      %1120 = vmatprep.subr.mxu0 0.0
      %1121 = vmatpush1.xpose.msra.mxu0 0.0
      %1122 = vmatprep.subr.mxu0 0.0
      %1123 = vmatpush1.xpose.msra.mxu0 0.0
      %1124 = vmatprep.subr.mxu0 0.0
      %1125 = vmatpush1.xpose.msra.mxu0 0.0
      %1126 = vmatprep.subr.mxu0 0.0
      %1127 = vmatpush1.xpose.msra.mxu0 0.0
      %1128 = vmatprep.subr.mxu0 0.0
      %1129 = vmatpush1.xpose.msra.mxu0 0.0
      %1130 = vmatprep.subr.mxu0 0.0
      %1131 = vmatpush1.xpose.msra.mxu0 0.0
      %1132 = vmatprep.subr.mxu0 0.0
      %1133 = vmatpush1.xpose.msra.mxu0 0.0
      %1134 = vmatprep.subr.mxu0 0.0
      %1135 = vmatpush1.xpose.msra.mxu0 0.0
      %1136 = vmatprep.subr.mxu0 0.0
      %1137 = vmatpush1.xpose.msra.mxu0 0.0
      %1138 = vmatprep.subr.mxu0 0.0
      %1139 = vmatpush1.xpose.msra.mxu0 0.0
      %1140 = vmatprep.mubr.f32.mxu0 0.0
      %1141 = vmatmul.mubr.f32.gmra.mrb[0].mxu0 %v1072
      %v1142 = vpop.f32.mrb[0].mxu0
      %v1143 = vadd.f32 0.0, %v1142
      %v1144 = vpop.f32.mrb[0].mxu0
      %1145 = vdwg.mxu0
      %v1146 = vmul.f32 %v1143, 0.25
      %v1147 = vsel %vm543, %v1146, -inf
      %1148 = vmax.xlane.f32.xlu0 %v1147
      %v1149 = vpop.xlane.xlu0 %1148
      %v1150 = vsub.f32 %v1146, %v1149
      %v1151 = vmul.f32 %v1150, 1.442695
      %v1152 = vpow.pop %v1151
      %v1153 = vsel %vm543, %v1152, 0.0
      %1154 = vadd.xlane.f32.xlu0 %v1153
      %v1155 = vpop.xlane.xlu0 %1154
      %1156 = vrot.lane.b32.xlu0 %v517, 32
      %v1157 = vpop.permute.xlu0 %1156
      %v1160 = vsel %vm543, %v1152, 0
      %1162 = vmatprep.subr.mxu0 0.0
      %1163 = vmatpush1.msra.mxu0 %v1157
      %1164 = vmatprep.subr.mxu0 0.0
      %1165 = vmatpush1.msra.mxu0 0.0
      %1166 = vmatprep.subr.mxu0 0.0
      %1167 = vmatpush1.msra.mxu0 0.0
      %1168 = vmatprep.subr.mxu0 0.0
      %1169 = vmatpush1.msra.mxu0 0.0
      %1170 = vmatprep.subr.mxu0 0.0
      %1171 = vmatpush1.msra.mxu0 0.0
      %1172 = vmatprep.subr.mxu0 0.0
      %1173 = vmatpush1.msra.mxu0 0.0
      %1174 = vmatprep.subr.mxu0 0.0
      %1175 = vmatpush1.msra.mxu0 0.0
      %1176 = vmatprep.subr.mxu0 0.0
      %1177 = vmatpush1.msra.mxu0 0.0
      %1178 = vmatprep.subr.mxu0 0.0
      %1179 = vmatpush1.msra.mxu0 0.0
      %1180 = vmatprep.subr.mxu0 0.0
      %1181 = vmatpush1.msra.mxu0 0.0
      %1182 = vmatprep.subr.mxu0 0.0
      %1183 = vmatpush1.msra.mxu0 0.0
      %1184 = vmatprep.subr.mxu0 0.0
      %1185 = vmatpush1.msra.mxu0 0.0
      %1186 = vmatprep.subr.mxu0 0.0
      %1187 = vmatpush1.msra.mxu0 0.0
      %1188 = vmatprep.subr.mxu0 0.0
      %1189 = vmatpush1.msra.mxu0 0.0
      %1190 = vmatprep.subr.mxu0 0.0
      %1191 = vmatpush1.msra.mxu0 0.0
      %1192 = vmatprep.subr.mxu0 0.0
      %1193 = vmatpush1.msra.mxu0 0.0
      %1194 = vmatprep.subr.mxu0 0.0
      %1195 = vmatpush1.msra.mxu0 0.0
      %1196 = vmatprep.subr.mxu0 0.0
      %1197 = vmatpush1.msra.mxu0 0.0
      %1198 = vmatprep.subr.mxu0 0.0
      %1199 = vmatpush1.msra.mxu0 0.0
      %1200 = vmatprep.subr.mxu0 0.0
      %1201 = vmatpush1.msra.mxu0 0.0
      %1202 = vmatprep.subr.mxu0 0.0
      %1203 = vmatpush1.msra.mxu0 0.0
      %1204 = vmatprep.subr.mxu0 0.0
      %1205 = vmatpush1.msra.mxu0 0.0
      %1206 = vmatprep.subr.mxu0 0.0
      %1207 = vmatpush1.msra.mxu0 0.0
      %1208 = vmatprep.subr.mxu0 0.0
      %1209 = vmatpush1.msra.mxu0 0.0
      %1210 = vmatprep.subr.mxu0 0.0
      %1211 = vmatpush1.msra.mxu0 0.0
      %1212 = vmatprep.subr.mxu0 0.0
      %1213 = vmatpush1.msra.mxu0 0.0
      %1214 = vmatprep.subr.mxu0 0.0
      %1215 = vmatpush1.msra.mxu0 0.0
      %1216 = vmatprep.subr.mxu0 0.0
      %1217 = vmatpush1.msra.mxu0 0.0
      %1218 = vmatprep.subr.mxu0 0.0
      %1219 = vmatpush1.msra.mxu0 0.0
      %1220 = vmatprep.subr.mxu0 0.0
      %1221 = vmatpush1.msra.mxu0 0.0
      %1222 = vmatprep.subr.mxu0 0.0
      %1223 = vmatpush1.msra.mxu0 0.0
      %1224 = vmatprep.subr.mxu0 0.0
      %1225 = vmatpush1.msra.mxu0 0.0
      %1226 = vmatprep.mubr.f32.mxu0 0.0
      %1227 = vmatmul.mubr.f32.gmra.mrb[0].mxu0 %v1160
      %v1228 = vpop.f32.mrb[0].mxu0
      %v1229 = vadd.f32 0.0, %v1228
      %v1230 = vpop.f32.mrb[0].mxu0
      %1231 = vdwg.mxu0
      %v1232 = vrcp.pop %v1155
      %v1233 = vmul.f32 %v1229, %v1232
      %v1234 = vpack.c.bf16 %v1233, %v1233
      %v1237 = vunpack.c.l.b16 %v530
      %v1238 = vunpack.c.l.b16 %v531
      %v1239 = vpack.c.b16 %v1238, %v1237
      %v1242 = vsel %vm561, %v1234, 0
      %1244 = vmatprep.subr.bf16.mxu0 0
      %1245 = vmatpush1.bf16.msra.mxu0 %v1239
      %1246 = vmatprep.subr.bf16.mxu0 0
      %1247 = vmatpush1.bf16.msra.mxu0 0
      %1248 = vmatprep.subr.bf16.mxu0 0
      %1249 = vmatpush1.bf16.msra.mxu0 0
      %1250 = vmatprep.subr.bf16.mxu0 0
      %1251 = vmatpush1.bf16.msra.mxu0 0
      %1252 = vmatprep.subr.bf16.mxu0 0
      %1253 = vmatpush1.bf16.msra.mxu0 0
      %1254 = vmatprep.subr.bf16.mxu0 0
      %1255 = vmatpush1.bf16.msra.mxu0 0
      %1256 = vmatprep.subr.bf16.mxu0 0
      %1257 = vmatpush1.bf16.msra.mxu0 0
      %1258 = vmatprep.subr.bf16.mxu0 0
      %1259 = vmatpush1.bf16.msra.mxu0 0
      %1260 = vmatprep.subr.bf16.mxu0 0
      %1261 = vmatpush1.bf16.msra.mxu0 0
      %1262 = vmatprep.subr.bf16.mxu0 0
      %1263 = vmatpush1.bf16.msra.mxu0 0
      %1264 = vmatprep.subr.bf16.mxu0 0
      %1265 = vmatpush1.bf16.msra.mxu0 0
      %1266 = vmatprep.subr.bf16.mxu0 0
      %1267 = vmatpush1.bf16.msra.mxu0 0
      %1268 = vmatprep.subr.bf16.mxu0 0
      %1269 = vmatpush1.bf16.msra.mxu0 0
      %1270 = vmatprep.subr.bf16.mxu0 0
      %1271 = vmatpush1.bf16.msra.mxu0 0
      %1272 = vmatprep.subr.bf16.mxu0 0
      %1273 = vmatpush1.bf16.msra.mxu0 0
      %1274 = vmatprep.subr.bf16.mxu0 0
      %1275 = vmatpush1.bf16.msra.mxu0 0
      %1276 = vmatprep.mubr.bf16.mxu0 0
      %1277 = vmatmul.mubr.bf16.gmra.mrb[0].mxu0 %v1242
      %v1278 = vpop.f32.mrb[0].mxu0
      %v1279 = vadd.f32 0.0, %v1278
      %v1280 = vpop.f32.mrb[0].mxu0
      %v1281 = vpop.f32.mrb[0].mxu0
      %v1282 = vpop.f32.mrb[0].mxu0
      %1283 = vdwg.mxu0
      %v1284 = vadd.f32 %v1031, %v1279
      %1285 = vrot.lane.b32.xlu0 %v534, 72
      %v1286 = vpop.permute.xlu0 %1285
      %1288 = vrot.lane.b32.xlu0 %v436, 88
      %v1289 = vpop.permute.xlu0 %1288
      %v1291 = vsel %vm543, %v1286, %v1289
      %1292 = vrot.lane.b32.xlu0 %v522, 48
      %v1293 = vpop.permute.xlu0 %1292
      %v1295 = vmul.f32 %v436, %v1293
      %v1296 = vmul.f32 %v1291, %v523
      %1298 = vrot.lane.b32.xlu0 %v1296, 48
      %v1299 = vpop.permute.xlu0 %1298
      %v1301 = vadd.f32 %v1295, %v1299
      %1302 = vrot.lane.b32.xlu0 %v548, 72
      %v1303 = vpop.permute.xlu0 %1302
      %1305 = vrot.lane.b32.xlu0 %v517, 88
      %v1306 = vpop.permute.xlu0 %1305
      %v1308 = vsel %vm543, %v1303, %v1306
      %1309 = vrot.lane.b32.xlu0 %v524, 48
      %v1310 = vpop.permute.xlu0 %1309
      %v1312 = vmul.f32 %v517, %v1310
      %v1313 = vmul.f32 %v1308, %v525
      %1315 = vrot.lane.b32.xlu0 %v1313, 48
      %v1316 = vpop.permute.xlu0 %1315
      %v1318 = vadd.f32 %v1312, %v1316
      %1320 = vrot.lane.b32.xlu0 %v1301, 80
      %v1321 = vpop.permute.xlu0 %1320
      %1323 = vrot.lane.b32.xlu0 %v1318, 80
      %v1324 = vpop.permute.xlu0 %1323
      %v1325 = vsel %vm561, %v1321, 0
      %v1327 = vsel %vm561, %v1324, 0
      %1329 = vmatprep.subr.mxu0 0.0
      %1330 = vmatpush1.xpose.msra.mxu0 %v1327
      %1331 = vmatprep.subr.mxu0 0.0
      %1332 = vmatpush1.xpose.msra.mxu0 0.0
      %1333 = vmatprep.subr.mxu0 0.0
      %1334 = vmatpush1.xpose.msra.mxu0 0.0
      %1335 = vmatprep.subr.mxu0 0.0
      %1336 = vmatpush1.xpose.msra.mxu0 0.0
      %1337 = vmatprep.subr.mxu0 0.0
      %1338 = vmatpush1.xpose.msra.mxu0 0.0
      %1339 = vmatprep.subr.mxu0 0.0
      %1340 = vmatpush1.xpose.msra.mxu0 0.0
      %1341 = vmatprep.subr.mxu0 0.0
      %1342 = vmatpush1.xpose.msra.mxu0 0.0
      %1343 = vmatprep.subr.mxu0 0.0
      %1344 = vmatpush1.xpose.msra.mxu0 0.0
      %1345 = vmatprep.subr.mxu0 0.0
      %1346 = vmatpush1.xpose.msra.mxu0 0.0
      %1347 = vmatprep.subr.mxu0 0.0
      %1348 = vmatpush1.xpose.msra.mxu0 0.0
      %1349 = vmatprep.subr.mxu0 0.0
      %1350 = vmatpush1.xpose.msra.mxu0 0.0
      %1351 = vmatprep.subr.mxu0 0.0
      %1352 = vmatpush1.xpose.msra.mxu0 0.0
      %1353 = vmatprep.subr.mxu0 0.0
      %1354 = vmatpush1.xpose.msra.mxu0 0.0
      %1355 = vmatprep.subr.mxu0 0.0
      %1356 = vmatpush1.xpose.msra.mxu0 0.0
      %1357 = vmatprep.subr.mxu0 0.0
      %1358 = vmatpush1.xpose.msra.mxu0 0.0
      %1359 = vmatprep.subr.mxu0 0.0
      %1360 = vmatpush1.xpose.msra.mxu0 0.0
      %1361 = vmatprep.subr.mxu0 0.0
      %1362 = vmatpush1.xpose.msra.mxu0 0.0
      %1363 = vmatprep.subr.mxu0 0.0
      %1364 = vmatpush1.xpose.msra.mxu0 0.0
      %1365 = vmatprep.subr.mxu0 0.0
      %1366 = vmatpush1.xpose.msra.mxu0 0.0
      %1367 = vmatprep.subr.mxu0 0.0
      %1368 = vmatpush1.xpose.msra.mxu0 0.0
      %1369 = vmatprep.subr.mxu0 0.0
      %1370 = vmatpush1.xpose.msra.mxu0 0.0
      %1371 = vmatprep.subr.mxu0 0.0
      %1372 = vmatpush1.xpose.msra.mxu0 0.0
      %1373 = vmatprep.subr.mxu0 0.0
      %1374 = vmatpush1.xpose.msra.mxu0 0.0
      %1375 = vmatprep.subr.mxu0 0.0
      %1376 = vmatpush1.xpose.msra.mxu0 0.0
      %1377 = vmatprep.subr.mxu0 0.0
      %1378 = vmatpush1.xpose.msra.mxu0 0.0
      %1379 = vmatprep.subr.mxu0 0.0
      %1380 = vmatpush1.xpose.msra.mxu0 0.0
      %1381 = vmatprep.subr.mxu0 0.0
      %1382 = vmatpush1.xpose.msra.mxu0 0.0
      %1383 = vmatprep.subr.mxu0 0.0
      %1384 = vmatpush1.xpose.msra.mxu0 0.0
      %1385 = vmatprep.subr.mxu0 0.0
      %1386 = vmatpush1.xpose.msra.mxu0 0.0
      %1387 = vmatprep.subr.mxu0 0.0
      %1388 = vmatpush1.xpose.msra.mxu0 0.0
      %1389 = vmatprep.subr.mxu0 0.0
      %1390 = vmatpush1.xpose.msra.mxu0 0.0
      %1391 = vmatprep.subr.mxu0 0.0
      %1392 = vmatpush1.xpose.msra.mxu0 0.0
      %1393 = vmatprep.mubr.f32.mxu0 0.0
      %1394 = vmatmul.mubr.f32.gmra.mrb[0].mxu0 %v1325
      %v1395 = vpop.f32.mrb[0].mxu0
      %v1396 = vadd.f32 0.0, %v1395
      %v1397 = vpop.f32.mrb[0].mxu0
      %1398 = vdwg.mxu0
      %v1399 = vmul.f32 %v1396, 0.25
      %v1400 = vsel %vm543, %v1399, -inf
      %1401 = vmax.xlane.f32.xlu0 %v1400
      %v1402 = vpop.xlane.xlu0 %1401
      %v1403 = vsub.f32 %v1399, %v1402
      %v1404 = vmul.f32 %v1403, 1.442695
      %v1405 = vpow.pop %v1404
      %v1406 = vsel %vm543, %v1405, 0.0
      %1407 = vadd.xlane.f32.xlu0 %v1406
      %v1408 = vpop.xlane.xlu0 %1407
      %1409 = vrot.lane.b32.xlu0 %v517, 16
      %v1410 = vpop.permute.xlu0 %1409
      %v1413 = vsel %vm543, %v1405, 0
      %1415 = vmatprep.subr.mxu0 0.0
      %1416 = vmatpush1.msra.mxu0 %v1410
      %1417 = vmatprep.subr.mxu0 0.0
      %1418 = vmatpush1.msra.mxu0 0.0
      %1419 = vmatprep.subr.mxu0 0.0
      %1420 = vmatpush1.msra.mxu0 0.0
      %1421 = vmatprep.subr.mxu0 0.0
      %1422 = vmatpush1.msra.mxu0 0.0
      %1423 = vmatprep.subr.mxu0 0.0
      %1424 = vmatpush1.msra.mxu0 0.0
      %1425 = vmatprep.subr.mxu0 0.0
      %1426 = vmatpush1.msra.mxu0 0.0
      %1427 = vmatprep.subr.mxu0 0.0
      %1428 = vmatpush1.msra.mxu0 0.0
      %1429 = vmatprep.subr.mxu0 0.0
      %1430 = vmatpush1.msra.mxu0 0.0
      %1431 = vmatprep.subr.mxu0 0.0
      %1432 = vmatpush1.msra.mxu0 0.0
      %1433 = vmatprep.subr.mxu0 0.0
      %1434 = vmatpush1.msra.mxu0 0.0
      %1435 = vmatprep.subr.mxu0 0.0
      %1436 = vmatpush1.msra.mxu0 0.0
      %1437 = vmatprep.subr.mxu0 0.0
      %1438 = vmatpush1.msra.mxu0 0.0
      %1439 = vmatprep.subr.mxu0 0.0
      %1440 = vmatpush1.msra.mxu0 0.0
      %1441 = vmatprep.subr.mxu0 0.0
      %1442 = vmatpush1.msra.mxu0 0.0
      %1443 = vmatprep.subr.mxu0 0.0
      %1444 = vmatpush1.msra.mxu0 0.0
      %1445 = vmatprep.subr.mxu0 0.0
      %1446 = vmatpush1.msra.mxu0 0.0
      %1447 = vmatprep.subr.mxu0 0.0
      %1448 = vmatpush1.msra.mxu0 0.0
      %1449 = vmatprep.subr.mxu0 0.0
      %1450 = vmatpush1.msra.mxu0 0.0
      %1451 = vmatprep.subr.mxu0 0.0
      %1452 = vmatpush1.msra.mxu0 0.0
      %1453 = vmatprep.subr.mxu0 0.0
      %1454 = vmatpush1.msra.mxu0 0.0
      %1455 = vmatprep.subr.mxu0 0.0
      %1456 = vmatpush1.msra.mxu0 0.0
      %1457 = vmatprep.subr.mxu0 0.0
      %1458 = vmatpush1.msra.mxu0 0.0
      %1459 = vmatprep.subr.mxu0 0.0
      %1460 = vmatpush1.msra.mxu0 0.0
      %1461 = vmatprep.subr.mxu0 0.0
      %1462 = vmatpush1.msra.mxu0 0.0
      %1463 = vmatprep.subr.mxu0 0.0
      %1464 = vmatpush1.msra.mxu0 0.0
      %1465 = vmatprep.subr.mxu0 0.0
      %1466 = vmatpush1.msra.mxu0 0.0
      %1467 = vmatprep.subr.mxu0 0.0
      %1468 = vmatpush1.msra.mxu0 0.0
      %1469 = vmatprep.subr.mxu0 0.0
      %1470 = vmatpush1.msra.mxu0 0.0
      %1471 = vmatprep.subr.mxu0 0.0
      %1472 = vmatpush1.msra.mxu0 0.0
      %1473 = vmatprep.subr.mxu0 0.0
      %1474 = vmatpush1.msra.mxu0 0.0
      %1475 = vmatprep.subr.mxu0 0.0
      %1476 = vmatpush1.msra.mxu0 0.0
      %1477 = vmatprep.subr.mxu0 0.0
      %1478 = vmatpush1.msra.mxu0 0.0
      %1479 = vmatprep.mubr.f32.mxu0 0.0
      %1480 = vmatmul.mubr.f32.gmra.mrb[0].mxu0 %v1413
      %v1481 = vpop.f32.mrb[0].mxu0
      %v1482 = vadd.f32 0.0, %v1481
      %v1483 = vpop.f32.mrb[0].mxu0
      %1484 = vdwg.mxu0
      %v1485 = vrcp.pop %v1408
      %v1486 = vmul.f32 %v1482, %v1485
      %v1487 = vpack.c.bf16 %v1486, %v1486
      %v1490 = vunpack.c.l.b16 %v532
      %v1491 = vunpack.c.l.b16 %v533
      %v1492 = vpack.c.b16 %v1491, %v1490
      %v1495 = vsel %vm561, %v1487, 0
      %1497 = vmatprep.subr.bf16.mxu0 0
      %1498 = vmatpush1.bf16.msra.mxu0 %v1492
      %1499 = vmatprep.subr.bf16.mxu0 0
      %1500 = vmatpush1.bf16.msra.mxu0 0
      %1501 = vmatprep.subr.bf16.mxu0 0
      %1502 = vmatpush1.bf16.msra.mxu0 0
      %1503 = vmatprep.subr.bf16.mxu0 0
      %1504 = vmatpush1.bf16.msra.mxu0 0
      %1505 = vmatprep.subr.bf16.mxu0 0
      %1506 = vmatpush1.bf16.msra.mxu0 0
      %1507 = vmatprep.subr.bf16.mxu0 0
      %1508 = vmatpush1.bf16.msra.mxu0 0
      %1509 = vmatprep.subr.bf16.mxu0 0
      %1510 = vmatpush1.bf16.msra.mxu0 0
      %1511 = vmatprep.subr.bf16.mxu0 0
      %1512 = vmatpush1.bf16.msra.mxu0 0
      %1513 = vmatprep.subr.bf16.mxu0 0
      %1514 = vmatpush1.bf16.msra.mxu0 0
      %1515 = vmatprep.subr.bf16.mxu0 0
      %1516 = vmatpush1.bf16.msra.mxu0 0
      %1517 = vmatprep.subr.bf16.mxu0 0
      %1518 = vmatpush1.bf16.msra.mxu0 0
      %1519 = vmatprep.subr.bf16.mxu0 0
      %1520 = vmatpush1.bf16.msra.mxu0 0
      %1521 = vmatprep.subr.bf16.mxu0 0
      %1522 = vmatpush1.bf16.msra.mxu0 0
      %1523 = vmatprep.subr.bf16.mxu0 0
      %1524 = vmatpush1.bf16.msra.mxu0 0
      %1525 = vmatprep.subr.bf16.mxu0 0
      %1526 = vmatpush1.bf16.msra.mxu0 0
      %1527 = vmatprep.subr.bf16.mxu0 0
      %1528 = vmatpush1.bf16.msra.mxu0 0
      %1529 = vmatprep.mubr.bf16.mxu0 0
      %1530 = vmatmul.mubr.bf16.gmra.mrb[0].mxu0 %v1495
      %v1531 = vpop.f32.mrb[0].mxu0
      %v1532 = vadd.f32 0.0, %v1531
      %v1533 = vpop.f32.mrb[0].mxu0
      %v1534 = vpop.f32.mrb[0].mxu0
      %v1535 = vpop.f32.mrb[0].mxu0
      %1536 = vdwg.mxu0
      %v1537 = vadd.f32 %v1284, %v1532
      %v1538 = vpack.c.bf16 %v1537, %v1537
      %vm1539 = vcmask 519168
      %1540 = vst.msk [vmem:[%s344] sm:$0xf] %vm1539, %v1538
      %p1541 = scmp.lt.s32.totalorder %s20, 1
      %s1542 = scalar_select %p1541, %s20, 1
      %s1543 = smul.addr %s1542, 4
      %s1544 = scalar_lea.vmem %s9, %s1543
      // Predicated region
      $region57: #{encoder_forward.7} parent=55 // pred_check
        %p1545 = pneg %p237
      $region58: #{encoder_forward.7} parent=55 // pred_check_branch
        %1547 = sbr.rel (%p1545) target = $region60
      $region59: #{encoder_forward.7} parent=55 // pred_region
        _
      $region60: #{encoder_forward.7} parent=55 // pred_fallthru
        _
    $region56: #{encoder_forward.7} parent=5 // pred_fallthru
      _
    %p1548 = scmp.le.s32.totalorder 2, %s15
    // Predicated region
    $region61: #{encoder_forward.7} parent=5 // pred_check
      %p1549 = pneg %p1548
    $region62: #{encoder_forward.7} parent=5 // pred_check_branch
      %1551 = sbr.rel (%p1549) target = $region64
    $region63: #{encoder_forward.7} parent=5 // pred_region
      %s1552 = ssub.s32 %s15, 2
      // Predicated region
      $region65: #{encoder_forward.7} parent=63 // pred_check
        %p1553 = pneg %p243
      $region66: #{encoder_forward.7} parent=63 // pred_check_branch
        %1555 = sbr.rel (%p1553) target = $region68
      $region67: #{encoder_forward.7} parent=63 // pred_region
        %p1556 = scmp.lt.s32.totalorder %s21, 1
        %s1557 = scalar_select %p1556, %s21, 1
        %s1558 = smul.addr %s1557, 4
        %s1559 = scalar_lea.vmem %s9, %s1558
      $region68: #{encoder_forward.7} parent=63 // pred_fallthru
        _
    $region64: #{encoder_forward.7} parent=5 // pred_fallthru
      _
  $region6: #{encoder_forward.7} parent=0 // loop_footer
    %s19 = sadd.s32 1, %s15
  $region7: #{encoder_forward.7} parent=0 // loop_footer_branch
    %14 = sbr.rel target = $region3
  $region8: #{encoder_forward.7} parent=0 // loop_exit
    _

</llo_original>
